<compile_context>
chip_gen: v7x
topology: tpu7x:2x2x1
jax: 0.10.0
libtpu: 0.0.40
codegen_flags: <defaults>
</compile_context>

<pallas_src>
import functools

import jax
import jax.numpy as jnp
from jax.experimental import pallas as pl
from jax.experimental.pallas import tpu as pltpu

LANE = 128
SUBLANE = 8


def _round_up(x, m):
    return (x + m - 1) // m * m


def _pad2(x, rows, cols, dtype=None):
    x = jnp.pad(x, ((0, rows - x.shape[0]), (0, cols - x.shape[1])))
    return x.astype(dtype) if dtype is not None else x


def _critic_kernel(obs_ref, act_ref,
                   w1_ref, b1_ref, g_ref, beta_ref,
                   q1w1_ref, q1b1_ref, q1w2_ref, q1b2_ref, q1w3_ref, q1b3_ref,
                   q2w1_ref, q2b1_ref, q2w2_ref, q2b2_ref, q2w3_ref, q2b3_ref,
                   out_ref, *, feature_dim, f_pad, q_pad):
    # ---- trunk: Linear -> LayerNorm -> Tanh (LN / tanh kept in f32) ----
    h = jnp.dot(obs_ref[...], w1_ref[...],
                preferred_element_type=jnp.float32) + b1_ref[...]

    # Masked LayerNorm over the real feature_dim columns.  Padded columns of
    # w1/b1 are zero, so they contribute 0 to the sum; exclude them from the
    # variance and divide by the true feature count.
    col = jax.lax.broadcasted_iota(jnp.int32, (1, f_pad), 1)
    maskf = (col < feature_dim).astype(jnp.float32)
    inv_f = 1.0 / feature_dim
    mean = jnp.sum(h, axis=-1, keepdims=True) * inv_f
    d = h - mean
    var = jnp.sum(d * d * maskf, axis=-1, keepdims=True) * inv_f
    h = d * jax.lax.rsqrt(var + 1e-5) * g_ref[...] + beta_ref[...]
    h = jnp.tanh(h)                     # padded cols: gamma = beta = 0 -> tanh(0) = 0

    # ---- h_action = cat([h, action], -1); bf16 for the MXU ----
    ha = jnp.concatenate([h.astype(jnp.bfloat16), act_ref[...]], axis=-1)

    def q_head(w1, b1, w2, b2, w3, b3):
        t = jnp.dot(ha, w1[...], preferred_element_type=jnp.float32) + b1[...]
        t = jnp.maximum(t, 0.0).astype(jnp.bfloat16)
        t = jnp.dot(t, w2[...], preferred_element_type=jnp.float32) + b2[...]
        t = jnp.maximum(t, 0.0).astype(jnp.bfloat16)
        return jnp.dot(t, w3[...], preferred_element_type=jnp.float32) + b3[...]

    q1 = q_head(q1w1_ref, q1b1_ref, q1w2_ref, q1b2_ref, q1w3_ref, q1b3_ref)
    q2 = q_head(q2w1_ref, q2b1_ref, q2w2_ref, q2b2_ref, q2w3_ref, q2b3_ref)

    # Lane-dense 128-wide stores into one fused (TB, 2*128) slab.
    out_ref[:, :q_pad] = q1.astype(out_ref.dtype)
    out_ref[:, q_pad:] = q2.astype(out_ref.dtype)


def critic_forward(obs, action, params, *, tile_b=128):
    """Pallas implementation of Critic.forward(obs, action) -> (q1, q2)."""
    B, repr_dim = obs.shape
    A = action.shape[-1]
    F = params["w1"].shape[1]
    H = params["q1_w2"].shape[0]

    f_pad = _round_up(F, LANE)
    a_pad = _round_up(A, LANE)
    h_pad = _round_up(H, LANE)
    q_pad = LANE                          # Q output (=1) padded to one lane tile

    tb = _round_up(min(tile_b, _round_up(B, SUBLANE)), SUBLANE)
    b_pad = _round_up(B, tb)
    grid = (b_pad // tb,)

    # ---- pad & cast parameters (zero padding keeps math identical; in a real
    #      training loop do this once outside the step, not per call) ----
    bf = jnp.bfloat16
    w1 = _pad2(params["w1"], repr_dim, f_pad, bf)
    b1 = _pad2(params["b1"], 1, f_pad)
    g = _pad2(params["ln_g"], 1, f_pad)
    bt = _pad2(params["ln_b"], 1, f_pad)

    def pad_head(p):
        # First-layer rows laid out as [0:F] h-rows, zeros, [f_pad:f_pad+A]
        # action-rows, zeros — matching the padded concat inside the kernel.
        wl1 = jnp.zeros((f_pad + a_pad, h_pad), jnp.float32)
        wl1 = wl1.at[:F, :H].set(p["w1"][:F])
        wl1 = wl1.at[f_pad:f_pad + A, :H].set(p["w1"][F:])
        return (wl1.astype(bf), _pad2(p["b1"], 1, h_pad),
                _pad2(p["w2"], h_pad, h_pad, bf), _pad2(p["b2"], 1, h_pad),
                _pad2(p["w3"], h_pad, q_pad, bf), _pad2(p["b3"], 1, q_pad))

    q1p = pad_head({k[3:]: v for k, v in params.items() if k.startswith("q1_")})
    q2p = pad_head({k[3:]: v for k, v in params.items() if k.startswith("q2_")})
    weights = (w1, b1, g, bt) + q1p + q2p

    obs_p = _pad2(obs, b_pad, repr_dim, bf)
    act_p = _pad2(action, b_pad, a_pad, bf)

    def io_spec(cols):
        return pl.BlockSpec((tb, cols), lambda i: (i, 0))

    def resident(x):                       # constant block index -> stays in VMEM
        return pl.BlockSpec(x.shape, lambda i: (0, 0))

    in_specs = [io_spec(repr_dim), io_spec(a_pad)] + [resident(w) for w in weights]
    out_specs = io_spec(2 * q_pad)

    # ---- VMEM budget & cost estimate ----
    weight_bytes = sum(int(w.size) * w.dtype.itemsize for w in weights)
    io_tile_bytes = 2 * tb * (repr_dim * 2 + a_pad * 2 + 2 * q_pad * 4)  # dbl-buffered
    vmem_limit = max(int(1.25 * (weight_bytes + io_tile_bytes)) + (4 << 20), 32 << 20)

    flops = 2 * b_pad * (repr_dim * f_pad
                         + 2 * ((f_pad + a_pad) * h_pad + h_pad * h_pad + h_pad * q_pad))
    bytes_accessed = int(weight_bytes + int(obs_p.size) * 2 + int(act_p.size) * 2
                         + b_pad * 2 * q_pad * 4)
    cost = pl.CostEstimate(flops=int(flops), transcendentals=int(b_pad * f_pad),
                           bytes_accessed=bytes_accessed)

    out = pl.pallas_call(
        functools.partial(_critic_kernel, feature_dim=F, f_pad=f_pad, q_pad=q_pad),
        out_shape=jax.ShapeDtypeStruct((b_pad, 2 * q_pad), jnp.float32),
        grid=grid,
        in_specs=in_specs,
        out_specs=out_specs,
        compiler_params=pltpu.CompilerParams(
            dimension_semantics=("parallel",),
            vmem_limit_bytes=vmem_limit),
        cost_estimate=cost,
    )(obs_p, act_p, *weights)

    q1 = out[:B, 0:1]
    q2 = out[:B, q_pad:q_pad + 1]
    return q1, q2


def init_critic_params(key, repr_dim, feature_dim, hidden_dim, action_dim):
    """Deterministic synthetic init (stands in for utils.weight_init:
    orthogonal weights + zero bias).  Weights stored [in, out]."""
    ks = jax.random.split(key, 7)

    def lin(k, fan_in, fan_out):
        w = jax.random.normal(k, (fan_in, fan_out), jnp.float32) / jnp.sqrt(fan_in)
        b = jnp.zeros((1, fan_out), jnp.float32)
        return w, b

    w1, b1 = lin(ks[0], repr_dim, feature_dim)
    params = {"w1": w1, "b1": b1,
              "ln_g": jnp.ones((1, feature_dim), jnp.float32),
              "ln_b": jnp.zeros((1, feature_dim), jnp.float32)}
    for name, ka, kb, kc in (("q1", ks[1], ks[2], ks[3]),
                             ("q2", ks[4], ks[5], ks[6])):
        wa, ba = lin(ka, feature_dim + action_dim, hidden_dim)
        wb, bb = lin(kb, hidden_dim, hidden_dim)
        wc, bc = lin(kc, hidden_dim, 1)
        params.update({f"{name}_w1": wa, f"{name}_b1": ba,
                       f"{name}_w2": wb, f"{name}_b2": bb,
                       f"{name}_w3": wc, f"{name}_b3": bc})
    return params


def critic_reference(obs, action, params):
    """Pure-JAX reference mirroring the kernel's mixed precision
    (bf16 matmul inputs, f32 accumulation / elementwise)."""
    bf, f32 = jnp.bfloat16, jnp.float32

    def dot(x, w):
        return jnp.dot(x.astype(bf), w.astype(bf), preferred_element_type=f32)

    h = dot(obs, params["w1"]) + params["b1"]
    mean = jnp.mean(h, axis=-1, keepdims=True)
    var = jnp.mean(jnp.square(h - mean), axis=-1, keepdims=True)
    h = (h - mean) * jax.lax.rsqrt(var + 1e-5) * params["ln_g"] + params["ln_b"]
    h = jnp.tanh(h)
    ha = jnp.concatenate([h, action.astype(f32)], axis=-1)

    def q_head(p):
        t = jnp.maximum(dot(ha, params[p + "_w1"]) + params[p + "_b1"], 0.0)
        t = jnp.maximum(dot(t, params[p + "_w2"]) + params[p + "_b2"], 0.0)
        return dot(t, params[p + "_w3"]) + params[p + "_b3"]

    return q_head("q1"), q_head("q2")


if __name__ == "__main__":
    # Small, module-consistent shapes (un-padded dims on purpose to exercise
    # the masked LayerNorm and the lane/batch padding paths).
    B, repr_dim, feature_dim, hidden_dim = 200, 512, 50, 256
    action_dim = 4

    key = jax.random.PRNGKey(0)
    k_obs, k_act, k_params = jax.random.split(key, 3)

    obs = jax.random.normal(k_obs, (B, repr_dim), jnp.float32)
    action = jnp.tanh(jax.random.normal(k_act, (B, action_dim), jnp.float32))
    params = init_critic_params(k_params, repr_dim, feature_dim, hidden_dim,
                                action_dim)

    q1, q2 = critic_forward(obs, action, params, tile_b=128)
    jax.block_until_ready((q1, q2))

    q1_ref, q2_ref = critic_reference(obs, action, params)
    assert q1.shape == (B, 1) and q2.shape == (B, 1)
    assert jnp.allclose(q1, q1_ref, atol=1e-2, rtol=1e-2)
    assert jnp.allclose(q2, q2_ref, atol=1e-2, rtol=1e-2)

    print("KERNEL_OK")
</pallas_src>

<mosaic_0001>
module attributes {stable_mosaic.version = 11 : i64} {
  func.func @_critic_kernel(%arg0: i32, %arg1: memref<128x512xbf16, #tpu.memory_space<vmem>>, %arg2: memref<128x128xbf16, #tpu.memory_space<vmem>>, %arg3: memref<512x128xbf16, #tpu.memory_space<vmem>>, %arg4: memref<1x128xf32, #tpu.memory_space<vmem>>, %arg5: memref<1x128xf32, #tpu.memory_space<vmem>>, %arg6: memref<1x128xf32, #tpu.memory_space<vmem>>, %arg7: memref<256x256xbf16, #tpu.memory_space<vmem>>, %arg8: memref<1x256xf32, #tpu.memory_space<vmem>>, %arg9: memref<256x256xbf16, #tpu.memory_space<vmem>>, %arg10: memref<1x256xf32, #tpu.memory_space<vmem>>, %arg11: memref<256x128xbf16, #tpu.memory_space<vmem>>, %arg12: memref<1x128xf32, #tpu.memory_space<vmem>>, %arg13: memref<256x256xbf16, #tpu.memory_space<vmem>>, %arg14: memref<1x256xf32, #tpu.memory_space<vmem>>, %arg15: memref<256x256xbf16, #tpu.memory_space<vmem>>, %arg16: memref<1x256xf32, #tpu.memory_space<vmem>>, %arg17: memref<256x128xbf16, #tpu.memory_space<vmem>>, %arg18: memref<1x128xf32, #tpu.memory_space<vmem>>, %arg19: memref<128x256xf32, #tpu.memory_space<vmem>>) attributes {dimension_semantics = [#tpu.dimension_semantics<parallel>], iteration_bounds = array<i64: 2>, scalar_prefetch = 0 : i64, scratch_operands = 0 : i64, tpu.core_type = #tpu.core_type<tc>, window_params = [{transform_indices = @transform_0, window_bounds = array<i64: 128, 512>}, {transform_indices = @transform_1, window_bounds = array<i64: 128, 128>}, {pipeline_mode = #tpu.pipeline_mode<synchronous>, transform_indices = @transform_2, window_bounds = array<i64: 512, 128>}, {pipeline_mode = #tpu.pipeline_mode<synchronous>, transform_indices = @transform_3, window_bounds = array<i64: 1, 128>}, {pipeline_mode = #tpu.pipeline_mode<synchronous>, transform_indices = @transform_4, window_bounds = array<i64: 1, 128>}, {pipeline_mode = #tpu.pipeline_mode<synchronous>, transform_indices = @transform_5, window_bounds = array<i64: 1, 128>}, {pipeline_mode = #tpu.pipeline_mode<synchronous>, transform_indices = @transform_6, window_bounds = array<i64: 256, 256>}, {pipeline_mode = #tpu.pipeline_mode<synchronous>, transform_indices = @transform_7, window_bounds = array<i64: 1, 256>}, {pipeline_mode = #tpu.pipeline_mode<synchronous>, transform_indices = @transform_8, window_bounds = array<i64: 256, 256>}, {pipeline_mode = #tpu.pipeline_mode<synchronous>, transform_indices = @transform_9, window_bounds = array<i64: 1, 256>}, {pipeline_mode = #tpu.pipeline_mode<synchronous>, transform_indices = @transform_10, window_bounds = array<i64: 256, 128>}, {pipeline_mode = #tpu.pipeline_mode<synchronous>, transform_indices = @transform_11, window_bounds = array<i64: 1, 128>}, {pipeline_mode = #tpu.pipeline_mode<synchronous>, transform_indices = @transform_12, window_bounds = array<i64: 256, 256>}, {pipeline_mode = #tpu.pipeline_mode<synchronous>, transform_indices = @transform_13, window_bounds = array<i64: 1, 256>}, {pipeline_mode = #tpu.pipeline_mode<synchronous>, transform_indices = @transform_14, window_bounds = array<i64: 256, 256>}, {pipeline_mode = #tpu.pipeline_mode<synchronous>, transform_indices = @transform_15, window_bounds = array<i64: 1, 256>}, {pipeline_mode = #tpu.pipeline_mode<synchronous>, transform_indices = @transform_16, window_bounds = array<i64: 256, 128>}, {pipeline_mode = #tpu.pipeline_mode<synchronous>, transform_indices = @transform_17, window_bounds = array<i64: 1, 128>}, {transform_indices = @transform_18, window_bounds = array<i64: 128, 256>}]} {
    %c0 = arith.constant 0 : index
    %c0_0 = arith.constant 0 : index
    %0 = vector.load %arg1[%c0, %c0_0] : memref<128x512xbf16, #tpu.memory_space<vmem>>, vector<128x512xbf16>
    %c0_1 = arith.constant 0 : index
    %c0_2 = arith.constant 0 : index
    %1 = vector.load %arg3[%c0_1, %c0_2] : memref<512x128xbf16, #tpu.memory_space<vmem>>, vector<512x128xbf16>
    %cst = arith.constant dense<0.000000e+00> : vector<128x128xf32>
    %2 = tpu.matmul %0, %1, %cst {dimension_numbers = #tpu.dot_dimension_numbers<[1], [0], [0], [1], [0, 0, 1, 1], [], []>} : vector<128x512xbf16>, vector<512x128xbf16>, vector<128x128xf32> -> vector<128x128xf32>
    %c0_3 = arith.constant 0 : index
    %c0_4 = arith.constant 0 : index
    %3 = vector.load %arg4[%c0_3, %c0_4] : memref<1x128xf32, #tpu.memory_space<vmem>>, vector<1x128xf32>
    %4 = vector.broadcast %3 : vector<1x128xf32> to vector<128x128xf32>
    %5 = arith.addf %2, %4 : vector<128x128xf32>
    %6 = tpu.iota {dimensions = array<i32: 1>} : vector<1x128xi32>
    %c50_i32 = arith.constant 50 : i32
    %7 = vector.broadcast %c50_i32 : i32 to vector<1x128xi32>
    %8 = arith.cmpi slt, %6, %7 : vector<1x128xi32>
    %9 = arith.extui %8 : vector<1x128xi1> to vector<1x128xi32>
    %10 = arith.sitofp %9 : vector<1x128xi32> to vector<1x128xf32>
    %cst_5 = arith.constant dense<0.000000e+00> : vector<128xf32>
    %11 = vector.multi_reduction <add>, %5, %cst_5 [1] : vector<128x128xf32> to vector<128xf32>
    %12 = vector.shape_cast %11 : vector<128xf32> to vector<128x1xf32>
    %cst_6 = arith.constant 2.000000e-02 : f32
    %13 = vector.broadcast %cst_6 : f32 to vector<128x1xf32>
    %14 = arith.mulf %12, %13 : vector<128x1xf32>
    %15 = vector.broadcast %14 : vector<128x1xf32> to vector<128x128xf32>
    %16 = arith.subf %5, %15 : vector<128x128xf32>
    %17 = arith.mulf %16, %16 : vector<128x128xf32>
    %18 = vector.broadcast %10 : vector<1x128xf32> to vector<128x128xf32>
    %19 = arith.mulf %17, %18 : vector<128x128xf32>
    %cst_7 = arith.constant dense<0.000000e+00> : vector<128xf32>
    %20 = vector.multi_reduction <add>, %19, %cst_7 [1] : vector<128x128xf32> to vector<128xf32>
    %21 = vector.shape_cast %20 : vector<128xf32> to vector<128x1xf32>
    %cst_8 = arith.constant 2.000000e-02 : f32
    %22 = vector.broadcast %cst_8 : f32 to vector<128x1xf32>
    %23 = arith.mulf %21, %22 : vector<128x1xf32>
    %cst_9 = arith.constant 9.99999974E-6 : f32
    %24 = vector.broadcast %cst_9 : f32 to vector<128x1xf32>
    %25 = arith.addf %23, %24 : vector<128x1xf32>
    %26 = math.rsqrt %25 : vector<128x1xf32>
    %27 = vector.broadcast %26 : vector<128x1xf32> to vector<128x128xf32>
    %28 = arith.mulf %16, %27 : vector<128x128xf32>
    %c0_10 = arith.constant 0 : index
    %c0_11 = arith.constant 0 : index
    %29 = vector.load %arg5[%c0_10, %c0_11] : memref<1x128xf32, #tpu.memory_space<vmem>>, vector<1x128xf32>
    %30 = vector.broadcast %29 : vector<1x128xf32> to vector<128x128xf32>
    %31 = arith.mulf %28, %30 : vector<128x128xf32>
    %c0_12 = arith.constant 0 : index
    %c0_13 = arith.constant 0 : index
    %32 = vector.load %arg6[%c0_12, %c0_13] : memref<1x128xf32, #tpu.memory_space<vmem>>, vector<1x128xf32>
    %33 = vector.broadcast %32 : vector<1x128xf32> to vector<128x128xf32>
    %34 = arith.addf %31, %33 : vector<128x128xf32>
    %35 = math.tanh %34 : vector<128x128xf32>
    %36 = arith.truncf %35 : vector<128x128xf32> to vector<128x128xbf16>
    %c0_14 = arith.constant 0 : index
    %c0_15 = arith.constant 0 : index
    %37 = vector.load %arg2[%c0_14, %c0_15] : memref<128x128xbf16, #tpu.memory_space<vmem>>, vector<128x128xbf16>
    %38 = tpu.concatenate %36, %37 in 1 : vector<128x128xbf16>, vector<128x128xbf16> -> vector<128x256xbf16>
    %c0_16 = arith.constant 0 : index
    %c0_17 = arith.constant 0 : index
    %39 = vector.load %arg7[%c0_16, %c0_17] : memref<256x256xbf16, #tpu.memory_space<vmem>>, vector<256x256xbf16>
    %cst_18 = arith.constant dense<0.000000e+00> : vector<128x256xf32>
    %40 = tpu.matmul %38, %39, %cst_18 {dimension_numbers = #tpu.dot_dimension_numbers<[1], [0], [0], [1], [0, 0, 1, 1], [], []>} : vector<128x256xbf16>, vector<256x256xbf16>, vector<128x256xf32> -> vector<128x256xf32>
    %c0_19 = arith.constant 0 : index
    %c0_20 = arith.constant 0 : index
    %41 = vector.load %arg8[%c0_19, %c0_20] : memref<1x256xf32, #tpu.memory_space<vmem>>, vector<1x256xf32>
    %42 = vector.broadcast %41 : vector<1x256xf32> to vector<128x256xf32>
    %43 = arith.addf %40, %42 : vector<128x256xf32>
    %cst_21 = arith.constant 0.000000e+00 : f32
    %44 = vector.broadcast %cst_21 : f32 to vector<128x256xf32>
    %45 = arith.maximumf %43, %44 : vector<128x256xf32>
    %46 = arith.truncf %45 : vector<128x256xf32> to vector<128x256xbf16>
    %c0_22 = arith.constant 0 : index
    %c0_23 = arith.constant 0 : index
    %47 = vector.load %arg9[%c0_22, %c0_23] : memref<256x256xbf16, #tpu.memory_space<vmem>>, vector<256x256xbf16>
    %cst_24 = arith.constant dense<0.000000e+00> : vector<128x256xf32>
    %48 = tpu.matmul %46, %47, %cst_24 {dimension_numbers = #tpu.dot_dimension_numbers<[1], [0], [0], [1], [0, 0, 1, 1], [], []>} : vector<128x256xbf16>, vector<256x256xbf16>, vector<128x256xf32> -> vector<128x256xf32>
    %c0_25 = arith.constant 0 : index
    %c0_26 = arith.constant 0 : index
    %49 = vector.load %arg10[%c0_25, %c0_26] : memref<1x256xf32, #tpu.memory_space<vmem>>, vector<1x256xf32>
    %50 = vector.broadcast %49 : vector<1x256xf32> to vector<128x256xf32>
    %51 = arith.addf %48, %50 : vector<128x256xf32>
    %cst_27 = arith.constant 0.000000e+00 : f32
    %52 = vector.broadcast %cst_27 : f32 to vector<128x256xf32>
    %53 = arith.maximumf %51, %52 : vector<128x256xf32>
    %54 = arith.truncf %53 : vector<128x256xf32> to vector<128x256xbf16>
    %c0_28 = arith.constant 0 : index
    %c0_29 = arith.constant 0 : index
    %55 = vector.load %arg11[%c0_28, %c0_29] : memref<256x128xbf16, #tpu.memory_space<vmem>>, vector<256x128xbf16>
    %cst_30 = arith.constant dense<0.000000e+00> : vector<128x128xf32>
    %56 = tpu.matmul %54, %55, %cst_30 {dimension_numbers = #tpu.dot_dimension_numbers<[1], [0], [0], [1], [0, 0, 1, 1], [], []>} : vector<128x256xbf16>, vector<256x128xbf16>, vector<128x128xf32> -> vector<128x128xf32>
    %c0_31 = arith.constant 0 : index
    %c0_32 = arith.constant 0 : index
    %57 = vector.load %arg12[%c0_31, %c0_32] : memref<1x128xf32, #tpu.memory_space<vmem>>, vector<1x128xf32>
    %58 = vector.broadcast %57 : vector<1x128xf32> to vector<128x128xf32>
    %59 = arith.addf %56, %58 : vector<128x128xf32>
    %c0_33 = arith.constant 0 : index
    %c0_34 = arith.constant 0 : index
    %60 = vector.load %arg13[%c0_33, %c0_34] : memref<256x256xbf16, #tpu.memory_space<vmem>>, vector<256x256xbf16>
    %cst_35 = arith.constant dense<0.000000e+00> : vector<128x256xf32>
    %61 = tpu.matmul %38, %60, %cst_35 {dimension_numbers = #tpu.dot_dimension_numbers<[1], [0], [0], [1], [0, 0, 1, 1], [], []>} : vector<128x256xbf16>, vector<256x256xbf16>, vector<128x256xf32> -> vector<128x256xf32>
    %c0_36 = arith.constant 0 : index
    %c0_37 = arith.constant 0 : index
    %62 = vector.load %arg14[%c0_36, %c0_37] : memref<1x256xf32, #tpu.memory_space<vmem>>, vector<1x256xf32>
    %63 = vector.broadcast %62 : vector<1x256xf32> to vector<128x256xf32>
    %64 = arith.addf %61, %63 : vector<128x256xf32>
    %cst_38 = arith.constant 0.000000e+00 : f32
    %65 = vector.broadcast %cst_38 : f32 to vector<128x256xf32>
    %66 = arith.maximumf %64, %65 : vector<128x256xf32>
    %67 = arith.truncf %66 : vector<128x256xf32> to vector<128x256xbf16>
    %c0_39 = arith.constant 0 : index
    %c0_40 = arith.constant 0 : index
    %68 = vector.load %arg15[%c0_39, %c0_40] : memref<256x256xbf16, #tpu.memory_space<vmem>>, vector<256x256xbf16>
    %cst_41 = arith.constant dense<0.000000e+00> : vector<128x256xf32>
    %69 = tpu.matmul %67, %68, %cst_41 {dimension_numbers = #tpu.dot_dimension_numbers<[1], [0], [0], [1], [0, 0, 1, 1], [], []>} : vector<128x256xbf16>, vector<256x256xbf16>, vector<128x256xf32> -> vector<128x256xf32>
    %c0_42 = arith.constant 0 : index
    %c0_43 = arith.constant 0 : index
    %70 = vector.load %arg16[%c0_42, %c0_43] : memref<1x256xf32, #tpu.memory_space<vmem>>, vector<1x256xf32>
    %71 = vector.broadcast %70 : vector<1x256xf32> to vector<128x256xf32>
    %72 = arith.addf %69, %71 : vector<128x256xf32>
    %cst_44 = arith.constant 0.000000e+00 : f32
    %73 = vector.broadcast %cst_44 : f32 to vector<128x256xf32>
    %74 = arith.maximumf %72, %73 : vector<128x256xf32>
    %75 = arith.truncf %74 : vector<128x256xf32> to vector<128x256xbf16>
    %c0_45 = arith.constant 0 : index
    %c0_46 = arith.constant 0 : index
    %76 = vector.load %arg17[%c0_45, %c0_46] : memref<256x128xbf16, #tpu.memory_space<vmem>>, vector<256x128xbf16>
    %cst_47 = arith.constant dense<0.000000e+00> : vector<128x128xf32>
    %77 = tpu.matmul %75, %76, %cst_47 {dimension_numbers = #tpu.dot_dimension_numbers<[1], [0], [0], [1], [0, 0, 1, 1], [], []>} : vector<128x256xbf16>, vector<256x128xbf16>, vector<128x128xf32> -> vector<128x128xf32>
    %c0_48 = arith.constant 0 : index
    %c0_49 = arith.constant 0 : index
    %78 = vector.load %arg18[%c0_48, %c0_49] : memref<1x128xf32, #tpu.memory_space<vmem>>, vector<1x128xf32>
    %79 = vector.broadcast %78 : vector<1x128xf32> to vector<128x128xf32>
    %80 = arith.addf %77, %79 : vector<128x128xf32>
    %c0_50 = arith.constant 0 : index
    %c0_51 = arith.constant 0 : index
    %81 = vector.load %arg19[%c0_50, %c0_51] : memref<128x256xf32, #tpu.memory_space<vmem>>, vector<128x128xf32>
    tpu.vector_store %arg19[%c0_50, %c0_51], %59 {strides = array<i32>} : memref<128x256xf32, #tpu.memory_space<vmem>>, vector<128x128xf32>,
    %c0_52 = arith.constant 0 : index
    %c128 = arith.constant 128 : index
    %82 = vector.load %arg19[%c0_52, %c128] : memref<128x256xf32, #tpu.memory_space<vmem>>, vector<128x128xf32>
    tpu.vector_store %arg19[%c0_52, %c128], %80 {strides = array<i32>} : memref<128x256xf32, #tpu.memory_space<vmem>>, vector<128x128xf32>,
    return
  }
  func.func @transform_0(%arg0: i32) -> (i32, i32) {
    %c0_i32 = arith.constant 0 : i32
    %c0_i32_0 = arith.constant 0 : i32
    return %arg0, %c0_i32 : i32, i32
  }
  func.func @transform_1(%arg0: i32) -> (i32, i32) {
    %c0_i32 = arith.constant 0 : i32
    %c0_i32_0 = arith.constant 0 : i32
    return %arg0, %c0_i32 : i32, i32
  }
  func.func @transform_2(%arg0: i32) -> (i32, i32) {
    %c0_i32 = arith.constant 0 : i32
    %c0_i32_0 = arith.constant 0 : i32
    %c0_i32_1 = arith.constant 0 : i32
    return %c0_i32, %c0_i32_0 : i32, i32
  }
  func.func @transform_3(%arg0: i32) -> (i32, i32) {
    %c0_i32 = arith.constant 0 : i32
    %c0_i32_0 = arith.constant 0 : i32
    %c0_i32_1 = arith.constant 0 : i32
    return %c0_i32, %c0_i32_0 : i32, i32
  }
  func.func @transform_4(%arg0: i32) -> (i32, i32) {
    %c0_i32 = arith.constant 0 : i32
    %c0_i32_0 = arith.constant 0 : i32
    %c0_i32_1 = arith.constant 0 : i32
    return %c0_i32, %c0_i32_0 : i32, i32
  }
  func.func @transform_5(%arg0: i32) -> (i32, i32) {
    %c0_i32 = arith.constant 0 : i32
    %c0_i32_0 = arith.constant 0 : i32
    %c0_i32_1 = arith.constant 0 : i32
    return %c0_i32, %c0_i32_0 : i32, i32
  }
  func.func @transform_6(%arg0: i32) -> (i32, i32) {
    %c0_i32 = arith.constant 0 : i32
    %c0_i32_0 = arith.constant 0 : i32
    %c0_i32_1 = arith.constant 0 : i32
    return %c0_i32, %c0_i32_0 : i32, i32
  }
  func.func @transform_7(%arg0: i32) -> (i32, i32) {
    %c0_i32 = arith.constant 0 : i32
    %c0_i32_0 = arith.constant 0 : i32
    %c0_i32_1 = arith.constant 0 : i32
    return %c0_i32, %c0_i32_0 : i32, i32
  }
  func.func @transform_8(%arg0: i32) -> (i32, i32) {
    %c0_i32 = arith.constant 0 : i32
    %c0_i32_0 = arith.constant 0 : i32
    %c0_i32_1 = arith.constant 0 : i32
    return %c0_i32, %c0_i32_0 : i32, i32
  }
  func.func @transform_9(%arg0: i32) -> (i32, i32) {
    %c0_i32 = arith.constant 0 : i32
    %c0_i32_0 = arith.constant 0 : i32
    %c0_i32_1 = arith.constant 0 : i32
    return %c0_i32, %c0_i32_0 : i32, i32
  }
  func.func @transform_10(%arg0: i32) -> (i32, i32) {
    %c0_i32 = arith.constant 0 : i32
    %c0_i32_0 = arith.constant 0 : i32
    %c0_i32_1 = arith.constant 0 : i32
    return %c0_i32, %c0_i32_0 : i32, i32
  }
  func.func @transform_11(%arg0: i32) -> (i32, i32) {
    %c0_i32 = arith.constant 0 : i32
    %c0_i32_0 = arith.constant 0 : i32
    %c0_i32_1 = arith.constant 0 : i32
    return %c0_i32, %c0_i32_0 : i32, i32
  }
  func.func @transform_12(%arg0: i32) -> (i32, i32) {
    %c0_i32 = arith.constant 0 : i32
    %c0_i32_0 = arith.constant 0 : i32
    %c0_i32_1 = arith.constant 0 : i32
    return %c0_i32, %c0_i32_0 : i32, i32
  }
  func.func @transform_13(%arg0: i32) -> (i32, i32) {
    %c0_i32 = arith.constant 0 : i32
    %c0_i32_0 = arith.constant 0 : i32
    %c0_i32_1 = arith.constant 0 : i32
    return %c0_i32, %c0_i32_0 : i32, i32
  }
  func.func @transform_14(%arg0: i32) -> (i32, i32) {
    %c0_i32 = arith.constant 0 : i32
    %c0_i32_0 = arith.constant 0 : i32
    %c0_i32_1 = arith.constant 0 : i32
    return %c0_i32, %c0_i32_0 : i32, i32
  }
  func.func @transform_15(%arg0: i32) -> (i32, i32) {
    %c0_i32 = arith.constant 0 : i32
    %c0_i32_0 = arith.constant 0 : i32
    %c0_i32_1 = arith.constant 0 : i32
    return %c0_i32, %c0_i32_0 : i32, i32
  }
  func.func @transform_16(%arg0: i32) -> (i32, i32) {
    %c0_i32 = arith.constant 0 : i32
    %c0_i32_0 = arith.constant 0 : i32
    %c0_i32_1 = arith.constant 0 : i32
    return %c0_i32, %c0_i32_0 : i32, i32
  }
  func.func @transform_17(%arg0: i32) -> (i32, i32) {
    %c0_i32 = arith.constant 0 : i32
    %c0_i32_0 = arith.constant 0 : i32
    %c0_i32_1 = arith.constant 0 : i32
    return %c0_i32, %c0_i32_0 : i32, i32
  }
  func.func @transform_18(%arg0: i32) -> (i32, i32) {
    %c0_i32 = arith.constant 0 : i32
    %c0_i32_0 = arith.constant 0 : i32
    return %arg0, %c0_i32 : i32, i32
  }
}

</mosaic_0001>

<llo_original>
// kernel: tpu_custom_call.1
$region0: #{tpu_custom_call.1}
  #allocation0 [shape = 'u32[]', space=smem, size = 0x4, offset = 0x4, fixed_abs, tag = 'smem constant byte address 0x4 - core index']
  #allocation1 [shape = 'u32[144,128]{1,0:T(1,128)}', space=vmem, size = 0x12000, scoped, tag = 'internal scratch']
  %s0 = inlined_call_operand.hbm [shape: bf16[256,512], index: 0, kind: input, shape index: {}]
  %s1 = inlined_call_operand.hbm [shape: bf16[256,128], index: 1, kind: input, shape index: {}]
  %s2 = inlined_call_operand.hbm [shape: bf16[512,128], index: 2, kind: input, shape index: {}]
  %s3 = inlined_call_operand.vmem [shape: f32[1,128], index: 3, kind: input, shape index: {}]
  %s4 = inlined_call_operand.vmem [shape: f32[1,128], index: 4, kind: input, shape index: {}]
  %s5 = inlined_call_operand.vmem [shape: f32[1,128], index: 5, kind: input, shape index: {}]
  %s6 = inlined_call_operand.hbm [shape: bf16[256,256], index: 6, kind: input, shape index: {}]
  %s7 = inlined_call_operand.vmem [shape: f32[1,256], index: 7, kind: input, shape index: {}]
  %s8 = inlined_call_operand.hbm [shape: bf16[256,256], index: 8, kind: input, shape index: {}]
  %s9 = inlined_call_operand.vmem [shape: f32[1,256], index: 9, kind: input, shape index: {}]
  %s10 = inlined_call_operand.hbm [shape: bf16[256,128], index: 10, kind: input, shape index: {}]
  %s11 = inlined_call_operand.vmem [shape: f32[1,128], index: 11, kind: input, shape index: {}]
  %s12 = inlined_call_operand.hbm [shape: bf16[256,256], index: 12, kind: input, shape index: {}]
  %s13 = inlined_call_operand.vmem [shape: f32[1,256], index: 13, kind: input, shape index: {}]
  %s14 = inlined_call_operand.hbm [shape: bf16[256,256], index: 14, kind: input, shape index: {}]
  %s15 = inlined_call_operand.vmem [shape: f32[1,256], index: 15, kind: input, shape index: {}]
  %s16 = inlined_call_operand.hbm [shape: bf16[256,128], index: 16, kind: input, shape index: {}]
  %s17 = inlined_call_operand.vmem [shape: f32[1,128], index: 17, kind: input, shape index: {}]
  %s18 = inlined_call_operand.hbm [shape: f32[256,256], index: 18, kind: output, shape index: {}]
  %s19 = sld [smem:[#allocation0]]
  $region141: #{tpu_custom_call.1} parent=0
    _
  %s21 = ssub.s32 1, %s19
  %s22 = scalar_select 0, %s21, %s19
  $region1: #{tpu_custom_call.1} parent=0
    #allocation2 [shape = 'u8[262144]{0}', space=vmem, size = 0x40000, scoped, tag = 'input window, operand 0']
    #allocation3 [shape = 's32[2]{0}', space=sflag, size = 0x8, scoped, tag = 'scoped memory for tpu_custom_call.1']
    #allocation4 [shape = 's32[2]{0}', space=sflag, size = 0x8, scoped, tag = 'scoped memory for tpu_custom_call.1']
    #allocation5 [shape = 'u8[65536]{0}', space=vmem, size = 0x10000, scoped, tag = 'input window, operand 1']
    #allocation6 [shape = 's32[2]{0}', space=sflag, size = 0x8, scoped, tag = 'scoped memory for tpu_custom_call.1']
    #allocation7 [shape = 'u8[131072]{0}', space=vmem, size = 0x20000, scoped, tag = 'input window, operand 2, single buffered']
    #allocation8 [shape = 'u8[131072]{0}', space=vmem, size = 0x20000, scoped, tag = 'input window, operand 6, single buffered']
    #allocation9 [shape = 's32[1]{0}', space=sflag, size = 0x4, scoped, tag = 'scoped memory for tpu_custom_call.1']
    #allocation10 [shape = 'u8[131072]{0}', space=vmem, size = 0x20000, scoped, tag = 'input window, operand 8, single buffered']
    #allocation11 [shape = 'u8[65536]{0}', space=vmem, size = 0x10000, scoped, tag = 'input window, operand 10, single buffered']
    #allocation12 [shape = 's32[1]{0}', space=sflag, size = 0x4, scoped, tag = 'scoped memory for tpu_custom_call.1']
    #allocation13 [shape = 'u8[131072]{0}', space=vmem, size = 0x20000, scoped, tag = 'input window, operand 12, single buffered']
    #allocation14 [shape = 'u8[131072]{0}', space=vmem, size = 0x20000, scoped, tag = 'input window, operand 14, single buffered']
    #allocation15 [shape = 's32[1]{0}', space=sflag, size = 0x4, scoped, tag = 'scoped memory for tpu_custom_call.1']
    #allocation16 [shape = 'u8[65536]{0}', space=vmem, size = 0x10000, scoped, tag = 'input window, operand 16, single buffered']
    #allocation17 [shape = 'u8[262144]{0}', space=vmem, size = 0x40000, scoped, tag = 'output window, operand 0']
    %23 = vsyncpa [#allocation3], 0
    %s24 = scalar_lea.sflag [#allocation3], 1
    %25 = vsyncpa %s24, 0
    %26 = vsyncpa [#allocation6], 0
    %s27 = scalar_lea.sflag [#allocation6], 1
    %28 = vsyncpa %s27, 0
    %29 = vsyncpa [#allocation9], 0
    %30 = vsyncpa [#allocation12], 0
    %31 = vsyncpa [#allocation15], 0
    %32 = vsyncpa [#allocation4], 0
    %s33 = scalar_lea.sflag [#allocation4], 1
    %34 = vsyncpa %s33, 0
    loop: start=0, step=1, limit=4
    $region2: #{tpu_custom_call.1} parent=1 // loop_pre_header
      _
    $region3: #{tpu_custom_call.1} parent=1 // loop_header
      %s36 = sphi 0, %s40
      %p37 = scmp.ge.s32.totalorder %s36, 4
      %s46 = sphi 0, %s48
      %s49 = sphi 0, %s46
      %s50 = sphi 0, %s49
      %s66 = sphi 0, %s50
      %s72 = sphi 0, %s74
      %s75 = sphi 0, %s72
      %s76 = sphi 0, %s75
      %s92 = sphi 0, %s76
      %s96 = sphi 0, %s96
      %s98 = sphi 0, %s96
      %s99 = sphi 0, %s98
      %s113 = sphi 0, %s99
      %s117 = sphi 0, %s117
      %s119 = sphi 0, %s117
      %s120 = sphi 0, %s119
      %s134 = sphi 0, %s120
      %s138 = sphi 0, %s138
      %s140 = sphi 0, %s138
      %s141 = sphi 0, %s140
      %s155 = sphi 0, %s141
      %s159 = sphi 0, %s159
      %s161 = sphi 0, %s159
      %s162 = sphi 0, %s161
      %s176 = sphi 0, %s162
      %s180 = sphi 0, %s180
      %s182 = sphi 0, %s180
      %s183 = sphi 0, %s182
      %s197 = sphi 0, %s183
      %s201 = sphi 0, %s201
      %s203 = sphi 0, %s201
      %s204 = sphi 0, %s203
      %s218 = sphi 0, %s204
      %s222 = sphi 0, %s222
      %s224 = sphi 0, %s222
      %s225 = sphi 0, %s224
      %s239 = sphi 0, %s225
      %s243 = sphi 0, %s243
      %s245 = sphi 0, %s243
      %s246 = sphi 0, %s245
      %s260 = sphi 0, %s246
      %s264 = sphi 0, %s264
      %s266 = sphi 0, %s264
      %s267 = sphi 0, %s266
      %s281 = sphi 0, %s267
      %s285 = sphi 0, %s285
      %s287 = sphi 0, %s285
      %s288 = sphi 0, %s287
      %s302 = sphi 0, %s288
      %s306 = sphi 0, %s306
      %s308 = sphi 0, %s306
      %s309 = sphi 0, %s308
      %s323 = sphi 0, %s309
      %s327 = sphi 0, %s327
      %s329 = sphi 0, %s327
      %s330 = sphi 0, %s329
      %s344 = sphi 0, %s330
      %s348 = sphi 0, %s348
      %s350 = sphi 0, %s348
      %s351 = sphi 0, %s350
      %s365 = sphi 0, %s351
      %s369 = sphi 0, %s369
      %s371 = sphi 0, %s369
      %s372 = sphi 0, %s371
      %s386 = sphi 0, %s372
      %s390 = sphi 0, %s390
      %s392 = sphi 0, %s390
      %s393 = sphi 0, %s392
      %s407 = sphi 0, %s393
      %s411 = sphi 0, %s411
      %s413 = sphi 0, %s411
      %s414 = sphi 0, %s413
      %s428 = sphi 0, %s414
      %s434 = sphi 0, %s436
      %s437 = sphi 0, %s434
      %s438 = sphi 0, %s437
      %s454 = sphi 0, %s438
    $region4: #{tpu_custom_call.1} parent=1 // loop_header_branch
      %39 = sbr.rel (%p37) target = $region8
    $region5: #{tpu_custom_call.1} parent=1 // loop_body
      %s41 = ssub.s32 %s36, 1
      %s42 = ssub.s32 %s36, 2
      %s43 = sadd.s32 %s36, 1
      %s44 = ssub.s32 %s36, %s43
      %p45 = scmp.eq.s32.totalorder %s44, 0
      %s47 = sadd.s32 %s46, 1
      %s48 = scalar_select %p45, %s46, %s47
      %p51 = pneg %p45
      %p52 = scmp.eq.s32.totalorder %s36, 1
      %p53 = por %p51, %p52
      %p54 = scmp.ne.s32.totalorder %s46, %s49
      %p55 = scmp.eq.s32.totalorder %s36, 0
      %p56 = por %p54, %p55
      %p57 = scmp.ne.s32.totalorder %s46, %s49
      %p58 = scmp.eq.s32.totalorder %s41, 1
      %p59 = por %p57, %p58
      %p60 = scmp.ne.s32.totalorder %s49, %s50
      %p61 = scmp.eq.s32.totalorder %s41, 0
      %p62 = por %p60, %p61
      %p63 = scmp.ne.s32.totalorder %s49, %s50
      %p64 = scmp.eq.s32.totalorder %s42, 1
      %p65 = por %p63, %p64
      %p67 = scmp.ne.s32.totalorder %s50, %s66
      %p68 = scmp.eq.s32.totalorder %s42, 0
      %p69 = por %p67, %p68
      %s70 = ssub.s32 %s36, %s43
      %p71 = scmp.eq.s32.totalorder %s70, 0
      %s73 = sadd.s32 %s72, 1
      %s74 = scalar_select %p71, %s72, %s73
      %p77 = pneg %p71
      %p78 = scmp.eq.s32.totalorder %s36, 1
      %p79 = por %p77, %p78
      %p80 = scmp.ne.s32.totalorder %s72, %s75
      %p81 = scmp.eq.s32.totalorder %s36, 0
      %p82 = por %p80, %p81
      %p83 = scmp.ne.s32.totalorder %s72, %s75
      %p84 = scmp.eq.s32.totalorder %s41, 1
      %p85 = por %p83, %p84
      %p86 = scmp.ne.s32.totalorder %s75, %s76
      %p87 = scmp.eq.s32.totalorder %s41, 0
      %p88 = por %p86, %p87
      %p89 = scmp.ne.s32.totalorder %s75, %s76
      %p90 = scmp.eq.s32.totalorder %s42, 1
      %p91 = por %p89, %p90
      %p93 = scmp.ne.s32.totalorder %s76, %s92
      %p94 = scmp.eq.s32.totalorder %s42, 0
      %p95 = por %p93, %p94
      %s97 = sadd.s32 %s96, 1
      %p100 = scmp.eq.s32.totalorder %s36, 1
      %p101 = scmp.ne.s32.totalorder %s96, %s98
      %p102 = scmp.eq.s32.totalorder %s36, 0
      %p103 = por %p101, %p102
      %p104 = scmp.ne.s32.totalorder %s96, %s98
      %p105 = scmp.eq.s32.totalorder %s41, 1
      %p106 = por %p104, %p105
      %p107 = scmp.ne.s32.totalorder %s98, %s99
      %p108 = scmp.eq.s32.totalorder %s41, 0
      %p109 = por %p107, %p108
      %p110 = scmp.ne.s32.totalorder %s98, %s99
      %p111 = scmp.eq.s32.totalorder %s42, 1
      %p112 = por %p110, %p111
      %p114 = scmp.ne.s32.totalorder %s99, %s113
      %p115 = scmp.eq.s32.totalorder %s42, 0
      %p116 = por %p114, %p115
      %s118 = sadd.s32 %s117, 1
      %p121 = scmp.eq.s32.totalorder %s36, 1
      %p122 = scmp.ne.s32.totalorder %s117, %s119
      %p123 = scmp.eq.s32.totalorder %s36, 0
      %p124 = por %p122, %p123
      %p125 = scmp.ne.s32.totalorder %s117, %s119
      %p126 = scmp.eq.s32.totalorder %s41, 1
      %p127 = por %p125, %p126
      %p128 = scmp.ne.s32.totalorder %s119, %s120
      %p129 = scmp.eq.s32.totalorder %s41, 0
      %p130 = por %p128, %p129
      %p131 = scmp.ne.s32.totalorder %s119, %s120
      %p132 = scmp.eq.s32.totalorder %s42, 1
      %p133 = por %p131, %p132
      %p135 = scmp.ne.s32.totalorder %s120, %s134
      %p136 = scmp.eq.s32.totalorder %s42, 0
      %p137 = por %p135, %p136
      %s139 = sadd.s32 %s138, 1
      %p142 = scmp.eq.s32.totalorder %s36, 1
      %p143 = scmp.ne.s32.totalorder %s138, %s140
      %p144 = scmp.eq.s32.totalorder %s36, 0
      %p145 = por %p143, %p144
      %p146 = scmp.ne.s32.totalorder %s138, %s140
      %p147 = scmp.eq.s32.totalorder %s41, 1
      %p148 = por %p146, %p147
      %p149 = scmp.ne.s32.totalorder %s140, %s141
      %p150 = scmp.eq.s32.totalorder %s41, 0
      %p151 = por %p149, %p150
      %p152 = scmp.ne.s32.totalorder %s140, %s141
      %p153 = scmp.eq.s32.totalorder %s42, 1
      %p154 = por %p152, %p153
      %p156 = scmp.ne.s32.totalorder %s141, %s155
      %p157 = scmp.eq.s32.totalorder %s42, 0
      %p158 = por %p156, %p157
      %s160 = sadd.s32 %s159, 1
      %p163 = scmp.eq.s32.totalorder %s36, 1
      %p164 = scmp.ne.s32.totalorder %s159, %s161
      %p165 = scmp.eq.s32.totalorder %s36, 0
      %p166 = por %p164, %p165
      %p167 = scmp.ne.s32.totalorder %s159, %s161
      %p168 = scmp.eq.s32.totalorder %s41, 1
      %p169 = por %p167, %p168
      %p170 = scmp.ne.s32.totalorder %s161, %s162
      %p171 = scmp.eq.s32.totalorder %s41, 0
      %p172 = por %p170, %p171
      %p173 = scmp.ne.s32.totalorder %s161, %s162
      %p174 = scmp.eq.s32.totalorder %s42, 1
      %p175 = por %p173, %p174
      %p177 = scmp.ne.s32.totalorder %s162, %s176
      %p178 = scmp.eq.s32.totalorder %s42, 0
      %p179 = por %p177, %p178
      %s181 = sadd.s32 %s180, 1
      %p184 = scmp.eq.s32.totalorder %s36, 1
      %p185 = scmp.ne.s32.totalorder %s180, %s182
      %p186 = scmp.eq.s32.totalorder %s36, 0
      %p187 = por %p185, %p186
      %p188 = scmp.ne.s32.totalorder %s180, %s182
      %p189 = scmp.eq.s32.totalorder %s41, 1
      %p190 = por %p188, %p189
      %p191 = scmp.ne.s32.totalorder %s182, %s183
      %p192 = scmp.eq.s32.totalorder %s41, 0
      %p193 = por %p191, %p192
      %p194 = scmp.ne.s32.totalorder %s182, %s183
      %p195 = scmp.eq.s32.totalorder %s42, 1
      %p196 = por %p194, %p195
      %p198 = scmp.ne.s32.totalorder %s183, %s197
      %p199 = scmp.eq.s32.totalorder %s42, 0
      %p200 = por %p198, %p199
      %s202 = sadd.s32 %s201, 1
      %p205 = scmp.eq.s32.totalorder %s36, 1
      %p206 = scmp.ne.s32.totalorder %s201, %s203
      %p207 = scmp.eq.s32.totalorder %s36, 0
      %p208 = por %p206, %p207
      %p209 = scmp.ne.s32.totalorder %s201, %s203
      %p210 = scmp.eq.s32.totalorder %s41, 1
      %p211 = por %p209, %p210
      %p212 = scmp.ne.s32.totalorder %s203, %s204
      %p213 = scmp.eq.s32.totalorder %s41, 0
      %p214 = por %p212, %p213
      %p215 = scmp.ne.s32.totalorder %s203, %s204
      %p216 = scmp.eq.s32.totalorder %s42, 1
      %p217 = por %p215, %p216
      %p219 = scmp.ne.s32.totalorder %s204, %s218
      %p220 = scmp.eq.s32.totalorder %s42, 0
      %p221 = por %p219, %p220
      %s223 = sadd.s32 %s222, 1
      %p226 = scmp.eq.s32.totalorder %s36, 1
      %p227 = scmp.ne.s32.totalorder %s222, %s224
      %p228 = scmp.eq.s32.totalorder %s36, 0
      %p229 = por %p227, %p228
      %p230 = scmp.ne.s32.totalorder %s222, %s224
      %p231 = scmp.eq.s32.totalorder %s41, 1
      %p232 = por %p230, %p231
      %p233 = scmp.ne.s32.totalorder %s224, %s225
      %p234 = scmp.eq.s32.totalorder %s41, 0
      %p235 = por %p233, %p234
      %p236 = scmp.ne.s32.totalorder %s224, %s225
      %p237 = scmp.eq.s32.totalorder %s42, 1
      %p238 = por %p236, %p237
      %p240 = scmp.ne.s32.totalorder %s225, %s239
      %p241 = scmp.eq.s32.totalorder %s42, 0
      %p242 = por %p240, %p241
      %s244 = sadd.s32 %s243, 1
      %p247 = scmp.eq.s32.totalorder %s36, 1
      %p248 = scmp.ne.s32.totalorder %s243, %s245
      %p249 = scmp.eq.s32.totalorder %s36, 0
      %p250 = por %p248, %p249
      %p251 = scmp.ne.s32.totalorder %s243, %s245
      %p252 = scmp.eq.s32.totalorder %s41, 1
      %p253 = por %p251, %p252
      %p254 = scmp.ne.s32.totalorder %s245, %s246
      %p255 = scmp.eq.s32.totalorder %s41, 0
      %p256 = por %p254, %p255
      %p257 = scmp.ne.s32.totalorder %s245, %s246
      %p258 = scmp.eq.s32.totalorder %s42, 1
      %p259 = por %p257, %p258
      %p261 = scmp.ne.s32.totalorder %s246, %s260
      %p262 = scmp.eq.s32.totalorder %s42, 0
      %p263 = por %p261, %p262
      %s265 = sadd.s32 %s264, 1
      %p268 = scmp.eq.s32.totalorder %s36, 1
      %p269 = scmp.ne.s32.totalorder %s264, %s266
      %p270 = scmp.eq.s32.totalorder %s36, 0
      %p271 = por %p269, %p270
      %p272 = scmp.ne.s32.totalorder %s264, %s266
      %p273 = scmp.eq.s32.totalorder %s41, 1
      %p274 = por %p272, %p273
      %p275 = scmp.ne.s32.totalorder %s266, %s267
      %p276 = scmp.eq.s32.totalorder %s41, 0
      %p277 = por %p275, %p276
      %p278 = scmp.ne.s32.totalorder %s266, %s267
      %p279 = scmp.eq.s32.totalorder %s42, 1
      %p280 = por %p278, %p279
      %p282 = scmp.ne.s32.totalorder %s267, %s281
      %p283 = scmp.eq.s32.totalorder %s42, 0
      %p284 = por %p282, %p283
      %s286 = sadd.s32 %s285, 1
      %p289 = scmp.eq.s32.totalorder %s36, 1
      %p290 = scmp.ne.s32.totalorder %s285, %s287
      %p291 = scmp.eq.s32.totalorder %s36, 0
      %p292 = por %p290, %p291
      %p293 = scmp.ne.s32.totalorder %s285, %s287
      %p294 = scmp.eq.s32.totalorder %s41, 1
      %p295 = por %p293, %p294
      %p296 = scmp.ne.s32.totalorder %s287, %s288
      %p297 = scmp.eq.s32.totalorder %s41, 0
      %p298 = por %p296, %p297
      %p299 = scmp.ne.s32.totalorder %s287, %s288
      %p300 = scmp.eq.s32.totalorder %s42, 1
      %p301 = por %p299, %p300
      %p303 = scmp.ne.s32.totalorder %s288, %s302
      %p304 = scmp.eq.s32.totalorder %s42, 0
      %p305 = por %p303, %p304
      %s307 = sadd.s32 %s306, 1
      %p310 = scmp.eq.s32.totalorder %s36, 1
      %p311 = scmp.ne.s32.totalorder %s306, %s308
      %p312 = scmp.eq.s32.totalorder %s36, 0
      %p313 = por %p311, %p312
      %p314 = scmp.ne.s32.totalorder %s306, %s308
      %p315 = scmp.eq.s32.totalorder %s41, 1
      %p316 = por %p314, %p315
      %p317 = scmp.ne.s32.totalorder %s308, %s309
      %p318 = scmp.eq.s32.totalorder %s41, 0
      %p319 = por %p317, %p318
      %p320 = scmp.ne.s32.totalorder %s308, %s309
      %p321 = scmp.eq.s32.totalorder %s42, 1
      %p322 = por %p320, %p321
      %p324 = scmp.ne.s32.totalorder %s309, %s323
      %p325 = scmp.eq.s32.totalorder %s42, 0
      %p326 = por %p324, %p325
      %s328 = sadd.s32 %s327, 1
      %p331 = scmp.eq.s32.totalorder %s36, 1
      %p332 = scmp.ne.s32.totalorder %s327, %s329
      %p333 = scmp.eq.s32.totalorder %s36, 0
      %p334 = por %p332, %p333
      %p335 = scmp.ne.s32.totalorder %s327, %s329
      %p336 = scmp.eq.s32.totalorder %s41, 1
      %p337 = por %p335, %p336
      %p338 = scmp.ne.s32.totalorder %s329, %s330
      %p339 = scmp.eq.s32.totalorder %s41, 0
      %p340 = por %p338, %p339
      %p341 = scmp.ne.s32.totalorder %s329, %s330
      %p342 = scmp.eq.s32.totalorder %s42, 1
      %p343 = por %p341, %p342
      %p345 = scmp.ne.s32.totalorder %s330, %s344
      %p346 = scmp.eq.s32.totalorder %s42, 0
      %p347 = por %p345, %p346
      %s349 = sadd.s32 %s348, 1
      %p352 = scmp.eq.s32.totalorder %s36, 1
      %p353 = scmp.ne.s32.totalorder %s348, %s350
      %p354 = scmp.eq.s32.totalorder %s36, 0
      %p355 = por %p353, %p354
      %p356 = scmp.ne.s32.totalorder %s348, %s350
      %p357 = scmp.eq.s32.totalorder %s41, 1
      %p358 = por %p356, %p357
      %p359 = scmp.ne.s32.totalorder %s350, %s351
      %p360 = scmp.eq.s32.totalorder %s41, 0
      %p361 = por %p359, %p360
      %p362 = scmp.ne.s32.totalorder %s350, %s351
      %p363 = scmp.eq.s32.totalorder %s42, 1
      %p364 = por %p362, %p363
      %p366 = scmp.ne.s32.totalorder %s351, %s365
      %p367 = scmp.eq.s32.totalorder %s42, 0
      %p368 = por %p366, %p367
      %s370 = sadd.s32 %s369, 1
      %p373 = scmp.eq.s32.totalorder %s36, 1
      %p374 = scmp.ne.s32.totalorder %s369, %s371
      %p375 = scmp.eq.s32.totalorder %s36, 0
      %p376 = por %p374, %p375
      %p377 = scmp.ne.s32.totalorder %s369, %s371
      %p378 = scmp.eq.s32.totalorder %s41, 1
      %p379 = por %p377, %p378
      %p380 = scmp.ne.s32.totalorder %s371, %s372
      %p381 = scmp.eq.s32.totalorder %s41, 0
      %p382 = por %p380, %p381
      %p383 = scmp.ne.s32.totalorder %s371, %s372
      %p384 = scmp.eq.s32.totalorder %s42, 1
      %p385 = por %p383, %p384
      %p387 = scmp.ne.s32.totalorder %s372, %s386
      %p388 = scmp.eq.s32.totalorder %s42, 0
      %p389 = por %p387, %p388
      %s391 = sadd.s32 %s390, 1
      %p394 = scmp.eq.s32.totalorder %s36, 1
      %p395 = scmp.ne.s32.totalorder %s390, %s392
      %p396 = scmp.eq.s32.totalorder %s36, 0
      %p397 = por %p395, %p396
      %p398 = scmp.ne.s32.totalorder %s390, %s392
      %p399 = scmp.eq.s32.totalorder %s41, 1
      %p400 = por %p398, %p399
      %p401 = scmp.ne.s32.totalorder %s392, %s393
      %p402 = scmp.eq.s32.totalorder %s41, 0
      %p403 = por %p401, %p402
      %p404 = scmp.ne.s32.totalorder %s392, %s393
      %p405 = scmp.eq.s32.totalorder %s42, 1
      %p406 = por %p404, %p405
      %p408 = scmp.ne.s32.totalorder %s393, %s407
      %p409 = scmp.eq.s32.totalorder %s42, 0
      %p410 = por %p408, %p409
      %s412 = sadd.s32 %s411, 1
      %p415 = scmp.eq.s32.totalorder %s36, 1
      %p416 = scmp.ne.s32.totalorder %s411, %s413
      %p417 = scmp.eq.s32.totalorder %s36, 0
      %p418 = por %p416, %p417
      %p419 = scmp.ne.s32.totalorder %s411, %s413
      %p420 = scmp.eq.s32.totalorder %s41, 1
      %p421 = por %p419, %p420
      %p422 = scmp.ne.s32.totalorder %s413, %s414
      %p423 = scmp.eq.s32.totalorder %s41, 0
      %p424 = por %p422, %p423
      %p425 = scmp.ne.s32.totalorder %s413, %s414
      %p426 = scmp.eq.s32.totalorder %s42, 1
      %p427 = por %p425, %p426
      %p429 = scmp.ne.s32.totalorder %s414, %s428
      %p430 = scmp.eq.s32.totalorder %s42, 0
      %p431 = por %p429, %p430
      %s432 = ssub.s32 %s36, %s43
      %p433 = scmp.eq.s32.totalorder %s432, 0
      %s435 = sadd.s32 %s434, 1
      %s436 = scalar_select %p433, %s434, %s435
      %p439 = pneg %p433
      %p440 = scmp.eq.s32.totalorder %s36, 1
      %p441 = por %p439, %p440
      %p442 = scmp.ne.s32.totalorder %s434, %s437
      %p443 = scmp.eq.s32.totalorder %s36, 0
      %p444 = por %p442, %p443
      %p445 = scmp.ne.s32.totalorder %s434, %s437
      %p446 = scmp.eq.s32.totalorder %s41, 1
      %p447 = por %p445, %p446
      %p448 = scmp.ne.s32.totalorder %s437, %s438
      %p449 = scmp.eq.s32.totalorder %s41, 0
      %p450 = por %p448, %p449
      %p451 = scmp.ne.s32.totalorder %s437, %s438
      %p452 = scmp.eq.s32.totalorder %s42, 1
      %p453 = por %p451, %p452
      %p455 = scmp.ne.s32.totalorder %s438, %s454
      %p456 = scmp.eq.s32.totalorder %s42, 0
      %p457 = por %p455, %p456
      %p458 = scmp.le.s32.totalorder 1, %s36
      %p459 = scmp.lt.s32.totalorder %s36, 3
      %p460 = pnand %p458, %p459
      %p461 = pneg %p460
      // Predicated region
      $region9: #{tpu_custom_call.1} parent=5 // pred_check
        _
      $region10: #{tpu_custom_call.1} parent=5 // pred_check_branch
        %463 = sbr.rel (%p460) target = $region12
      $region11: #{tpu_custom_call.1} parent=5 // pred_region
        %s464 = ssub.s32 %s36, 1
        // Predicated region
        $region13: #{tpu_custom_call.1} parent=11 // pred_check
          %p465 = pneg %p109
        $region14: #{tpu_custom_call.1} parent=11 // pred_check_branch
          %467 = sbr.rel (%p465) target = $region16
        $region15: #{tpu_custom_call.1} parent=11 // pred_region
          %s469 = ssub.s32 4096, 4096
          %470 = vsyncadd [#allocation6], %s469
          %s471 = sshll.u32 [#allocation7], 4
          %s472 = int_to_ptr.vmem [resolvable:$true] %s471
          %477 = dma.hbm_to_vmem [thread:$0]  %s2, 4096, %s472, [#allocation6], 64, 64, 4
        $region16: #{tpu_custom_call.1} parent=11 // pred_fallthru
          _
        // Predicated region
        $region17: #{tpu_custom_call.1} parent=11 // pred_check
          %p478 = pneg %p130
        $region18: #{tpu_custom_call.1} parent=11 // pred_check_branch
          %480 = sbr.rel (%p478) target = $region20
        $region19: #{tpu_custom_call.1} parent=11 // pred_region
          _
        $region20: #{tpu_custom_call.1} parent=11 // pred_fallthru
          _
        // Predicated region
        $region21: #{tpu_custom_call.1} parent=11 // pred_check
          %p481 = pneg %p151
        $region22: #{tpu_custom_call.1} parent=11 // pred_check_branch
          %483 = sbr.rel (%p481) target = $region24
        $region23: #{tpu_custom_call.1} parent=11 // pred_region
          _
        $region24: #{tpu_custom_call.1} parent=11 // pred_fallthru
          _
        // Predicated region
        $region25: #{tpu_custom_call.1} parent=11 // pred_check
          %p484 = pneg %p172
        $region26: #{tpu_custom_call.1} parent=11 // pred_check_branch
          %486 = sbr.rel (%p484) target = $region28
        $region27: #{tpu_custom_call.1} parent=11 // pred_region
          _
        $region28: #{tpu_custom_call.1} parent=11 // pred_fallthru
          _
        // Predicated region
        $region29: #{tpu_custom_call.1} parent=11 // pred_check
          %p487 = pneg %p193
        $region30: #{tpu_custom_call.1} parent=11 // pred_check_branch
          %489 = sbr.rel (%p487) target = $region32
        $region31: #{tpu_custom_call.1} parent=11 // pred_region
          %s491 = ssub.s32 4096, 4096
          %492 = vsyncadd [#allocation9], %s491
          %s493 = sshll.u32 [#allocation8], 4
          %s494 = int_to_ptr.vmem [resolvable:$true] %s493
          %499 = dma.hbm_to_vmem [thread:$0]  %s6, 4096, %s494, [#allocation9], 128, 128, 8
        $region32: #{tpu_custom_call.1} parent=11 // pred_fallthru
          _
        // Predicated region
        $region33: #{tpu_custom_call.1} parent=11 // pred_check
          %p500 = pneg %p214
        $region34: #{tpu_custom_call.1} parent=11 // pred_check_branch
          %502 = sbr.rel (%p500) target = $region36
        $region35: #{tpu_custom_call.1} parent=11 // pred_region
          _
        $region36: #{tpu_custom_call.1} parent=11 // pred_fallthru
          _
        // Predicated region
        $region37: #{tpu_custom_call.1} parent=11 // pred_check
          %p503 = pneg %p235
        $region38: #{tpu_custom_call.1} parent=11 // pred_check_branch
          %505 = sbr.rel (%p503) target = $region40
        $region39: #{tpu_custom_call.1} parent=11 // pred_region
          %s507 = ssub.s32 4096, 4096
          %508 = vsyncadd [#allocation9], %s507
          %s509 = sshll.u32 [#allocation10], 4
          %s510 = int_to_ptr.vmem [resolvable:$true] %s509
          %515 = dma.hbm_to_vmem [thread:$0]  %s8, 4096, %s510, [#allocation9], 128, 128, 8
        $region40: #{tpu_custom_call.1} parent=11 // pred_fallthru
          _
        // Predicated region
        $region41: #{tpu_custom_call.1} parent=11 // pred_check
          %p516 = pneg %p256
        $region42: #{tpu_custom_call.1} parent=11 // pred_check_branch
          %518 = sbr.rel (%p516) target = $region44
        $region43: #{tpu_custom_call.1} parent=11 // pred_region
          _
        $region44: #{tpu_custom_call.1} parent=11 // pred_fallthru
          _
        // Predicated region
        $region45: #{tpu_custom_call.1} parent=11 // pred_check
          %p519 = pneg %p277
        $region46: #{tpu_custom_call.1} parent=11 // pred_check_branch
          %521 = sbr.rel (%p519) target = $region48
        $region47: #{tpu_custom_call.1} parent=11 // pred_region
          %s523 = ssub.s32 2048, 2048
          %524 = vsyncadd [#allocation12], %s523
          %s525 = sshll.u32 [#allocation11], 4
          %s526 = int_to_ptr.vmem [resolvable:$true] %s525
          %531 = dma.hbm_to_vmem [thread:$0]  %s10, 2048, %s526, [#allocation12], 64, 64, 4
        $region48: #{tpu_custom_call.1} parent=11 // pred_fallthru
          _
        // Predicated region
        $region49: #{tpu_custom_call.1} parent=11 // pred_check
          %p532 = pneg %p298
        $region50: #{tpu_custom_call.1} parent=11 // pred_check_branch
          %534 = sbr.rel (%p532) target = $region52
        $region51: #{tpu_custom_call.1} parent=11 // pred_region
          _
        $region52: #{tpu_custom_call.1} parent=11 // pred_fallthru
          _
        // Predicated region
        $region53: #{tpu_custom_call.1} parent=11 // pred_check
          %p535 = pneg %p319
        $region54: #{tpu_custom_call.1} parent=11 // pred_check_branch
          %537 = sbr.rel (%p535) target = $region56
        $region55: #{tpu_custom_call.1} parent=11 // pred_region
          %s539 = ssub.s32 4096, 4096
          %540 = vsyncadd [#allocation12], %s539
          %s541 = sshll.u32 [#allocation13], 4
          %s542 = int_to_ptr.vmem [resolvable:$true] %s541
          %547 = dma.hbm_to_vmem [thread:$0]  %s12, 4096, %s542, [#allocation12], 128, 128, 8
        $region56: #{tpu_custom_call.1} parent=11 // pred_fallthru
          _
        // Predicated region
        $region57: #{tpu_custom_call.1} parent=11 // pred_check
          %p548 = pneg %p340
        $region58: #{tpu_custom_call.1} parent=11 // pred_check_branch
          %550 = sbr.rel (%p548) target = $region60
        $region59: #{tpu_custom_call.1} parent=11 // pred_region
          _
        $region60: #{tpu_custom_call.1} parent=11 // pred_fallthru
          _
        // Predicated region
        $region61: #{tpu_custom_call.1} parent=11 // pred_check
          %p551 = pneg %p361
        $region62: #{tpu_custom_call.1} parent=11 // pred_check_branch
          %553 = sbr.rel (%p551) target = $region64
        $region63: #{tpu_custom_call.1} parent=11 // pred_region
          %s555 = ssub.s32 4096, 4096
          %556 = vsyncadd [#allocation15], %s555
          %s557 = sshll.u32 [#allocation14], 4
          %s558 = int_to_ptr.vmem [resolvable:$true] %s557
          %563 = dma.hbm_to_vmem [thread:$0]  %s14, 4096, %s558, [#allocation15], 128, 128, 8
        $region64: #{tpu_custom_call.1} parent=11 // pred_fallthru
          _
        // Predicated region
        $region65: #{tpu_custom_call.1} parent=11 // pred_check
          %p564 = pneg %p382
        $region66: #{tpu_custom_call.1} parent=11 // pred_check_branch
          %566 = sbr.rel (%p564) target = $region68
        $region67: #{tpu_custom_call.1} parent=11 // pred_region
          _
        $region68: #{tpu_custom_call.1} parent=11 // pred_fallthru
          _
        // Predicated region
        $region69: #{tpu_custom_call.1} parent=11 // pred_check
          %p567 = pneg %p403
        $region70: #{tpu_custom_call.1} parent=11 // pred_check_branch
          %569 = sbr.rel (%p567) target = $region72
        $region71: #{tpu_custom_call.1} parent=11 // pred_region
          %s571 = ssub.s32 2048, 2048
          %572 = vsyncadd [#allocation15], %s571
          %s573 = sshll.u32 [#allocation16], 4
          %s574 = int_to_ptr.vmem [resolvable:$true] %s573
          %579 = dma.hbm_to_vmem [thread:$0]  %s16, 2048, %s574, [#allocation15], 64, 64, 4
        $region72: #{tpu_custom_call.1} parent=11 // pred_fallthru
          _
        // Predicated region
        $region73: #{tpu_custom_call.1} parent=11 // pred_check
          %p580 = pneg %p424
        $region74: #{tpu_custom_call.1} parent=11 // pred_check_branch
          %582 = sbr.rel (%p580) target = $region76
        $region75: #{tpu_custom_call.1} parent=11 // pred_region
          _
        $region76: #{tpu_custom_call.1} parent=11 // pred_fallthru
          _
      $region12: #{tpu_custom_call.1} parent=5 // pred_fallthru
        _
      %p583 = scmp.lt.s32.totalorder %s36, 2
      // Predicated region
      $region77: #{tpu_custom_call.1} parent=5 // pred_check
        %p584 = pneg %p583
      $region78: #{tpu_custom_call.1} parent=5 // pred_check_branch
        %586 = sbr.rel (%p584) target = $region80
      $region79: #{tpu_custom_call.1} parent=5 // pred_region
        // Predicated region
        $region81: #{tpu_custom_call.1} parent=79 // pred_check
          %p587 = pneg %p56
        $region82: #{tpu_custom_call.1} parent=79 // pred_check_branch
          %589 = sbr.rel (%p587) target = $region84
        $region83: #{tpu_custom_call.1} parent=79 // pred_region
          %s590 = sand.u32 %s46, 1
          %s591 = scalar_lea.sflag [#allocation3], %s590
          %s592 = sand.u32 %s46, 1
          %s593 = smul.addr %s592, 256
          %s594 = scalar_lea.vmem [#allocation2], %s593
          %s595 = smul.u32 16, %s36
          %s597 = ssub.s32 4096, 4096
          %598 = vsyncadd %s591, %s597
          %s599 = smul.addr %s595, 4
          %s600 = smul.addr %s599, 64
          %s601 = scalar_lea.hbm %s0, %s600
          %s602 = sshll.u32 %s594, 4
          %s603 = int_to_ptr.vmem [resolvable:$true] %s602
          %608 = dma.hbm_to_vmem [thread:$0]  %s601, 4096, %s603, %s591, 256, 256, 16
        $region84: #{tpu_custom_call.1} parent=79 // pred_fallthru
          _
        // Predicated region
        $region85: #{tpu_custom_call.1} parent=79 // pred_check
          %p609 = pneg %p82
        $region86: #{tpu_custom_call.1} parent=79 // pred_check_branch
          %611 = sbr.rel (%p609) target = $region88
        $region87: #{tpu_custom_call.1} parent=79 // pred_region
          %s612 = sand.u32 %s36, 1
          %s613 = scalar_lea.sflag [#allocation6], %s612
          %s614 = sand.u32 %s72, 1
          %s615 = smul.addr %s614, 64
          %s616 = scalar_lea.vmem [#allocation5], %s615
          %s617 = smul.u32 16, %s36
          %s619 = ssub.s32 1024, 1024
          %620 = vsyncadd %s613, %s619
          %s621 = smul.addr %s617, 64
          %s622 = scalar_lea.hbm %s1, %s621
          %s623 = sshll.u32 %s616, 4
          %s624 = int_to_ptr.vmem [resolvable:$true] %s623
          %629 = dma.hbm_to_vmem [thread:$0]  %s622, 1024, %s624, %s613, 64, 64, 4
        $region88: #{tpu_custom_call.1} parent=79 // pred_fallthru
          _
      $region80: #{tpu_custom_call.1} parent=5 // pred_fallthru
        _
      %p630 = scmp.le.s32.totalorder 1, %s36
      %p631 = scmp.lt.s32.totalorder %s36, 3
      %p632 = pnand %p630, %p631
      %p633 = pneg %p632
      // Predicated region
      $region89: #{tpu_custom_call.1} parent=5 // pred_check
        _
      $region90: #{tpu_custom_call.1} parent=5 // pred_check_branch
        %635 = sbr.rel (%p632) target = $region92
      $region91: #{tpu_custom_call.1} parent=5 // pred_region
        %s636 = ssub.s32 %s36, 1
        %s637 = sand.u32 %s49, 1
        %s638 = scalar_lea.sflag [#allocation3], %s637
        %s639 = sand.u32 %s49, 1
        %s640 = smul.addr %s639, 256
        %s641 = scalar_lea.vmem [#allocation2], %s640
        // Predicated region
        $region93: #{tpu_custom_call.1} parent=91 // pred_check
          %p642 = pneg %p62
        $region94: #{tpu_custom_call.1} parent=91 // pred_check_branch
          %644 = sbr.rel (%p642) target = $region96
        $region95: #{tpu_custom_call.1} parent=91 // pred_region
          %645 = dma.done %s638, 4096
        $region96: #{tpu_custom_call.1} parent=91 // pred_fallthru
          _
        %s646 = sand.u32 %s41, 1
        %s647 = scalar_lea.sflag [#allocation6], %s646
        %s648 = sand.u32 %s75, 1
        %s649 = smul.addr %s648, 64
        %s650 = scalar_lea.vmem [#allocation5], %s649
        // Predicated region
        $region97: #{tpu_custom_call.1} parent=91 // pred_check
          %p651 = pneg %p88
        $region98: #{tpu_custom_call.1} parent=91 // pred_check_branch
          %653 = sbr.rel (%p651) target = $region100
        $region99: #{tpu_custom_call.1} parent=91 // pred_region
          %654 = dma.done %s647, 1024
        $region100: #{tpu_custom_call.1} parent=91 // pred_fallthru
          _
        // Predicated region
        $region101: #{tpu_custom_call.1} parent=91 // pred_check
          %p655 = pneg %p109
        $region102: #{tpu_custom_call.1} parent=91 // pred_check_branch
          %657 = sbr.rel (%p655) target = $region104
        $region103: #{tpu_custom_call.1} parent=91 // pred_region
          %658 = dma.done [#allocation6], 4096
        $region104: #{tpu_custom_call.1} parent=91 // pred_fallthru
          _
        // Predicated region
        $region105: #{tpu_custom_call.1} parent=91 // pred_check
          %p659 = pneg %p193
        $region106: #{tpu_custom_call.1} parent=91 // pred_check_branch
          %661 = sbr.rel (%p659) target = $region108
        $region107: #{tpu_custom_call.1} parent=91 // pred_region
          %662 = dma.done [#allocation9], 4096
        $region108: #{tpu_custom_call.1} parent=91 // pred_fallthru
          _
        // Predicated region
        $region109: #{tpu_custom_call.1} parent=91 // pred_check
          %p663 = pneg %p235
        $region110: #{tpu_custom_call.1} parent=91 // pred_check_branch
          %665 = sbr.rel (%p663) target = $region112
        $region111: #{tpu_custom_call.1} parent=91 // pred_region
          %666 = dma.done [#allocation9], 4096
        $region112: #{tpu_custom_call.1} parent=91 // pred_fallthru
          _
        // Predicated region
        $region113: #{tpu_custom_call.1} parent=91 // pred_check
          %p667 = pneg %p277
        $region114: #{tpu_custom_call.1} parent=91 // pred_check_branch
          %669 = sbr.rel (%p667) target = $region116
        $region115: #{tpu_custom_call.1} parent=91 // pred_region
          %670 = dma.done [#allocation12], 2048
        $region116: #{tpu_custom_call.1} parent=91 // pred_fallthru
          _
        // Predicated region
        $region117: #{tpu_custom_call.1} parent=91 // pred_check
          %p671 = pneg %p319
        $region118: #{tpu_custom_call.1} parent=91 // pred_check_branch
          %673 = sbr.rel (%p671) target = $region120
        $region119: #{tpu_custom_call.1} parent=91 // pred_region
          %674 = dma.done [#allocation12], 4096
        $region120: #{tpu_custom_call.1} parent=91 // pred_fallthru
          _
        // Predicated region
        $region121: #{tpu_custom_call.1} parent=91 // pred_check
          %p675 = pneg %p361
        $region122: #{tpu_custom_call.1} parent=91 // pred_check_branch
          %677 = sbr.rel (%p675) target = $region124
        $region123: #{tpu_custom_call.1} parent=91 // pred_region
          %678 = dma.done [#allocation15], 4096
        $region124: #{tpu_custom_call.1} parent=91 // pred_fallthru
          _
        // Predicated region
        $region125: #{tpu_custom_call.1} parent=91 // pred_check
          %p679 = pneg %p403
        $region126: #{tpu_custom_call.1} parent=91 // pred_check_branch
          %681 = sbr.rel (%p679) target = $region128
        $region127: #{tpu_custom_call.1} parent=91 // pred_region
          %682 = dma.done [#allocation15], 2048
        $region128: #{tpu_custom_call.1} parent=91 // pred_fallthru
          _
        %s683 = sand.u32 %s49, 1
        %s684 = scalar_lea.sflag [#allocation3], %s683
        %s685 = sand.u32 %s49, 1
        %s686 = smul.addr %s685, 256
        %s687 = scalar_lea.vmem [#allocation2], %s686
        %p688 = pneg %p62
        %p689 = pneg %p59
        %s690 = sand.u32 %s41, 1
        %s691 = scalar_lea.sflag [#allocation6], %s690
        %s692 = sand.u32 %s75, 1
        %s693 = smul.addr %s692, 64
        %s694 = scalar_lea.vmem [#allocation5], %s693
        %p695 = pneg %p88
        %p696 = pneg %p85
        %p697 = pneg %p109
        %p698 = pneg %p106
        %p699 = pneg %p130
        %p700 = pneg %p127
        %p701 = pneg %p151
        %p702 = pneg %p148
        %p703 = pneg %p172
        %p704 = pneg %p169
        %p705 = pneg %p193
        %p706 = pneg %p190
        %p707 = pneg %p214
        %p708 = pneg %p211
        %p709 = pneg %p235
        %p710 = pneg %p232
        %p711 = pneg %p256
        %p712 = pneg %p253
        %p713 = pneg %p277
        %p714 = pneg %p274
        %p715 = pneg %p298
        %p716 = pneg %p295
        %p717 = pneg %p319
        %p718 = pneg %p316
        %p719 = pneg %p340
        %p720 = pneg %p337
        %p721 = pneg %p361
        %p722 = pneg %p358
        %p723 = pneg %p382
        %p724 = pneg %p379
        %p725 = pneg %p403
        %p726 = pneg %p400
        %p727 = pneg %p424
        %p728 = pneg %p421
        %p729 = pneg %p450
        %p730 = pneg %p447
        %s731 = sand.u32 %s437, 1
        %s732 = scalar_lea.sflag [#allocation4], %s731
        %s733 = sand.u32 %s437, 1
        %s734 = smul.addr %s733, 256
        %s735 = scalar_lea.vmem [#allocation17], %s734
        %s736 = smul.u32 16, %s41
        %s737 = smul.u32 16, %s41
        %s738 = smul.u32 16, %s41
        %v740 = vld [vmem:[%s641] sm:$0xff]
        %v741 = vld [vmem:[%s641 + $0x8] sm:$0xff]
        %v742 = vld [vmem:[%s641 + $0x10] sm:$0xff]
        %v743 = vld [vmem:[%s641 + $0x18] sm:$0xff]
        %v744 = vld [vmem:[%s641 + $0x20] sm:$0xff]
        %v745 = vld [vmem:[%s641 + $0x28] sm:$0xff]
        %v746 = vld [vmem:[%s641 + $0x30] sm:$0xff]
        %v747 = vld [vmem:[%s641 + $0x38] sm:$0xff]
        %v748 = vld [vmem:[%s641 + $0x40] sm:$0xff]
        %v749 = vld [vmem:[%s641 + $0x48] sm:$0xff]
        %v750 = vld [vmem:[%s641 + $0x50] sm:$0xff]
        %v751 = vld [vmem:[%s641 + $0x58] sm:$0xff]
        %v752 = vld [vmem:[%s641 + $0x60] sm:$0xff]
        %v753 = vld [vmem:[%s641 + $0x68] sm:$0xff]
        %v754 = vld [vmem:[%s641 + $0x70] sm:$0xff]
        %v755 = vld [vmem:[%s641 + $0x78] sm:$0xff]
        %v756 = vld [vmem:[%s641 + $0x80] sm:$0xff]
        %v757 = vld [vmem:[%s641 + $0x88] sm:$0xff]
        %v758 = vld [vmem:[%s641 + $0x90] sm:$0xff]
        %v759 = vld [vmem:[%s641 + $0x98] sm:$0xff]
        %v760 = vld [vmem:[%s641 + $0xa0] sm:$0xff]
        %v761 = vld [vmem:[%s641 + $0xa8] sm:$0xff]
        %v762 = vld [vmem:[%s641 + $0xb0] sm:$0xff]
        %v763 = vld [vmem:[%s641 + $0xb8] sm:$0xff]
        %v764 = vld [vmem:[%s641 + $0xc0] sm:$0xff]
        %v765 = vld [vmem:[%s641 + $0xc8] sm:$0xff]
        %v766 = vld [vmem:[%s641 + $0xd0] sm:$0xff]
        %v767 = vld [vmem:[%s641 + $0xd8] sm:$0xff]
        %v768 = vld [vmem:[%s641 + $0xe0] sm:$0xff]
        %v769 = vld [vmem:[%s641 + $0xe8] sm:$0xff]
        %v770 = vld [vmem:[%s641 + $0xf0] sm:$0xff]
        %v771 = vld [vmem:[%s641 + $0xf8] sm:$0xff]
        %v772 = vld [vmem:[#allocation7] sm:$0xf]
        %v773 = vld [vmem:[#allocation7 + $0x4] sm:$0xf]
        %v774 = vld [vmem:[#allocation7 + $0x8] sm:$0xf]
        %v775 = vld [vmem:[#allocation7 + $0xc] sm:$0xf]
        %v776 = vld [vmem:[#allocation7 + $0x10] sm:$0xf]
        %v777 = vld [vmem:[#allocation7 + $0x14] sm:$0xf]
        %v778 = vld [vmem:[#allocation7 + $0x18] sm:$0xf]
        %v779 = vld [vmem:[#allocation7 + $0x1c] sm:$0xf]
        %v780 = vld [vmem:[#allocation7 + $0x20] sm:$0xf]
        %v781 = vld [vmem:[#allocation7 + $0x24] sm:$0xf]
        %v782 = vld [vmem:[#allocation7 + $0x28] sm:$0xf]
        %v783 = vld [vmem:[#allocation7 + $0x2c] sm:$0xf]
        %v784 = vld [vmem:[#allocation7 + $0x30] sm:$0xf]
        %v785 = vld [vmem:[#allocation7 + $0x34] sm:$0xf]
        %v786 = vld [vmem:[#allocation7 + $0x38] sm:$0xf]
        %v787 = vld [vmem:[#allocation7 + $0x3c] sm:$0xf]
        %v788 = vld [vmem:[#allocation7 + $0x40] sm:$0xf]
        %v789 = vld [vmem:[#allocation7 + $0x44] sm:$0xf]
        %v790 = vld [vmem:[#allocation7 + $0x48] sm:$0xf]
        %v791 = vld [vmem:[#allocation7 + $0x4c] sm:$0xf]
        %v792 = vld [vmem:[#allocation7 + $0x50] sm:$0xf]
        %v793 = vld [vmem:[#allocation7 + $0x54] sm:$0xf]
        %v794 = vld [vmem:[#allocation7 + $0x58] sm:$0xf]
        %v795 = vld [vmem:[#allocation7 + $0x5c] sm:$0xf]
        %v796 = vld [vmem:[#allocation7 + $0x60] sm:$0xf]
        %v797 = vld [vmem:[#allocation7 + $0x64] sm:$0xf]
        %v798 = vld [vmem:[#allocation7 + $0x68] sm:$0xf]
        %v799 = vld [vmem:[#allocation7 + $0x6c] sm:$0xf]
        %v800 = vld [vmem:[#allocation7 + $0x70] sm:$0xf]
        %v801 = vld [vmem:[#allocation7 + $0x74] sm:$0xf]
        %v802 = vld [vmem:[#allocation7 + $0x78] sm:$0xf]
        %v803 = vld [vmem:[#allocation7 + $0x7c] sm:$0xf]
        %v804 = vld [vmem:[#allocation7 + $0x80] sm:$0xf]
        %v805 = vld [vmem:[#allocation7 + $0x84] sm:$0xf]
        %v806 = vld [vmem:[#allocation7 + $0x88] sm:$0xf]
        %v807 = vld [vmem:[#allocation7 + $0x8c] sm:$0xf]
        %v808 = vld [vmem:[#allocation7 + $0x90] sm:$0xf]
        %v809 = vld [vmem:[#allocation7 + $0x94] sm:$0xf]
        %v810 = vld [vmem:[#allocation7 + $0x98] sm:$0xf]
        %v811 = vld [vmem:[#allocation7 + $0x9c] sm:$0xf]
        %v812 = vld [vmem:[#allocation7 + $0xa0] sm:$0xf]
        %v813 = vld [vmem:[#allocation7 + $0xa4] sm:$0xf]
        %v814 = vld [vmem:[#allocation7 + $0xa8] sm:$0xf]
        %v815 = vld [vmem:[#allocation7 + $0xac] sm:$0xf]
        %v816 = vld [vmem:[#allocation7 + $0xb0] sm:$0xf]
        %v817 = vld [vmem:[#allocation7 + $0xb4] sm:$0xf]
        %v818 = vld [vmem:[#allocation7 + $0xb8] sm:$0xf]
        %v819 = vld [vmem:[#allocation7 + $0xbc] sm:$0xf]
        %v820 = vld [vmem:[#allocation7 + $0xc0] sm:$0xf]
        %v821 = vld [vmem:[#allocation7 + $0xc4] sm:$0xf]
        %v822 = vld [vmem:[#allocation7 + $0xc8] sm:$0xf]
        %v823 = vld [vmem:[#allocation7 + $0xcc] sm:$0xf]
        %v824 = vld [vmem:[#allocation7 + $0xd0] sm:$0xf]
        %v825 = vld [vmem:[#allocation7 + $0xd4] sm:$0xf]
        %v826 = vld [vmem:[#allocation7 + $0xd8] sm:$0xf]
        %v827 = vld [vmem:[#allocation7 + $0xdc] sm:$0xf]
        %v828 = vld [vmem:[#allocation7 + $0xe0] sm:$0xf]
        %v829 = vld [vmem:[#allocation7 + $0xe4] sm:$0xf]
        %v830 = vld [vmem:[#allocation7 + $0xe8] sm:$0xf]
        %v831 = vld [vmem:[#allocation7 + $0xec] sm:$0xf]
        %v832 = vld [vmem:[#allocation7 + $0xf0] sm:$0xf]
        %v833 = vld [vmem:[#allocation7 + $0xf4] sm:$0xf]
        %v834 = vld [vmem:[#allocation7 + $0xf8] sm:$0xf]
        %v835 = vld [vmem:[#allocation7 + $0xfc] sm:$0xf]
        %v836 = vld [vmem:[%s3] sm:$0x1]
        %v838 = vlaneseq
        %v839 = vshrl.u32 %v838, 7
        %v840 = vsub.s32 0, %v839
        %v841 = vrot.slane %v836, %v840
        %v875 = vunpack.c.l.b16 %v740
        %v876 = vunpack.c.h.b16 %v740
        %v877 = vunpack.c.l.b16 %v741
        %v878 = vunpack.c.h.b16 %v741
        %v879 = vunpack.c.l.b16 %v742
        %v880 = vunpack.c.h.b16 %v742
        %v881 = vunpack.c.l.b16 %v743
        %v882 = vunpack.c.h.b16 %v743
        %v883 = vunpack.c.l.b16 %v744
        %v884 = vunpack.c.h.b16 %v744
        %v885 = vunpack.c.l.b16 %v745
        %v886 = vunpack.c.h.b16 %v745
        %v887 = vunpack.c.l.b16 %v746
        %v888 = vunpack.c.h.b16 %v746
        %v889 = vunpack.c.l.b16 %v747
        %v890 = vunpack.c.h.b16 %v747
        %v891 = vunpack.c.l.b16 %v748
        %v892 = vunpack.c.h.b16 %v748
        %v893 = vunpack.c.l.b16 %v749
        %v894 = vunpack.c.h.b16 %v749
        %v895 = vunpack.c.l.b16 %v750
        %v896 = vunpack.c.h.b16 %v750
        %v897 = vunpack.c.l.b16 %v751
        %v898 = vunpack.c.h.b16 %v751
        %v899 = vunpack.c.l.b16 %v752
        %v900 = vunpack.c.h.b16 %v752
        %v901 = vunpack.c.l.b16 %v753
        %v902 = vunpack.c.h.b16 %v753
        %v903 = vunpack.c.l.b16 %v754
        %v904 = vunpack.c.h.b16 %v754
        %v905 = vunpack.c.l.b16 %v755
        %v906 = vunpack.c.h.b16 %v755
        %v907 = vunpack.c.l.b16 %v756
        %v908 = vunpack.c.h.b16 %v756
        %v909 = vunpack.c.l.b16 %v757
        %v910 = vunpack.c.h.b16 %v757
        %v911 = vunpack.c.l.b16 %v758
        %v912 = vunpack.c.h.b16 %v758
        %v913 = vunpack.c.l.b16 %v759
        %v914 = vunpack.c.h.b16 %v759
        %v915 = vunpack.c.l.b16 %v760
        %v916 = vunpack.c.h.b16 %v760
        %v917 = vunpack.c.l.b16 %v761
        %v918 = vunpack.c.h.b16 %v761
        %v919 = vunpack.c.l.b16 %v762
        %v920 = vunpack.c.h.b16 %v762
        %v921 = vunpack.c.l.b16 %v763
        %v922 = vunpack.c.h.b16 %v763
        %v923 = vunpack.c.l.b16 %v764
        %v924 = vunpack.c.h.b16 %v764
        %v925 = vunpack.c.l.b16 %v765
        %v926 = vunpack.c.h.b16 %v765
        %v927 = vunpack.c.l.b16 %v766
        %v928 = vunpack.c.h.b16 %v766
        %v929 = vunpack.c.l.b16 %v767
        %v930 = vunpack.c.h.b16 %v767
        %v931 = vunpack.c.l.b16 %v768
        %v932 = vunpack.c.h.b16 %v768
        %v933 = vunpack.c.l.b16 %v769
        %v934 = vunpack.c.h.b16 %v769
        %v935 = vunpack.c.l.b16 %v770
        %v936 = vunpack.c.h.b16 %v770
        %v937 = vunpack.c.l.b16 %v771
        %v938 = vunpack.c.h.b16 %v771
        %v939 = vpack.c.b16 %v879, %v875
        %v940 = vpack.c.b16 %v880, %v876
        %v941 = vpack.c.b16 %v881, %v877
        %v942 = vpack.c.b16 %v882, %v878
        %v943 = vpack.c.b16 %v887, %v883
        %v944 = vpack.c.b16 %v888, %v884
        %v945 = vpack.c.b16 %v889, %v885
        %v946 = vpack.c.b16 %v890, %v886
        %v947 = vpack.c.b16 %v895, %v891
        %v948 = vpack.c.b16 %v896, %v892
        %v949 = vpack.c.b16 %v897, %v893
        %v950 = vpack.c.b16 %v898, %v894
        %v951 = vpack.c.b16 %v903, %v899
        %v952 = vpack.c.b16 %v904, %v900
        %v953 = vpack.c.b16 %v905, %v901
        %v954 = vpack.c.b16 %v906, %v902
        %v955 = vpack.c.b16 %v911, %v907
        %v956 = vpack.c.b16 %v912, %v908
        %v957 = vpack.c.b16 %v913, %v909
        %v958 = vpack.c.b16 %v914, %v910
        %v959 = vpack.c.b16 %v919, %v915
        %v960 = vpack.c.b16 %v920, %v916
        %v961 = vpack.c.b16 %v921, %v917
        %v962 = vpack.c.b16 %v922, %v918
        %v963 = vpack.c.b16 %v927, %v923
        %v964 = vpack.c.b16 %v928, %v924
        %v965 = vpack.c.b16 %v929, %v925
        %v966 = vpack.c.b16 %v930, %v926
        %v967 = vpack.c.b16 %v935, %v931
        %v968 = vpack.c.b16 %v936, %v932
        %v969 = vpack.c.b16 %v937, %v933
        %v970 = vpack.c.b16 %v938, %v934
        %v1067 = vunpack.c.l.b16 %v772
        %v1068 = vunpack.c.l.b16 %v773
        %v1069 = vunpack.c.l.b16 %v774
        %v1070 = vunpack.c.l.b16 %v775
        %v1071 = vunpack.c.l.b16 %v776
        %v1072 = vunpack.c.l.b16 %v777
        %v1073 = vunpack.c.l.b16 %v778
        %v1074 = vunpack.c.l.b16 %v779
        %v1075 = vunpack.c.l.b16 %v780
        %v1076 = vunpack.c.l.b16 %v781
        %v1077 = vunpack.c.l.b16 %v782
        %v1078 = vunpack.c.l.b16 %v783
        %v1079 = vunpack.c.l.b16 %v784
        %v1080 = vunpack.c.l.b16 %v785
        %v1081 = vunpack.c.l.b16 %v786
        %v1082 = vunpack.c.l.b16 %v787
        %v1083 = vunpack.c.l.b16 %v788
        %v1084 = vunpack.c.l.b16 %v789
        %v1085 = vunpack.c.l.b16 %v790
        %v1086 = vunpack.c.l.b16 %v791
        %v1087 = vunpack.c.l.b16 %v792
        %v1088 = vunpack.c.l.b16 %v793
        %v1089 = vunpack.c.l.b16 %v794
        %v1090 = vunpack.c.l.b16 %v795
        %v1091 = vunpack.c.l.b16 %v796
        %v1092 = vunpack.c.l.b16 %v797
        %v1093 = vunpack.c.l.b16 %v798
        %v1094 = vunpack.c.l.b16 %v799
        %v1095 = vunpack.c.l.b16 %v800
        %v1096 = vunpack.c.l.b16 %v801
        %v1097 = vunpack.c.l.b16 %v802
        %v1098 = vunpack.c.l.b16 %v803
        %v1099 = vunpack.c.l.b16 %v804
        %v1100 = vunpack.c.l.b16 %v805
        %v1101 = vunpack.c.l.b16 %v806
        %v1102 = vunpack.c.l.b16 %v807
        %v1103 = vunpack.c.l.b16 %v808
        %v1104 = vunpack.c.l.b16 %v809
        %v1105 = vunpack.c.l.b16 %v810
        %v1106 = vunpack.c.l.b16 %v811
        %v1107 = vunpack.c.l.b16 %v812
        %v1108 = vunpack.c.l.b16 %v813
        %v1109 = vunpack.c.l.b16 %v814
        %v1110 = vunpack.c.l.b16 %v815
        %v1111 = vunpack.c.l.b16 %v816
        %v1112 = vunpack.c.l.b16 %v817
        %v1113 = vunpack.c.l.b16 %v818
        %v1114 = vunpack.c.l.b16 %v819
        %v1115 = vunpack.c.l.b16 %v820
        %v1116 = vunpack.c.l.b16 %v821
        %v1117 = vunpack.c.l.b16 %v822
        %v1118 = vunpack.c.l.b16 %v823
        %v1119 = vunpack.c.l.b16 %v824
        %v1120 = vunpack.c.l.b16 %v825
        %v1121 = vunpack.c.l.b16 %v826
        %v1122 = vunpack.c.l.b16 %v827
        %v1123 = vunpack.c.l.b16 %v828
        %v1124 = vunpack.c.l.b16 %v829
        %v1125 = vunpack.c.l.b16 %v830
        %v1126 = vunpack.c.l.b16 %v831
        %v1127 = vunpack.c.l.b16 %v832
        %v1128 = vunpack.c.l.b16 %v833
        %v1129 = vunpack.c.l.b16 %v834
        %v1130 = vunpack.c.l.b16 %v835
        %v1131 = vpack.c.b16 %v1068, %v1067
        %v1132 = vpack.c.b16 %v1070, %v1069
        %v1133 = vpack.c.b16 %v1072, %v1071
        %v1134 = vpack.c.b16 %v1074, %v1073
        %v1135 = vpack.c.b16 %v1076, %v1075
        %v1136 = vpack.c.b16 %v1078, %v1077
        %v1137 = vpack.c.b16 %v1080, %v1079
        %v1138 = vpack.c.b16 %v1082, %v1081
        %v1139 = vpack.c.b16 %v1084, %v1083
        %v1140 = vpack.c.b16 %v1086, %v1085
        %v1141 = vpack.c.b16 %v1088, %v1087
        %v1142 = vpack.c.b16 %v1090, %v1089
        %v1143 = vpack.c.b16 %v1092, %v1091
        %v1144 = vpack.c.b16 %v1094, %v1093
        %v1145 = vpack.c.b16 %v1096, %v1095
        %v1146 = vpack.c.b16 %v1098, %v1097
        %v1147 = vpack.c.b16 %v1100, %v1099
        %v1148 = vpack.c.b16 %v1102, %v1101
        %v1149 = vpack.c.b16 %v1104, %v1103
        %v1150 = vpack.c.b16 %v1106, %v1105
        %v1151 = vpack.c.b16 %v1108, %v1107
        %v1152 = vpack.c.b16 %v1110, %v1109
        %v1153 = vpack.c.b16 %v1112, %v1111
        %v1154 = vpack.c.b16 %v1114, %v1113
        %v1155 = vpack.c.b16 %v1116, %v1115
        %v1156 = vpack.c.b16 %v1118, %v1117
        %v1157 = vpack.c.b16 %v1120, %v1119
        %v1158 = vpack.c.b16 %v1122, %v1121
        %v1159 = vpack.c.b16 %v1124, %v1123
        %v1160 = vpack.c.b16 %v1126, %v1125
        %v1161 = vpack.c.b16 %v1128, %v1127
        %v1162 = vpack.c.b16 %v1130, %v1129
        %1195 = vmatprep.subr.bf16.mxu0 0
        %1196 = vmatpush1.bf16.msra.mxu0 %v1131
        %1197 = vmatprep.subr.bf16.mxu0 0
        %1198 = vmatpush1.bf16.msra.mxu0 %v1132
        %1199 = vmatprep.subr.bf16.mxu0 0
        %1200 = vmatpush1.bf16.msra.mxu0 %v1133
        %1201 = vmatprep.subr.bf16.mxu0 0
        %1202 = vmatpush1.bf16.msra.mxu0 %v1134
        %1203 = vmatprep.subr.bf16.mxu0 0
        %1204 = vmatpush1.bf16.msra.mxu0 %v1135
        %1205 = vmatprep.subr.bf16.mxu0 0
        %1206 = vmatpush1.bf16.msra.mxu0 %v1136
        %1207 = vmatprep.subr.bf16.mxu0 0
        %1208 = vmatpush1.bf16.msra.mxu0 %v1137
        %1209 = vmatprep.subr.bf16.mxu0 0
        %1210 = vmatpush1.bf16.msra.mxu0 %v1138
        %1211 = vmatprep.subr.bf16.mxu0 0
        %1212 = vmatpush1.bf16.msra.mxu0 %v1139
        %1213 = vmatprep.subr.bf16.mxu0 0
        %1214 = vmatpush1.bf16.msra.mxu0 %v1140
        %1215 = vmatprep.subr.bf16.mxu0 0
        %1216 = vmatpush1.bf16.msra.mxu0 %v1141
        %1217 = vmatprep.subr.bf16.mxu0 0
        %1218 = vmatpush1.bf16.msra.mxu0 %v1142
        %1219 = vmatprep.subr.bf16.mxu0 0
        %1220 = vmatpush1.bf16.msra.mxu0 %v1143
        %1221 = vmatprep.subr.bf16.mxu0 0
        %1222 = vmatpush1.bf16.msra.mxu0 %v1144
        %1223 = vmatprep.subr.bf16.mxu0 0
        %1224 = vmatpush1.bf16.msra.mxu0 %v1145
        %1225 = vmatprep.subr.bf16.mxu0 0
        %1226 = vmatpush1.bf16.msra.mxu0 %v1146
        %1227 = vmatprep.mubr.bf16.mxu0 %v940
        %1228 = vmatmul.mubr.bf16.gmra.mrb[0].mxu0 %v939
        %v1229 = vpop.f32.mrb[0].mxu0
        %v1230 = vadd.f32 %v841, %v1229
        %v1231 = vpop.f32.mrb[0].mxu0
        %v1232 = vpop.f32.mrb[0].mxu0
        %v1233 = vadd.f32 %v841, %v1232
        %v1234 = vpop.f32.mrb[0].mxu0
        %1235 = vmatprep.mubr.bf16.mxu0 %v944
        %1236 = vmatmul.mubr.bf16.gmra.mrb[0].mxu0 %v943
        %v1237 = vpop.f32.mrb[0].mxu0
        %v1238 = vadd.f32 %v841, %v1237
        %v1239 = vpop.f32.mrb[0].mxu0
        %v1240 = vpop.f32.mrb[0].mxu0
        %v1241 = vadd.f32 %v841, %v1240
        %v1242 = vpop.f32.mrb[0].mxu0
        %1243 = vmatprep.mubr.bf16.mxu0 %v948
        %1244 = vmatmul.mubr.bf16.gmra.mrb[0].mxu0 %v947
        %v1245 = vpop.f32.mrb[0].mxu0
        %v1246 = vadd.f32 %v841, %v1245
        %v1247 = vpop.f32.mrb[0].mxu0
        %v1248 = vpop.f32.mrb[0].mxu0
        %v1249 = vadd.f32 %v841, %v1248
        %v1250 = vpop.f32.mrb[0].mxu0
        %1251 = vmatprep.mubr.bf16.mxu0 %v952
        %1252 = vmatmul.mubr.bf16.gmra.mrb[0].mxu0 %v951
        %v1253 = vpop.f32.mrb[0].mxu0
        %v1254 = vadd.f32 %v841, %v1253
        %v1255 = vpop.f32.mrb[0].mxu0
        %v1256 = vpop.f32.mrb[0].mxu0
        %v1257 = vadd.f32 %v841, %v1256
        %v1258 = vpop.f32.mrb[0].mxu0
        %1259 = vmatprep.mubr.bf16.mxu0 %v956
        %1260 = vmatmul.mubr.bf16.gmra.mrb[0].mxu0 %v955
        %v1261 = vpop.f32.mrb[0].mxu0
        %v1262 = vadd.f32 %v841, %v1261
        %v1263 = vpop.f32.mrb[0].mxu0
        %v1264 = vpop.f32.mrb[0].mxu0
        %v1265 = vadd.f32 %v841, %v1264
        %v1266 = vpop.f32.mrb[0].mxu0
        %1267 = vmatprep.mubr.bf16.mxu0 %v960
        %1268 = vmatmul.mubr.bf16.gmra.mrb[0].mxu0 %v959
        %v1269 = vpop.f32.mrb[0].mxu0
        %v1270 = vadd.f32 %v841, %v1269
        %v1271 = vpop.f32.mrb[0].mxu0
        %v1272 = vpop.f32.mrb[0].mxu0
        %v1273 = vadd.f32 %v841, %v1272
        %v1274 = vpop.f32.mrb[0].mxu0
        %1275 = vmatprep.mubr.bf16.mxu0 %v964
        %1276 = vmatmul.mubr.bf16.gmra.mrb[0].mxu0 %v963
        %v1277 = vpop.f32.mrb[0].mxu0
        %v1278 = vadd.f32 %v841, %v1277
        %v1279 = vpop.f32.mrb[0].mxu0
        %v1280 = vpop.f32.mrb[0].mxu0
        %v1281 = vadd.f32 %v841, %v1280
        %v1282 = vpop.f32.mrb[0].mxu0
        %1283 = vmatprep.mubr.bf16.mxu0 %v968
        %1284 = vmatmul.mubr.bf16.gmra.mrb[0].mxu0 %v967
        %v1285 = vpop.f32.mrb[0].mxu0
        %v1286 = vadd.f32 %v841, %v1285
        %v1287 = vpop.f32.mrb[0].mxu0
        %v1288 = vpop.f32.mrb[0].mxu0
        %v1289 = vadd.f32 %v841, %v1288
        %v1290 = vpop.f32.mrb[0].mxu0
        %1291 = vdwg.mxu0
        %1292 = vmatprep.subr.bf16.mxu0 0
        %1293 = vmatpush1.bf16.msra.mxu0 %v1147
        %1294 = vmatprep.subr.bf16.mxu0 0
        %1295 = vmatpush1.bf16.msra.mxu0 %v1148
        %1296 = vmatprep.subr.bf16.mxu0 0
        %1297 = vmatpush1.bf16.msra.mxu0 %v1149
        %1298 = vmatprep.subr.bf16.mxu0 0
        %1299 = vmatpush1.bf16.msra.mxu0 %v1150
        %1300 = vmatprep.subr.bf16.mxu0 0
        %1301 = vmatpush1.bf16.msra.mxu0 %v1151
        %1302 = vmatprep.subr.bf16.mxu0 0
        %1303 = vmatpush1.bf16.msra.mxu0 %v1152
        %1304 = vmatprep.subr.bf16.mxu0 0
        %1305 = vmatpush1.bf16.msra.mxu0 %v1153
        %1306 = vmatprep.subr.bf16.mxu0 0
        %1307 = vmatpush1.bf16.msra.mxu0 %v1154
        %1308 = vmatprep.subr.bf16.mxu0 0
        %1309 = vmatpush1.bf16.msra.mxu0 %v1155
        %1310 = vmatprep.subr.bf16.mxu0 0
        %1311 = vmatpush1.bf16.msra.mxu0 %v1156
        %1312 = vmatprep.subr.bf16.mxu0 0
        %1313 = vmatpush1.bf16.msra.mxu0 %v1157
        %1314 = vmatprep.subr.bf16.mxu0 0
        %1315 = vmatpush1.bf16.msra.mxu0 %v1158
        %1316 = vmatprep.subr.bf16.mxu0 0
        %1317 = vmatpush1.bf16.msra.mxu0 %v1159
        %1318 = vmatprep.subr.bf16.mxu0 0
        %1319 = vmatpush1.bf16.msra.mxu0 %v1160
        %1320 = vmatprep.subr.bf16.mxu0 0
        %1321 = vmatpush1.bf16.msra.mxu0 %v1161
        %1322 = vmatprep.subr.bf16.mxu0 0
        %1323 = vmatpush1.bf16.msra.mxu0 %v1162
        %1324 = vmatprep.mubr.bf16.mxu0 %v942
        %1325 = vmatmul.mubr.bf16.gmra.mrb[0].mxu0 %v941
        %v1326 = vpop.f32.mrb[0].mxu0
        %v1327 = vadd.f32 %v1230, %v1326
        %v1328 = vpop.f32.mrb[0].mxu0
        %v1329 = vpop.f32.mrb[0].mxu0
        %v1330 = vadd.f32 %v1233, %v1329
        %v1331 = vpop.f32.mrb[0].mxu0
        %1332 = vmatprep.mubr.bf16.mxu0 %v946
        %1333 = vmatmul.mubr.bf16.gmra.mrb[0].mxu0 %v945
        %v1334 = vpop.f32.mrb[0].mxu0
        %v1335 = vadd.f32 %v1238, %v1334
        %v1336 = vpop.f32.mrb[0].mxu0
        %v1337 = vpop.f32.mrb[0].mxu0
        %v1338 = vadd.f32 %v1241, %v1337
        %v1339 = vpop.f32.mrb[0].mxu0
        %1340 = vmatprep.mubr.bf16.mxu0 %v950
        %1341 = vmatmul.mubr.bf16.gmra.mrb[0].mxu0 %v949
        %v1342 = vpop.f32.mrb[0].mxu0
        %v1343 = vadd.f32 %v1246, %v1342
        %v1344 = vpop.f32.mrb[0].mxu0
        %v1345 = vpop.f32.mrb[0].mxu0
        %v1346 = vadd.f32 %v1249, %v1345
        %v1347 = vpop.f32.mrb[0].mxu0
        %1348 = vmatprep.mubr.bf16.mxu0 %v954
        %1349 = vmatmul.mubr.bf16.gmra.mrb[0].mxu0 %v953
        %v1350 = vpop.f32.mrb[0].mxu0
        %v1351 = vadd.f32 %v1254, %v1350
        %v1352 = vpop.f32.mrb[0].mxu0
        %v1353 = vpop.f32.mrb[0].mxu0
        %v1354 = vadd.f32 %v1257, %v1353
        %v1355 = vpop.f32.mrb[0].mxu0
        %1356 = vmatprep.mubr.bf16.mxu0 %v958
        %1357 = vmatmul.mubr.bf16.gmra.mrb[0].mxu0 %v957
        %v1358 = vpop.f32.mrb[0].mxu0
        %v1359 = vadd.f32 %v1262, %v1358
        %v1360 = vpop.f32.mrb[0].mxu0
        %v1361 = vpop.f32.mrb[0].mxu0
        %v1362 = vadd.f32 %v1265, %v1361
        %v1363 = vpop.f32.mrb[0].mxu0
        %1364 = vmatprep.mubr.bf16.mxu0 %v962
        %1365 = vmatmul.mubr.bf16.gmra.mrb[0].mxu0 %v961
        %v1366 = vpop.f32.mrb[0].mxu0
        %v1367 = vadd.f32 %v1270, %v1366
        %v1368 = vpop.f32.mrb[0].mxu0
        %v1369 = vpop.f32.mrb[0].mxu0
        %v1370 = vadd.f32 %v1273, %v1369
        %v1371 = vpop.f32.mrb[0].mxu0
        %1372 = vmatprep.mubr.bf16.mxu0 %v966
        %1373 = vmatmul.mubr.bf16.gmra.mrb[0].mxu0 %v965
        %v1374 = vpop.f32.mrb[0].mxu0
        %v1375 = vadd.f32 %v1278, %v1374
        %v1376 = vpop.f32.mrb[0].mxu0
        %v1377 = vpop.f32.mrb[0].mxu0
        %v1378 = vadd.f32 %v1281, %v1377
        %v1379 = vpop.f32.mrb[0].mxu0
        %1380 = vmatprep.mubr.bf16.mxu0 %v970
        %1381 = vmatmul.mubr.bf16.gmra.mrb[0].mxu0 %v969
        %v1382 = vpop.f32.mrb[0].mxu0
        %v1383 = vadd.f32 %v1286, %v1382
        %v1384 = vpop.f32.mrb[0].mxu0
        %v1385 = vpop.f32.mrb[0].mxu0
        %v1386 = vadd.f32 %v1289, %v1385
        %v1387 = vpop.f32.mrb[0].mxu0
        %1388 = vdwg.mxu0
        %v1389 = vlaneseq
        %v1390 = vand.u32 %v1389, 127
        %vm1391 = vcmp.lt.s32.totalorder %v1390, 50
        %v1392 = vsel %vm1391, 1, 0
        %v1393 = vcvt.s32.f32 %v1392
        %1394 = vadd.xlane.f32.xlu0 %v1327
        %v1395 = vpop.xlane.xlu0 %1394
        %1396 = vadd.xlane.f32.xlu0 %v1330
        %v1397 = vpop.xlane.xlu0 %1396
        %1398 = vadd.xlane.f32.xlu0 %v1335
        %v1399 = vpop.xlane.xlu0 %1398
        %1400 = vadd.xlane.f32.xlu0 %v1338
        %v1401 = vpop.xlane.xlu0 %1400
        %1402 = vadd.xlane.f32.xlu0 %v1343
        %v1403 = vpop.xlane.xlu0 %1402
        %1404 = vadd.xlane.f32.xlu0 %v1346
        %v1405 = vpop.xlane.xlu0 %1404
        %1406 = vadd.xlane.f32.xlu0 %v1351
        %v1407 = vpop.xlane.xlu0 %1406
        %1408 = vadd.xlane.f32.xlu0 %v1354
        %v1409 = vpop.xlane.xlu0 %1408
        %1410 = vadd.xlane.f32.xlu0 %v1359
        %v1411 = vpop.xlane.xlu0 %1410
        %1412 = vadd.xlane.f32.xlu0 %v1362
        %v1413 = vpop.xlane.xlu0 %1412
        %1414 = vadd.xlane.f32.xlu0 %v1367
        %v1415 = vpop.xlane.xlu0 %1414
        %1416 = vadd.xlane.f32.xlu0 %v1370
        %v1417 = vpop.xlane.xlu0 %1416
        %1418 = vadd.xlane.f32.xlu0 %v1375
        %v1419 = vpop.xlane.xlu0 %1418
        %1420 = vadd.xlane.f32.xlu0 %v1378
        %v1421 = vpop.xlane.xlu0 %1420
        %1422 = vadd.xlane.f32.xlu0 %v1383
        %v1423 = vpop.xlane.xlu0 %1422
        %1424 = vadd.xlane.f32.xlu0 %v1386
        %v1425 = vpop.xlane.xlu0 %1424
        %v1426 = vmul.f32 %v1395, 0.02
        %v1427 = vmul.f32 %v1397, 0.02
        %v1428 = vmul.f32 %v1399, 0.02
        %v1429 = vmul.f32 %v1401, 0.02
        %v1430 = vmul.f32 %v1403, 0.02
        %v1431 = vmul.f32 %v1405, 0.02
        %v1432 = vmul.f32 %v1407, 0.02
        %v1433 = vmul.f32 %v1409, 0.02
        %v1434 = vmul.f32 %v1411, 0.02
        %v1435 = vmul.f32 %v1413, 0.02
        %v1436 = vmul.f32 %v1415, 0.02
        %v1437 = vmul.f32 %v1417, 0.02
        %v1438 = vmul.f32 %v1419, 0.02
        %v1439 = vmul.f32 %v1421, 0.02
        %v1440 = vmul.f32 %v1423, 0.02
        %v1441 = vmul.f32 %v1425, 0.02
        %v1442 = vsub.f32 %v1327, %v1426
        %v1443 = vsub.f32 %v1330, %v1427
        %v1444 = vsub.f32 %v1335, %v1428
        %v1445 = vsub.f32 %v1338, %v1429
        %v1446 = vsub.f32 %v1343, %v1430
        %v1447 = vsub.f32 %v1346, %v1431
        %v1448 = vsub.f32 %v1351, %v1432
        %v1449 = vsub.f32 %v1354, %v1433
        %v1450 = vsub.f32 %v1359, %v1434
        %v1451 = vsub.f32 %v1362, %v1435
        %v1452 = vsub.f32 %v1367, %v1436
        %v1453 = vsub.f32 %v1370, %v1437
        %v1454 = vsub.f32 %v1375, %v1438
        %v1455 = vsub.f32 %v1378, %v1439
        %v1456 = vsub.f32 %v1383, %v1440
        %v1457 = vsub.f32 %v1386, %v1441
        %v1458 = vmul.f32 %v1442, %v1442
        %v1459 = vmul.f32 %v1443, %v1443
        %v1460 = vmul.f32 %v1444, %v1444
        %v1461 = vmul.f32 %v1445, %v1445
        %v1462 = vmul.f32 %v1446, %v1446
        %v1463 = vmul.f32 %v1447, %v1447
        %v1464 = vmul.f32 %v1448, %v1448
        %v1465 = vmul.f32 %v1449, %v1449
        %v1466 = vmul.f32 %v1450, %v1450
        %v1467 = vmul.f32 %v1451, %v1451
        %v1468 = vmul.f32 %v1452, %v1452
        %v1469 = vmul.f32 %v1453, %v1453
        %v1470 = vmul.f32 %v1454, %v1454
        %v1471 = vmul.f32 %v1455, %v1455
        %v1472 = vmul.f32 %v1456, %v1456
        %v1473 = vmul.f32 %v1457, %v1457
        %v1474 = vmul.f32 %v1458, %v1393
        %v1475 = vmul.f32 %v1459, %v1393
        %v1476 = vmul.f32 %v1460, %v1393
        %v1477 = vmul.f32 %v1461, %v1393
        %v1478 = vmul.f32 %v1462, %v1393
        %v1479 = vmul.f32 %v1463, %v1393
        %v1480 = vmul.f32 %v1464, %v1393
        %v1481 = vmul.f32 %v1465, %v1393
        %v1482 = vmul.f32 %v1466, %v1393
        %v1483 = vmul.f32 %v1467, %v1393
        %v1484 = vmul.f32 %v1468, %v1393
        %v1485 = vmul.f32 %v1469, %v1393
        %v1486 = vmul.f32 %v1470, %v1393
        %v1487 = vmul.f32 %v1471, %v1393
        %v1488 = vmul.f32 %v1472, %v1393
        %v1489 = vmul.f32 %v1473, %v1393
        %1490 = vadd.xlane.f32.xlu0 %v1474
        %v1491 = vpop.xlane.xlu0 %1490
        %1492 = vadd.xlane.f32.xlu0 %v1475
        %v1493 = vpop.xlane.xlu0 %1492
        %1494 = vadd.xlane.f32.xlu0 %v1476
        %v1495 = vpop.xlane.xlu0 %1494
        %1496 = vadd.xlane.f32.xlu0 %v1477
        %v1497 = vpop.xlane.xlu0 %1496
        %1498 = vadd.xlane.f32.xlu0 %v1478
        %v1499 = vpop.xlane.xlu0 %1498
        %1500 = vadd.xlane.f32.xlu0 %v1479
        %v1501 = vpop.xlane.xlu0 %1500
        %1502 = vadd.xlane.f32.xlu0 %v1480
        %v1503 = vpop.xlane.xlu0 %1502
        %1504 = vadd.xlane.f32.xlu0 %v1481
        %v1505 = vpop.xlane.xlu0 %1504
        %1506 = vadd.xlane.f32.xlu0 %v1482
        %v1507 = vpop.xlane.xlu0 %1506
        %1508 = vadd.xlane.f32.xlu0 %v1483
        %v1509 = vpop.xlane.xlu0 %1508
        %1510 = vadd.xlane.f32.xlu0 %v1484
        %v1511 = vpop.xlane.xlu0 %1510
        %1512 = vadd.xlane.f32.xlu0 %v1485
        %v1513 = vpop.xlane.xlu0 %1512
        %1514 = vadd.xlane.f32.xlu0 %v1486
        %v1515 = vpop.xlane.xlu0 %1514
        %1516 = vadd.xlane.f32.xlu0 %v1487
        %v1517 = vpop.xlane.xlu0 %1516
        %1518 = vadd.xlane.f32.xlu0 %v1488
        %v1519 = vpop.xlane.xlu0 %1518
        %1520 = vadd.xlane.f32.xlu0 %v1489
        %v1521 = vpop.xlane.xlu0 %1520
        %v1522 = vmul.f32 %v1491, 0.02
        %v1523 = vmul.f32 %v1493, 0.02
        %v1524 = vmul.f32 %v1495, 0.02
        %v1525 = vmul.f32 %v1497, 0.02
        %v1526 = vmul.f32 %v1499, 0.02
        %v1527 = vmul.f32 %v1501, 0.02
        %v1528 = vmul.f32 %v1503, 0.02
        %v1529 = vmul.f32 %v1505, 0.02
        %v1530 = vmul.f32 %v1507, 0.02
        %v1531 = vmul.f32 %v1509, 0.02
        %v1532 = vmul.f32 %v1511, 0.02
        %v1533 = vmul.f32 %v1513, 0.02
        %v1534 = vmul.f32 %v1515, 0.02
        %v1535 = vmul.f32 %v1517, 0.02
        %v1536 = vmul.f32 %v1519, 0.02
        %v1537 = vmul.f32 %v1521, 0.02
        %v1538 = vadd.f32 %v1522, 1e-05
        %v1539 = vadd.f32 %v1523, 1e-05
        %v1540 = vadd.f32 %v1524, 1e-05
        %v1541 = vadd.f32 %v1525, 1e-05
        %v1542 = vadd.f32 %v1526, 1e-05
        %v1543 = vadd.f32 %v1527, 1e-05
        %v1544 = vadd.f32 %v1528, 1e-05
        %v1545 = vadd.f32 %v1529, 1e-05
        %v1546 = vadd.f32 %v1530, 1e-05
        %v1547 = vadd.f32 %v1531, 1e-05
        %v1548 = vadd.f32 %v1532, 1e-05
        %v1549 = vadd.f32 %v1533, 1e-05
        %v1550 = vadd.f32 %v1534, 1e-05
        %v1551 = vadd.f32 %v1535, 1e-05
        %v1552 = vadd.f32 %v1536, 1e-05
        %v1553 = vadd.f32 %v1537, 1e-05
        %v1554 = vrsqrt.pop %v1538
        %v1555 = vrsqrt.pop %v1539
        %v1556 = vrsqrt.pop %v1540
        %v1557 = vrsqrt.pop %v1541
        %v1558 = vrsqrt.pop %v1542
        %v1559 = vrsqrt.pop %v1543
        %v1560 = vrsqrt.pop %v1544
        %v1561 = vrsqrt.pop %v1545
        %v1562 = vrsqrt.pop %v1546
        %v1563 = vrsqrt.pop %v1547
        %v1564 = vrsqrt.pop %v1548
        %v1565 = vrsqrt.pop %v1549
        %v1566 = vrsqrt.pop %v1550
        %v1567 = vrsqrt.pop %v1551
        %v1568 = vrsqrt.pop %v1552
        %v1569 = vrsqrt.pop %v1553
        %v1570 = vmul.f32 %v1442, %v1554
        %v1571 = vmul.f32 %v1443, %v1555
        %v1572 = vmul.f32 %v1444, %v1556
        %v1573 = vmul.f32 %v1445, %v1557
        %v1574 = vmul.f32 %v1446, %v1558
        %v1575 = vmul.f32 %v1447, %v1559
        %v1576 = vmul.f32 %v1448, %v1560
        %v1577 = vmul.f32 %v1449, %v1561
        %v1578 = vmul.f32 %v1450, %v1562
        %v1579 = vmul.f32 %v1451, %v1563
        %v1580 = vmul.f32 %v1452, %v1564
        %v1581 = vmul.f32 %v1453, %v1565
        %v1582 = vmul.f32 %v1454, %v1566
        %v1583 = vmul.f32 %v1455, %v1567
        %v1584 = vmul.f32 %v1456, %v1568
        %v1585 = vmul.f32 %v1457, %v1569
        %v1586 = vld [vmem:[%s4] sm:$0x1]
        %v1588 = vlaneseq
        %v1589 = vshrl.u32 %v1588, 7
        %v1590 = vsub.s32 0, %v1589
        %v1591 = vrot.slane %v1586, %v1590
        %v1593 = vmul.f32 %v1570, %v1591
        %v1594 = vmul.f32 %v1571, %v1591
        %v1595 = vmul.f32 %v1572, %v1591
        %v1596 = vmul.f32 %v1573, %v1591
        %v1597 = vmul.f32 %v1574, %v1591
        %v1598 = vmul.f32 %v1575, %v1591
        %v1599 = vmul.f32 %v1576, %v1591
        %v1600 = vmul.f32 %v1577, %v1591
        %v1601 = vmul.f32 %v1578, %v1591
        %v1602 = vmul.f32 %v1579, %v1591
        %v1603 = vmul.f32 %v1580, %v1591
        %v1604 = vmul.f32 %v1581, %v1591
        %v1605 = vmul.f32 %v1582, %v1591
        %v1606 = vmul.f32 %v1583, %v1591
        %v1607 = vmul.f32 %v1584, %v1591
        %v1608 = vmul.f32 %v1585, %v1591
        %v1609 = vld [vmem:[%s5] sm:$0x1]
        %v1611 = vlaneseq
        %v1612 = vshrl.u32 %v1611, 7
        %v1613 = vsub.s32 0, %v1612
        %v1614 = vrot.slane %v1609, %v1613
        %v1616 = vadd.f32 %v1593, %v1614
        %v1617 = vadd.f32 %v1594, %v1614
        %v1618 = vadd.f32 %v1595, %v1614
        %v1619 = vadd.f32 %v1596, %v1614
        %v1620 = vadd.f32 %v1597, %v1614
        %v1621 = vadd.f32 %v1598, %v1614
        %v1622 = vadd.f32 %v1599, %v1614
        %v1623 = vadd.f32 %v1600, %v1614
        %v1624 = vadd.f32 %v1601, %v1614
        %v1625 = vadd.f32 %v1602, %v1614
        %v1626 = vadd.f32 %v1603, %v1614
        %v1627 = vadd.f32 %v1604, %v1614
        %v1628 = vadd.f32 %v1605, %v1614
        %v1629 = vadd.f32 %v1606, %v1614
        %v1630 = vadd.f32 %v1607, %v1614
        %v1631 = vadd.f32 %v1608, %v1614
        %v1632 = vtanh.pop %v1616
        %v1633 = vtanh.pop %v1617
        %v1634 = vtanh.pop %v1618
        %v1635 = vtanh.pop %v1619
        %v1636 = vtanh.pop %v1620
        %v1637 = vtanh.pop %v1621
        %v1638 = vtanh.pop %v1622
        %v1639 = vtanh.pop %v1623
        %v1640 = vtanh.pop %v1624
        %v1641 = vtanh.pop %v1625
        %v1642 = vtanh.pop %v1626
        %v1643 = vtanh.pop %v1627
        %v1644 = vtanh.pop %v1628
        %v1645 = vtanh.pop %v1629
        %v1646 = vtanh.pop %v1630
        %v1647 = vtanh.pop %v1631
        %v1648 = vpack.c.bf16 %v1633, %v1632
        %v1649 = vpack.c.bf16 %v1635, %v1634
        %v1650 = vpack.c.bf16 %v1637, %v1636
        %v1651 = vpack.c.bf16 %v1639, %v1638
        %v1652 = vpack.c.bf16 %v1641, %v1640
        %v1653 = vpack.c.bf16 %v1643, %v1642
        %v1654 = vpack.c.bf16 %v1645, %v1644
        %v1655 = vpack.c.bf16 %v1647, %v1646
        %v1656 = vld [vmem:[%s650] sm:$0xf]
        %v1657 = vld [vmem:[%s650 + $0x4] sm:$0xf]
        %v1658 = vld [vmem:[%s650 + $0x8] sm:$0xf]
        %v1659 = vld [vmem:[%s650 + $0xc] sm:$0xf]
        %v1660 = vld [vmem:[%s650 + $0x10] sm:$0xf]
        %v1661 = vld [vmem:[%s650 + $0x14] sm:$0xf]
        %v1662 = vld [vmem:[%s650 + $0x18] sm:$0xf]
        %v1663 = vld [vmem:[%s650 + $0x1c] sm:$0xf]
        %v1664 = vld [vmem:[%s650 + $0x20] sm:$0xf]
        %v1665 = vld [vmem:[%s650 + $0x24] sm:$0xf]
        %v1666 = vld [vmem:[%s650 + $0x28] sm:$0xf]
        %v1667 = vld [vmem:[%s650 + $0x2c] sm:$0xf]
        %v1668 = vld [vmem:[%s650 + $0x30] sm:$0xf]
        %v1669 = vld [vmem:[%s650 + $0x34] sm:$0xf]
        %v1670 = vld [vmem:[%s650 + $0x38] sm:$0xf]
        %v1671 = vld [vmem:[%s650 + $0x3c] sm:$0xf]
        %v1688 = vunpack.c.l.b16 %v1656
        %v1689 = vunpack.c.l.b16 %v1657
        %v1690 = vunpack.c.l.b16 %v1658
        %v1691 = vunpack.c.l.b16 %v1659
        %v1692 = vunpack.c.l.b16 %v1660
        %v1693 = vunpack.c.l.b16 %v1661
        %v1694 = vunpack.c.l.b16 %v1662
        %v1695 = vunpack.c.l.b16 %v1663
        %v1696 = vunpack.c.l.b16 %v1664
        %v1697 = vunpack.c.l.b16 %v1665
        %v1698 = vunpack.c.l.b16 %v1666
        %v1699 = vunpack.c.l.b16 %v1667
        %v1700 = vunpack.c.l.b16 %v1668
        %v1701 = vunpack.c.l.b16 %v1669
        %v1702 = vunpack.c.l.b16 %v1670
        %v1703 = vunpack.c.l.b16 %v1671
        %v1704 = vpack.c.b16 %v1689, %v1688
        %v1705 = vpack.c.b16 %v1691, %v1690
        %v1706 = vpack.c.b16 %v1693, %v1692
        %v1707 = vpack.c.b16 %v1695, %v1694
        %v1708 = vpack.c.b16 %v1697, %v1696
        %v1709 = vpack.c.b16 %v1699, %v1698
        %v1710 = vpack.c.b16 %v1701, %v1700
        %v1711 = vpack.c.b16 %v1703, %v1702
        %v1720 = vld [vmem:[#allocation8] sm:$0xff]
        %v1721 = vld [vmem:[#allocation8 + $0x8] sm:$0xff]
        %v1722 = vld [vmem:[#allocation8 + $0x10] sm:$0xff]
        %v1723 = vld [vmem:[#allocation8 + $0x18] sm:$0xff]
        %v1724 = vld [vmem:[#allocation8 + $0x20] sm:$0xff]
        %v1725 = vld [vmem:[#allocation8 + $0x28] sm:$0xff]
        %v1726 = vld [vmem:[#allocation8 + $0x30] sm:$0xff]
        %v1727 = vld [vmem:[#allocation8 + $0x38] sm:$0xff]
        %v1728 = vld [vmem:[#allocation8 + $0x40] sm:$0xff]
        %v1729 = vld [vmem:[#allocation8 + $0x48] sm:$0xff]
        %v1730 = vld [vmem:[#allocation8 + $0x50] sm:$0xff]
        %v1731 = vld [vmem:[#allocation8 + $0x58] sm:$0xff]
        %v1732 = vld [vmem:[#allocation8 + $0x60] sm:$0xff]
        %v1733 = vld [vmem:[#allocation8 + $0x68] sm:$0xff]
        %v1734 = vld [vmem:[#allocation8 + $0x70] sm:$0xff]
        %v1735 = vld [vmem:[#allocation8 + $0x78] sm:$0xff]
        %v1736 = vld [vmem:[#allocation8 + $0x80] sm:$0xff]
        %v1737 = vld [vmem:[#allocation8 + $0x88] sm:$0xff]
        %v1738 = vld [vmem:[#allocation8 + $0x90] sm:$0xff]
        %v1739 = vld [vmem:[#allocation8 + $0x98] sm:$0xff]
        %v1740 = vld [vmem:[#allocation8 + $0xa0] sm:$0xff]
        %v1741 = vld [vmem:[#allocation8 + $0xa8] sm:$0xff]
        %v1742 = vld [vmem:[#allocation8 + $0xb0] sm:$0xff]
        %v1743 = vld [vmem:[#allocation8 + $0xb8] sm:$0xff]
        %v1744 = vld [vmem:[#allocation8 + $0xc0] sm:$0xff]
        %v1745 = vld [vmem:[#allocation8 + $0xc8] sm:$0xff]
        %v1746 = vld [vmem:[#allocation8 + $0xd0] sm:$0xff]
        %v1747 = vld [vmem:[#allocation8 + $0xd8] sm:$0xff]
        %v1748 = vld [vmem:[#allocation8 + $0xe0] sm:$0xff]
        %v1749 = vld [vmem:[#allocation8 + $0xe8] sm:$0xff]
        %v1750 = vld [vmem:[#allocation8 + $0xf0] sm:$0xff]
        %v1751 = vld [vmem:[#allocation8 + $0xf8] sm:$0xff]
        %v1752 = vld [vmem:[%s7] sm:$0x3]
        %v1754 = vlaneseq
        %v1755 = vshrl.u32 %v1754, 7
        %v1756 = vsub.s32 0, %v1755
        %v1757 = vrot.slane %v1752, %v1756
        %v1758 = vlaneseq
        %v1759 = vshrl.u32 %v1758, 7
        %v1760 = vsub.s32 1, %v1759
        %v1761 = vrot.slane %v1752, %v1760
        %v1796 = vunpack.c.l.b16 %v1720
        %v1797 = vunpack.c.h.b16 %v1720
        %v1798 = vunpack.c.l.b16 %v1721
        %v1799 = vunpack.c.h.b16 %v1721
        %v1800 = vunpack.c.l.b16 %v1722
        %v1801 = vunpack.c.h.b16 %v1722
        %v1802 = vunpack.c.l.b16 %v1723
        %v1803 = vunpack.c.h.b16 %v1723
        %v1804 = vunpack.c.l.b16 %v1724
        %v1805 = vunpack.c.h.b16 %v1724
        %v1806 = vunpack.c.l.b16 %v1725
        %v1807 = vunpack.c.h.b16 %v1725
        %v1808 = vunpack.c.l.b16 %v1726
        %v1809 = vunpack.c.h.b16 %v1726
        %v1810 = vunpack.c.l.b16 %v1727
        %v1811 = vunpack.c.h.b16 %v1727
        %v1812 = vunpack.c.l.b16 %v1728
        %v1813 = vunpack.c.h.b16 %v1728
        %v1814 = vunpack.c.l.b16 %v1729
        %v1815 = vunpack.c.h.b16 %v1729
        %v1816 = vunpack.c.l.b16 %v1730
        %v1817 = vunpack.c.h.b16 %v1730
        %v1818 = vunpack.c.l.b16 %v1731
        %v1819 = vunpack.c.h.b16 %v1731
        %v1820 = vunpack.c.l.b16 %v1732
        %v1821 = vunpack.c.h.b16 %v1732
        %v1822 = vunpack.c.l.b16 %v1733
        %v1823 = vunpack.c.h.b16 %v1733
        %v1824 = vunpack.c.l.b16 %v1734
        %v1825 = vunpack.c.h.b16 %v1734
        %v1826 = vunpack.c.l.b16 %v1735
        %v1827 = vunpack.c.h.b16 %v1735
        %v1828 = vunpack.c.l.b16 %v1736
        %v1829 = vunpack.c.h.b16 %v1736
        %v1830 = vunpack.c.l.b16 %v1737
        %v1831 = vunpack.c.h.b16 %v1737
        %v1832 = vunpack.c.l.b16 %v1738
        %v1833 = vunpack.c.h.b16 %v1738
        %v1834 = vunpack.c.l.b16 %v1739
        %v1835 = vunpack.c.h.b16 %v1739
        %v1836 = vunpack.c.l.b16 %v1740
        %v1837 = vunpack.c.h.b16 %v1740
        %v1838 = vunpack.c.l.b16 %v1741
        %v1839 = vunpack.c.h.b16 %v1741
        %v1840 = vunpack.c.l.b16 %v1742
        %v1841 = vunpack.c.h.b16 %v1742
        %v1842 = vunpack.c.l.b16 %v1743
        %v1843 = vunpack.c.h.b16 %v1743
        %v1844 = vunpack.c.l.b16 %v1744
        %v1845 = vunpack.c.h.b16 %v1744
        %v1846 = vunpack.c.l.b16 %v1745
        %v1847 = vunpack.c.h.b16 %v1745
        %v1848 = vunpack.c.l.b16 %v1746
        %v1849 = vunpack.c.h.b16 %v1746
        %v1850 = vunpack.c.l.b16 %v1747
        %v1851 = vunpack.c.h.b16 %v1747
        %v1852 = vunpack.c.l.b16 %v1748
        %v1853 = vunpack.c.h.b16 %v1748
        %v1854 = vunpack.c.l.b16 %v1749
        %v1855 = vunpack.c.h.b16 %v1749
        %v1856 = vunpack.c.l.b16 %v1750
        %v1857 = vunpack.c.h.b16 %v1750
        %v1858 = vunpack.c.l.b16 %v1751
        %v1859 = vunpack.c.h.b16 %v1751
        %v1860 = vpack.c.b16 %v1798, %v1796
        %v1861 = vpack.c.b16 %v1799, %v1797
        %v1862 = vpack.c.b16 %v1802, %v1800
        %v1863 = vpack.c.b16 %v1803, %v1801
        %v1864 = vpack.c.b16 %v1806, %v1804
        %v1865 = vpack.c.b16 %v1807, %v1805
        %v1866 = vpack.c.b16 %v1810, %v1808
        %v1867 = vpack.c.b16 %v1811, %v1809
        %v1868 = vpack.c.b16 %v1814, %v1812
        %v1869 = vpack.c.b16 %v1815, %v1813
        %v1870 = vpack.c.b16 %v1818, %v1816
        %v1871 = vpack.c.b16 %v1819, %v1817
        %v1872 = vpack.c.b16 %v1822, %v1820
        %v1873 = vpack.c.b16 %v1823, %v1821
        %v1874 = vpack.c.b16 %v1826, %v1824
        %v1875 = vpack.c.b16 %v1827, %v1825
        %v1876 = vpack.c.b16 %v1830, %v1828
        %v1877 = vpack.c.b16 %v1831, %v1829
        %v1878 = vpack.c.b16 %v1834, %v1832
        %v1879 = vpack.c.b16 %v1835, %v1833
        %v1880 = vpack.c.b16 %v1838, %v1836
        %v1881 = vpack.c.b16 %v1839, %v1837
        %v1882 = vpack.c.b16 %v1842, %v1840
        %v1883 = vpack.c.b16 %v1843, %v1841
        %v1884 = vpack.c.b16 %v1846, %v1844
        %v1885 = vpack.c.b16 %v1847, %v1845
        %v1886 = vpack.c.b16 %v1850, %v1848
        %v1887 = vpack.c.b16 %v1851, %v1849
        %v1888 = vpack.c.b16 %v1854, %v1852
        %v1889 = vpack.c.b16 %v1855, %v1853
        %v1890 = vpack.c.b16 %v1858, %v1856
        %v1891 = vpack.c.b16 %v1859, %v1857
        %1924 = vmatprep.subr.bf16.mxu0 %v1861
        %1925 = vmatpush1.bf16.msra.mxu0 %v1860
        %1926 = vmatprep.subr.bf16.mxu0 %v1863
        %1927 = vmatpush1.bf16.msra.mxu0 %v1862
        %1928 = vmatprep.subr.bf16.mxu0 %v1865
        %1929 = vmatpush1.bf16.msra.mxu0 %v1864
        %1930 = vmatprep.subr.bf16.mxu0 %v1867
        %1931 = vmatpush1.bf16.msra.mxu0 %v1866
        %1932 = vmatprep.subr.bf16.mxu0 %v1869
        %1933 = vmatpush1.bf16.msra.mxu0 %v1868
        %1934 = vmatprep.subr.bf16.mxu0 %v1871
        %1935 = vmatpush1.bf16.msra.mxu0 %v1870
        %1936 = vmatprep.subr.bf16.mxu0 %v1873
        %1937 = vmatpush1.bf16.msra.mxu0 %v1872
        %1938 = vmatprep.subr.bf16.mxu0 %v1875
        %1939 = vmatpush1.bf16.msra.mxu0 %v1874
        %1940 = vmatprep.subr.bf16.mxu0 %v1877
        %1941 = vmatpush1.bf16.msra.mxu0 %v1876
        %1942 = vmatprep.subr.bf16.mxu0 %v1879
        %1943 = vmatpush1.bf16.msra.mxu0 %v1878
        %1944 = vmatprep.subr.bf16.mxu0 %v1881
        %1945 = vmatpush1.bf16.msra.mxu0 %v1880
        %1946 = vmatprep.subr.bf16.mxu0 %v1883
        %1947 = vmatpush1.bf16.msra.mxu0 %v1882
        %1948 = vmatprep.subr.bf16.mxu0 %v1885
        %1949 = vmatpush1.bf16.msra.mxu0 %v1884
        %1950 = vmatprep.subr.bf16.mxu0 %v1887
        %1951 = vmatpush1.bf16.msra.mxu0 %v1886
        %1952 = vmatprep.subr.bf16.mxu0 %v1889
        %1953 = vmatpush1.bf16.msra.mxu0 %v1888
        %1954 = vmatprep.subr.bf16.mxu0 %v1891
        %1955 = vmatpush1.bf16.msra.mxu0 %v1890
        %1956 = vmatprep.mubr.bf16.mxu0 %v1704
        %1957 = vmatmul.mubr.bf16.gmra.mrb[0].mxu0 %v1648
        %v1958 = vpop.f32.mrb[0].mxu0
        %v1959 = vadd.f32 %v1757, %v1958
        %v1960 = vpop.f32.mrb[0].mxu0
        %v1961 = vadd.f32 %v1761, %v1960
        %v1962 = vpop.f32.mrb[0].mxu0
        %v1963 = vadd.f32 %v1757, %v1962
        %v1964 = vpop.f32.mrb[0].mxu0
        %v1965 = vadd.f32 %v1761, %v1964
        %1966 = vmatprep.mubr.bf16.mxu0 %v1705
        %1967 = vmatmul.mubr.bf16.gmra.mrb[0].mxu0 %v1649
        %v1968 = vpop.f32.mrb[0].mxu0
        %v1969 = vadd.f32 %v1757, %v1968
        %v1970 = vpop.f32.mrb[0].mxu0
        %v1971 = vadd.f32 %v1761, %v1970
        %v1972 = vpop.f32.mrb[0].mxu0
        %v1973 = vadd.f32 %v1757, %v1972
        %v1974 = vpop.f32.mrb[0].mxu0
        %v1975 = vadd.f32 %v1761, %v1974
        %1976 = vmatprep.mubr.bf16.mxu0 %v1706
        %1977 = vmatmul.mubr.bf16.gmra.mrb[0].mxu0 %v1650
        %v1978 = vpop.f32.mrb[0].mxu0
        %v1979 = vadd.f32 %v1757, %v1978
        %v1980 = vpop.f32.mrb[0].mxu0
        %v1981 = vadd.f32 %v1761, %v1980
        %v1982 = vpop.f32.mrb[0].mxu0
        %v1983 = vadd.f32 %v1757, %v1982
        %v1984 = vpop.f32.mrb[0].mxu0
        %v1985 = vadd.f32 %v1761, %v1984
        %1986 = vmatprep.mubr.bf16.mxu0 %v1707
        %1987 = vmatmul.mubr.bf16.gmra.mrb[0].mxu0 %v1651
        %v1988 = vpop.f32.mrb[0].mxu0
        %v1989 = vadd.f32 %v1757, %v1988
        %v1990 = vpop.f32.mrb[0].mxu0
        %v1991 = vadd.f32 %v1761, %v1990
        %v1992 = vpop.f32.mrb[0].mxu0
        %v1993 = vadd.f32 %v1757, %v1992
        %v1994 = vpop.f32.mrb[0].mxu0
        %v1995 = vadd.f32 %v1761, %v1994
        %1996 = vmatprep.mubr.bf16.mxu0 %v1708
        %1997 = vmatmul.mubr.bf16.gmra.mrb[0].mxu0 %v1652
        %v1998 = vpop.f32.mrb[0].mxu0
        %v1999 = vadd.f32 %v1757, %v1998
        %v2000 = vpop.f32.mrb[0].mxu0
        %v2001 = vadd.f32 %v1761, %v2000
        %v2002 = vpop.f32.mrb[0].mxu0
        %v2003 = vadd.f32 %v1757, %v2002
        %v2004 = vpop.f32.mrb[0].mxu0
        %v2005 = vadd.f32 %v1761, %v2004
        %2006 = vmatprep.mubr.bf16.mxu0 %v1709
        %2007 = vmatmul.mubr.bf16.gmra.mrb[0].mxu0 %v1653
        %v2008 = vpop.f32.mrb[0].mxu0
        %v2009 = vadd.f32 %v1757, %v2008
        %v2010 = vpop.f32.mrb[0].mxu0
        %v2011 = vadd.f32 %v1761, %v2010
        %v2012 = vpop.f32.mrb[0].mxu0
        %v2013 = vadd.f32 %v1757, %v2012
        %v2014 = vpop.f32.mrb[0].mxu0
        %v2015 = vadd.f32 %v1761, %v2014
        %2016 = vmatprep.mubr.bf16.mxu0 %v1710
        %2017 = vmatmul.mubr.bf16.gmra.mrb[0].mxu0 %v1654
        %v2018 = vpop.f32.mrb[0].mxu0
        %v2019 = vadd.f32 %v1757, %v2018
        %v2020 = vpop.f32.mrb[0].mxu0
        %v2021 = vadd.f32 %v1761, %v2020
        %v2022 = vpop.f32.mrb[0].mxu0
        %v2023 = vadd.f32 %v1757, %v2022
        %v2024 = vpop.f32.mrb[0].mxu0
        %v2025 = vadd.f32 %v1761, %v2024
        %2026 = vmatprep.mubr.bf16.mxu0 %v1711
        %2027 = vmatmul.mubr.bf16.gmra.mrb[0].mxu0 %v1655
        %v2028 = vpop.f32.mrb[0].mxu0
        %v2029 = vadd.f32 %v1757, %v2028
        %v2030 = vpop.f32.mrb[0].mxu0
        %v2031 = vadd.f32 %v1761, %v2030
        %v2032 = vpop.f32.mrb[0].mxu0
        %v2033 = vadd.f32 %v1757, %v2032
        %v2034 = vpop.f32.mrb[0].mxu0
        %v2035 = vadd.f32 %v1761, %v2034
        %2036 = vdwg.mxu0
        %v2037 = vmax.f32 %v1959, 0.0
        %v2038 = vmax.f32 %v1961, 0.0
        %v2039 = vmax.f32 %v1963, 0.0
        %v2040 = vmax.f32 %v1965, 0.0
        %v2041 = vmax.f32 %v1969, 0.0
        %v2042 = vmax.f32 %v1971, 0.0
        %v2043 = vmax.f32 %v1973, 0.0
        %v2044 = vmax.f32 %v1975, 0.0
        %v2045 = vmax.f32 %v1979, 0.0
        %v2046 = vmax.f32 %v1981, 0.0
        %v2047 = vmax.f32 %v1983, 0.0
        %v2048 = vmax.f32 %v1985, 0.0
        %v2049 = vmax.f32 %v1989, 0.0
        %v2050 = vmax.f32 %v1991, 0.0
        %v2051 = vmax.f32 %v1993, 0.0
        %v2052 = vmax.f32 %v1995, 0.0
        %v2053 = vmax.f32 %v1999, 0.0
        %v2054 = vmax.f32 %v2001, 0.0
        %v2055 = vmax.f32 %v2003, 0.0
        %v2056 = vmax.f32 %v2005, 0.0
        %v2057 = vmax.f32 %v2009, 0.0
        %v2058 = vmax.f32 %v2011, 0.0
        %v2059 = vmax.f32 %v2013, 0.0
        %v2060 = vmax.f32 %v2015, 0.0
        %v2061 = vmax.f32 %v2019, 0.0
        %v2062 = vmax.f32 %v2021, 0.0
        %v2063 = vmax.f32 %v2023, 0.0
        %v2064 = vmax.f32 %v2025, 0.0
        %v2065 = vmax.f32 %v2029, 0.0
        %v2066 = vmax.f32 %v2031, 0.0
        %v2067 = vmax.f32 %v2033, 0.0
        %v2068 = vmax.f32 %v2035, 0.0
        %v2069 = vpack.c.bf16 %v2039, %v2037
        %v2070 = vpack.c.bf16 %v2040, %v2038
        %v2071 = vpack.c.bf16 %v2043, %v2041
        %v2072 = vpack.c.bf16 %v2044, %v2042
        %v2073 = vpack.c.bf16 %v2047, %v2045
        %v2074 = vpack.c.bf16 %v2048, %v2046
        %v2075 = vpack.c.bf16 %v2051, %v2049
        %v2076 = vpack.c.bf16 %v2052, %v2050
        %v2077 = vpack.c.bf16 %v2055, %v2053
        %v2078 = vpack.c.bf16 %v2056, %v2054
        %v2079 = vpack.c.bf16 %v2059, %v2057
        %v2080 = vpack.c.bf16 %v2060, %v2058
        %v2081 = vpack.c.bf16 %v2063, %v2061
        %v2082 = vpack.c.bf16 %v2064, %v2062
        %v2083 = vpack.c.bf16 %v2067, %v2065
        %v2084 = vpack.c.bf16 %v2068, %v2066
        %v2085 = vld [vmem:[#allocation10] sm:$0xff]
        %v2086 = vld [vmem:[#allocation10 + $0x8] sm:$0xff]
        %v2087 = vld [vmem:[#allocation10 + $0x10] sm:$0xff]
        %v2088 = vld [vmem:[#allocation10 + $0x18] sm:$0xff]
        %v2089 = vld [vmem:[#allocation10 + $0x20] sm:$0xff]
        %v2090 = vld [vmem:[#allocation10 + $0x28] sm:$0xff]
        %v2091 = vld [vmem:[#allocation10 + $0x30] sm:$0xff]
        %v2092 = vld [vmem:[#allocation10 + $0x38] sm:$0xff]
        %v2093 = vld [vmem:[#allocation10 + $0x40] sm:$0xff]
        %v2094 = vld [vmem:[#allocation10 + $0x48] sm:$0xff]
        %v2095 = vld [vmem:[#allocation10 + $0x50] sm:$0xff]
        %v2096 = vld [vmem:[#allocation10 + $0x58] sm:$0xff]
        %v2097 = vld [vmem:[#allocation10 + $0x60] sm:$0xff]
        %v2098 = vld [vmem:[#allocation10 + $0x68] sm:$0xff]
        %v2099 = vld [vmem:[#allocation10 + $0x70] sm:$0xff]
        %v2100 = vld [vmem:[#allocation10 + $0x78] sm:$0xff]
        %v2101 = vld [vmem:[#allocation10 + $0x80] sm:$0xff]
        %v2102 = vld [vmem:[#allocation10 + $0x88] sm:$0xff]
        %v2103 = vld [vmem:[#allocation10 + $0x90] sm:$0xff]
        %v2104 = vld [vmem:[#allocation10 + $0x98] sm:$0xff]
        %v2105 = vld [vmem:[#allocation10 + $0xa0] sm:$0xff]
        %v2106 = vld [vmem:[#allocation10 + $0xa8] sm:$0xff]
        %v2107 = vld [vmem:[#allocation10 + $0xb0] sm:$0xff]
        %v2108 = vld [vmem:[#allocation10 + $0xb8] sm:$0xff]
        %v2109 = vld [vmem:[#allocation10 + $0xc0] sm:$0xff]
        %v2110 = vld [vmem:[#allocation10 + $0xc8] sm:$0xff]
        %v2111 = vld [vmem:[#allocation10 + $0xd0] sm:$0xff]
        %v2112 = vld [vmem:[#allocation10 + $0xd8] sm:$0xff]
        %v2113 = vld [vmem:[#allocation10 + $0xe0] sm:$0xff]
        %v2114 = vld [vmem:[#allocation10 + $0xe8] sm:$0xff]
        %v2115 = vld [vmem:[#allocation10 + $0xf0] sm:$0xff]
        %v2116 = vld [vmem:[#allocation10 + $0xf8] sm:$0xff]
        %v2117 = vld [vmem:[%s9] sm:$0x3]
        %v2119 = vlaneseq
        %v2120 = vshrl.u32 %v2119, 7
        %v2121 = vsub.s32 0, %v2120
        %v2122 = vrot.slane %v2117, %v2121
        %v2123 = vlaneseq
        %v2124 = vshrl.u32 %v2123, 7
        %v2125 = vsub.s32 1, %v2124
        %v2126 = vrot.slane %v2117, %v2125
        %v2161 = vunpack.c.l.b16 %v2085
        %v2162 = vunpack.c.h.b16 %v2085
        %v2163 = vunpack.c.l.b16 %v2086
        %v2164 = vunpack.c.h.b16 %v2086
        %v2165 = vunpack.c.l.b16 %v2087
        %v2166 = vunpack.c.h.b16 %v2087
        %v2167 = vunpack.c.l.b16 %v2088
        %v2168 = vunpack.c.h.b16 %v2088
        %v2169 = vunpack.c.l.b16 %v2089
        %v2170 = vunpack.c.h.b16 %v2089
        %v2171 = vunpack.c.l.b16 %v2090
        %v2172 = vunpack.c.h.b16 %v2090
        %v2173 = vunpack.c.l.b16 %v2091
        %v2174 = vunpack.c.h.b16 %v2091
        %v2175 = vunpack.c.l.b16 %v2092
        %v2176 = vunpack.c.h.b16 %v2092
        %v2177 = vunpack.c.l.b16 %v2093
        %v2178 = vunpack.c.h.b16 %v2093
        %v2179 = vunpack.c.l.b16 %v2094
        %v2180 = vunpack.c.h.b16 %v2094
        %v2181 = vunpack.c.l.b16 %v2095
        %v2182 = vunpack.c.h.b16 %v2095
        %v2183 = vunpack.c.l.b16 %v2096
        %v2184 = vunpack.c.h.b16 %v2096
        %v2185 = vunpack.c.l.b16 %v2097
        %v2186 = vunpack.c.h.b16 %v2097
        %v2187 = vunpack.c.l.b16 %v2098
        %v2188 = vunpack.c.h.b16 %v2098
        %v2189 = vunpack.c.l.b16 %v2099
        %v2190 = vunpack.c.h.b16 %v2099
        %v2191 = vunpack.c.l.b16 %v2100
        %v2192 = vunpack.c.h.b16 %v2100
        %v2193 = vunpack.c.l.b16 %v2101
        %v2194 = vunpack.c.h.b16 %v2101
        %v2195 = vunpack.c.l.b16 %v2102
        %v2196 = vunpack.c.h.b16 %v2102
        %v2197 = vunpack.c.l.b16 %v2103
        %v2198 = vunpack.c.h.b16 %v2103
        %v2199 = vunpack.c.l.b16 %v2104
        %v2200 = vunpack.c.h.b16 %v2104
        %v2201 = vunpack.c.l.b16 %v2105
        %v2202 = vunpack.c.h.b16 %v2105
        %v2203 = vunpack.c.l.b16 %v2106
        %v2204 = vunpack.c.h.b16 %v2106
        %v2205 = vunpack.c.l.b16 %v2107
        %v2206 = vunpack.c.h.b16 %v2107
        %v2207 = vunpack.c.l.b16 %v2108
        %v2208 = vunpack.c.h.b16 %v2108
        %v2209 = vunpack.c.l.b16 %v2109
        %v2210 = vunpack.c.h.b16 %v2109
        %v2211 = vunpack.c.l.b16 %v2110
        %v2212 = vunpack.c.h.b16 %v2110
        %v2213 = vunpack.c.l.b16 %v2111
        %v2214 = vunpack.c.h.b16 %v2111
        %v2215 = vunpack.c.l.b16 %v2112
        %v2216 = vunpack.c.h.b16 %v2112
        %v2217 = vunpack.c.l.b16 %v2113
        %v2218 = vunpack.c.h.b16 %v2113
        %v2219 = vunpack.c.l.b16 %v2114
        %v2220 = vunpack.c.h.b16 %v2114
        %v2221 = vunpack.c.l.b16 %v2115
        %v2222 = vunpack.c.h.b16 %v2115
        %v2223 = vunpack.c.l.b16 %v2116
        %v2224 = vunpack.c.h.b16 %v2116
        %v2225 = vpack.c.b16 %v2163, %v2161
        %v2226 = vpack.c.b16 %v2164, %v2162
        %v2227 = vpack.c.b16 %v2167, %v2165
        %v2228 = vpack.c.b16 %v2168, %v2166
        %v2229 = vpack.c.b16 %v2171, %v2169
        %v2230 = vpack.c.b16 %v2172, %v2170
        %v2231 = vpack.c.b16 %v2175, %v2173
        %v2232 = vpack.c.b16 %v2176, %v2174
        %v2233 = vpack.c.b16 %v2179, %v2177
        %v2234 = vpack.c.b16 %v2180, %v2178
        %v2235 = vpack.c.b16 %v2183, %v2181
        %v2236 = vpack.c.b16 %v2184, %v2182
        %v2237 = vpack.c.b16 %v2187, %v2185
        %v2238 = vpack.c.b16 %v2188, %v2186
        %v2239 = vpack.c.b16 %v2191, %v2189
        %v2240 = vpack.c.b16 %v2192, %v2190
        %v2241 = vpack.c.b16 %v2195, %v2193
        %v2242 = vpack.c.b16 %v2196, %v2194
        %v2243 = vpack.c.b16 %v2199, %v2197
        %v2244 = vpack.c.b16 %v2200, %v2198
        %v2245 = vpack.c.b16 %v2203, %v2201
        %v2246 = vpack.c.b16 %v2204, %v2202
        %v2247 = vpack.c.b16 %v2207, %v2205
        %v2248 = vpack.c.b16 %v2208, %v2206
        %v2249 = vpack.c.b16 %v2211, %v2209
        %v2250 = vpack.c.b16 %v2212, %v2210
        %v2251 = vpack.c.b16 %v2215, %v2213
        %v2252 = vpack.c.b16 %v2216, %v2214
        %v2253 = vpack.c.b16 %v2219, %v2217
        %v2254 = vpack.c.b16 %v2220, %v2218
        %v2255 = vpack.c.b16 %v2223, %v2221
        %v2256 = vpack.c.b16 %v2224, %v2222
        %2289 = vmatprep.subr.bf16.mxu0 %v2226
        %2290 = vmatpush1.bf16.msra.mxu0 %v2225
        %2291 = vmatprep.subr.bf16.mxu0 %v2228
        %2292 = vmatpush1.bf16.msra.mxu0 %v2227
        %2293 = vmatprep.subr.bf16.mxu0 %v2230
        %2294 = vmatpush1.bf16.msra.mxu0 %v2229
        %2295 = vmatprep.subr.bf16.mxu0 %v2232
        %2296 = vmatpush1.bf16.msra.mxu0 %v2231
        %2297 = vmatprep.subr.bf16.mxu0 %v2234
        %2298 = vmatpush1.bf16.msra.mxu0 %v2233
        %2299 = vmatprep.subr.bf16.mxu0 %v2236
        %2300 = vmatpush1.bf16.msra.mxu0 %v2235
        %2301 = vmatprep.subr.bf16.mxu0 %v2238
        %2302 = vmatpush1.bf16.msra.mxu0 %v2237
        %2303 = vmatprep.subr.bf16.mxu0 %v2240
        %2304 = vmatpush1.bf16.msra.mxu0 %v2239
        %2305 = vmatprep.subr.bf16.mxu0 %v2242
        %2306 = vmatpush1.bf16.msra.mxu0 %v2241
        %2307 = vmatprep.subr.bf16.mxu0 %v2244
        %2308 = vmatpush1.bf16.msra.mxu0 %v2243
        %2309 = vmatprep.subr.bf16.mxu0 %v2246
        %2310 = vmatpush1.bf16.msra.mxu0 %v2245
        %2311 = vmatprep.subr.bf16.mxu0 %v2248
        %2312 = vmatpush1.bf16.msra.mxu0 %v2247
        %2313 = vmatprep.subr.bf16.mxu0 %v2250
        %2314 = vmatpush1.bf16.msra.mxu0 %v2249
        %2315 = vmatprep.subr.bf16.mxu0 %v2252
        %2316 = vmatpush1.bf16.msra.mxu0 %v2251
        %2317 = vmatprep.subr.bf16.mxu0 %v2254
        %2318 = vmatpush1.bf16.msra.mxu0 %v2253
        %2319 = vmatprep.subr.bf16.mxu0 %v2256
        %2320 = vmatpush1.bf16.msra.mxu0 %v2255
        %2321 = vmatprep.mubr.bf16.mxu0 %v2070
        %2322 = vmatmul.mubr.bf16.gmra.mrb[0].mxu0 %v2069
        %v2323 = vpop.f32.mrb[0].mxu0
        %v2324 = vadd.f32 %v2122, %v2323
        %v2325 = vpop.f32.mrb[0].mxu0
        %v2326 = vadd.f32 %v2126, %v2325
        %v2327 = vpop.f32.mrb[0].mxu0
        %v2328 = vadd.f32 %v2122, %v2327
        %v2329 = vpop.f32.mrb[0].mxu0
        %v2330 = vadd.f32 %v2126, %v2329
        %2331 = vmatprep.mubr.bf16.mxu0 %v2072
        %2332 = vmatmul.mubr.bf16.gmra.mrb[0].mxu0 %v2071
        %v2333 = vpop.f32.mrb[0].mxu0
        %v2334 = vadd.f32 %v2122, %v2333
        %v2335 = vpop.f32.mrb[0].mxu0
        %v2336 = vadd.f32 %v2126, %v2335
        %v2337 = vpop.f32.mrb[0].mxu0
        %v2338 = vadd.f32 %v2122, %v2337
        %v2339 = vpop.f32.mrb[0].mxu0
        %v2340 = vadd.f32 %v2126, %v2339
        %2341 = vmatprep.mubr.bf16.mxu0 %v2074
        %2342 = vmatmul.mubr.bf16.gmra.mrb[0].mxu0 %v2073
        %v2343 = vpop.f32.mrb[0].mxu0
        %v2344 = vadd.f32 %v2122, %v2343
        %v2345 = vpop.f32.mrb[0].mxu0
        %v2346 = vadd.f32 %v2126, %v2345
        %v2347 = vpop.f32.mrb[0].mxu0
        %v2348 = vadd.f32 %v2122, %v2347
        %v2349 = vpop.f32.mrb[0].mxu0
        %v2350 = vadd.f32 %v2126, %v2349
        %2351 = vmatprep.mubr.bf16.mxu0 %v2076
        %2352 = vmatmul.mubr.bf16.gmra.mrb[0].mxu0 %v2075
        %v2353 = vpop.f32.mrb[0].mxu0
        %v2354 = vadd.f32 %v2122, %v2353
        %v2355 = vpop.f32.mrb[0].mxu0
        %v2356 = vadd.f32 %v2126, %v2355
        %v2357 = vpop.f32.mrb[0].mxu0
        %v2358 = vadd.f32 %v2122, %v2357
        %v2359 = vpop.f32.mrb[0].mxu0
        %v2360 = vadd.f32 %v2126, %v2359
        %2361 = vmatprep.mubr.bf16.mxu0 %v2078
        %2362 = vmatmul.mubr.bf16.gmra.mrb[0].mxu0 %v2077
        %v2363 = vpop.f32.mrb[0].mxu0
        %v2364 = vadd.f32 %v2122, %v2363
        %v2365 = vpop.f32.mrb[0].mxu0
        %v2366 = vadd.f32 %v2126, %v2365
        %v2367 = vpop.f32.mrb[0].mxu0
        %v2368 = vadd.f32 %v2122, %v2367
        %v2369 = vpop.f32.mrb[0].mxu0
        %v2370 = vadd.f32 %v2126, %v2369
        %2371 = vmatprep.mubr.bf16.mxu0 %v2080
        %2372 = vmatmul.mubr.bf16.gmra.mrb[0].mxu0 %v2079
        %v2373 = vpop.f32.mrb[0].mxu0
        %v2374 = vadd.f32 %v2122, %v2373
        %v2375 = vpop.f32.mrb[0].mxu0
        %v2376 = vadd.f32 %v2126, %v2375
        %v2377 = vpop.f32.mrb[0].mxu0
        %v2378 = vadd.f32 %v2122, %v2377
        %v2379 = vpop.f32.mrb[0].mxu0
        %v2380 = vadd.f32 %v2126, %v2379
        %2381 = vmatprep.mubr.bf16.mxu0 %v2082
        %2382 = vmatmul.mubr.bf16.gmra.mrb[0].mxu0 %v2081
        %v2383 = vpop.f32.mrb[0].mxu0
        %v2384 = vadd.f32 %v2122, %v2383
        %v2385 = vpop.f32.mrb[0].mxu0
        %v2386 = vadd.f32 %v2126, %v2385
        %v2387 = vpop.f32.mrb[0].mxu0
        %v2388 = vadd.f32 %v2122, %v2387
        %v2389 = vpop.f32.mrb[0].mxu0
        %v2390 = vadd.f32 %v2126, %v2389
        %2391 = vmatprep.mubr.bf16.mxu0 %v2084
        %2392 = vmatmul.mubr.bf16.gmra.mrb[0].mxu0 %v2083
        %v2393 = vpop.f32.mrb[0].mxu0
        %v2394 = vadd.f32 %v2122, %v2393
        %v2395 = vpop.f32.mrb[0].mxu0
        %v2396 = vadd.f32 %v2126, %v2395
        %v2397 = vpop.f32.mrb[0].mxu0
        %v2398 = vadd.f32 %v2122, %v2397
        %v2399 = vpop.f32.mrb[0].mxu0
        %v2400 = vadd.f32 %v2126, %v2399
        %2401 = vdwg.mxu0
        %v2402 = vmax.f32 %v2324, 0.0
        %v2403 = vmax.f32 %v2326, 0.0
        %v2404 = vmax.f32 %v2328, 0.0
        %v2405 = vmax.f32 %v2330, 0.0
        %v2406 = vmax.f32 %v2334, 0.0
        %v2407 = vmax.f32 %v2336, 0.0
        %v2408 = vmax.f32 %v2338, 0.0
        %v2409 = vmax.f32 %v2340, 0.0
        %v2410 = vmax.f32 %v2344, 0.0
        %v2411 = vmax.f32 %v2346, 0.0
        %v2412 = vmax.f32 %v2348, 0.0
        %v2413 = vmax.f32 %v2350, 0.0
        %v2414 = vmax.f32 %v2354, 0.0
        %v2415 = vmax.f32 %v2356, 0.0
        %v2416 = vmax.f32 %v2358, 0.0
        %v2417 = vmax.f32 %v2360, 0.0
        %v2418 = vmax.f32 %v2364, 0.0
        %v2419 = vmax.f32 %v2366, 0.0
        %v2420 = vmax.f32 %v2368, 0.0
        %v2421 = vmax.f32 %v2370, 0.0
        %v2422 = vmax.f32 %v2374, 0.0
        %v2423 = vmax.f32 %v2376, 0.0
        %v2424 = vmax.f32 %v2378, 0.0
        %v2425 = vmax.f32 %v2380, 0.0
        %v2426 = vmax.f32 %v2384, 0.0
        %v2427 = vmax.f32 %v2386, 0.0
        %v2428 = vmax.f32 %v2388, 0.0
        %v2429 = vmax.f32 %v2390, 0.0
        %v2430 = vmax.f32 %v2394, 0.0
        %v2431 = vmax.f32 %v2396, 0.0
        %v2432 = vmax.f32 %v2398, 0.0
        %v2433 = vmax.f32 %v2400, 0.0
        %v2434 = vpack.c.bf16 %v2404, %v2402
        %v2435 = vpack.c.bf16 %v2405, %v2403
        %v2436 = vpack.c.bf16 %v2408, %v2406
        %v2437 = vpack.c.bf16 %v2409, %v2407
        %v2438 = vpack.c.bf16 %v2412, %v2410
        %v2439 = vpack.c.bf16 %v2413, %v2411
        %v2440 = vpack.c.bf16 %v2416, %v2414
        %v2441 = vpack.c.bf16 %v2417, %v2415
        %v2442 = vpack.c.bf16 %v2420, %v2418
        %v2443 = vpack.c.bf16 %v2421, %v2419
        %v2444 = vpack.c.bf16 %v2424, %v2422
        %v2445 = vpack.c.bf16 %v2425, %v2423
        %v2446 = vpack.c.bf16 %v2428, %v2426
        %v2447 = vpack.c.bf16 %v2429, %v2427
        %v2448 = vpack.c.bf16 %v2432, %v2430
        %v2449 = vpack.c.bf16 %v2433, %v2431
        %v2450 = vld [vmem:[#allocation11] sm:$0xf]
        %v2451 = vld [vmem:[#allocation11 + $0x4] sm:$0xf]
        %v2452 = vld [vmem:[#allocation11 + $0x8] sm:$0xf]
        %v2453 = vld [vmem:[#allocation11 + $0xc] sm:$0xf]
        %v2454 = vld [vmem:[#allocation11 + $0x10] sm:$0xf]
        %v2455 = vld [vmem:[#allocation11 + $0x14] sm:$0xf]
        %v2456 = vld [vmem:[#allocation11 + $0x18] sm:$0xf]
        %v2457 = vld [vmem:[#allocation11 + $0x1c] sm:$0xf]
        %v2458 = vld [vmem:[#allocation11 + $0x20] sm:$0xf]
        %v2459 = vld [vmem:[#allocation11 + $0x24] sm:$0xf]
        %v2460 = vld [vmem:[#allocation11 + $0x28] sm:$0xf]
        %v2461 = vld [vmem:[#allocation11 + $0x2c] sm:$0xf]
        %v2462 = vld [vmem:[#allocation11 + $0x30] sm:$0xf]
        %v2463 = vld [vmem:[#allocation11 + $0x34] sm:$0xf]
        %v2464 = vld [vmem:[#allocation11 + $0x38] sm:$0xf]
        %v2465 = vld [vmem:[#allocation11 + $0x3c] sm:$0xf]
        %v2466 = vld [vmem:[#allocation11 + $0x40] sm:$0xf]
        %v2467 = vld [vmem:[#allocation11 + $0x44] sm:$0xf]
        %v2468 = vld [vmem:[#allocation11 + $0x48] sm:$0xf]
        %v2469 = vld [vmem:[#allocation11 + $0x4c] sm:$0xf]
        %v2470 = vld [vmem:[#allocation11 + $0x50] sm:$0xf]
        %v2471 = vld [vmem:[#allocation11 + $0x54] sm:$0xf]
        %v2472 = vld [vmem:[#allocation11 + $0x58] sm:$0xf]
        %v2473 = vld [vmem:[#allocation11 + $0x5c] sm:$0xf]
        %v2474 = vld [vmem:[#allocation11 + $0x60] sm:$0xf]
        %v2475 = vld [vmem:[#allocation11 + $0x64] sm:$0xf]
        %v2476 = vld [vmem:[#allocation11 + $0x68] sm:$0xf]
        %v2477 = vld [vmem:[#allocation11 + $0x6c] sm:$0xf]
        %v2478 = vld [vmem:[#allocation11 + $0x70] sm:$0xf]
        %v2479 = vld [vmem:[#allocation11 + $0x74] sm:$0xf]
        %v2480 = vld [vmem:[#allocation11 + $0x78] sm:$0xf]
        %v2481 = vld [vmem:[#allocation11 + $0x7c] sm:$0xf]
        %v2482 = vld [vmem:[%s11] sm:$0x1]
        %v2484 = vlaneseq
        %v2485 = vshrl.u32 %v2484, 7
        %v2486 = vsub.s32 0, %v2485
        %v2487 = vrot.slane %v2482, %v2486
        %v2521 = vunpack.c.l.b16 %v2450
        %v2522 = vunpack.c.l.b16 %v2451
        %v2523 = vunpack.c.l.b16 %v2452
        %v2524 = vunpack.c.l.b16 %v2453
        %v2525 = vunpack.c.l.b16 %v2454
        %v2526 = vunpack.c.l.b16 %v2455
        %v2527 = vunpack.c.l.b16 %v2456
        %v2528 = vunpack.c.l.b16 %v2457
        %v2529 = vunpack.c.l.b16 %v2458
        %v2530 = vunpack.c.l.b16 %v2459
        %v2531 = vunpack.c.l.b16 %v2460
        %v2532 = vunpack.c.l.b16 %v2461
        %v2533 = vunpack.c.l.b16 %v2462
        %v2534 = vunpack.c.l.b16 %v2463
        %v2535 = vunpack.c.l.b16 %v2464
        %v2536 = vunpack.c.l.b16 %v2465
        %v2537 = vunpack.c.l.b16 %v2466
        %v2538 = vunpack.c.l.b16 %v2467
        %v2539 = vunpack.c.l.b16 %v2468
        %v2540 = vunpack.c.l.b16 %v2469
        %v2541 = vunpack.c.l.b16 %v2470
        %v2542 = vunpack.c.l.b16 %v2471
        %v2543 = vunpack.c.l.b16 %v2472
        %v2544 = vunpack.c.l.b16 %v2473
        %v2545 = vunpack.c.l.b16 %v2474
        %v2546 = vunpack.c.l.b16 %v2475
        %v2547 = vunpack.c.l.b16 %v2476
        %v2548 = vunpack.c.l.b16 %v2477
        %v2549 = vunpack.c.l.b16 %v2478
        %v2550 = vunpack.c.l.b16 %v2479
        %v2551 = vunpack.c.l.b16 %v2480
        %v2552 = vunpack.c.l.b16 %v2481
        %v2553 = vpack.c.b16 %v2522, %v2521
        %v2554 = vpack.c.b16 %v2524, %v2523
        %v2555 = vpack.c.b16 %v2526, %v2525
        %v2556 = vpack.c.b16 %v2528, %v2527
        %v2557 = vpack.c.b16 %v2530, %v2529
        %v2558 = vpack.c.b16 %v2532, %v2531
        %v2559 = vpack.c.b16 %v2534, %v2533
        %v2560 = vpack.c.b16 %v2536, %v2535
        %v2561 = vpack.c.b16 %v2538, %v2537
        %v2562 = vpack.c.b16 %v2540, %v2539
        %v2563 = vpack.c.b16 %v2542, %v2541
        %v2564 = vpack.c.b16 %v2544, %v2543
        %v2565 = vpack.c.b16 %v2546, %v2545
        %v2566 = vpack.c.b16 %v2548, %v2547
        %v2567 = vpack.c.b16 %v2550, %v2549
        %v2568 = vpack.c.b16 %v2552, %v2551
        %2585 = vmatprep.subr.bf16.mxu0 0
        %2586 = vmatpush1.bf16.msra.mxu0 %v2553
        %2587 = vmatprep.subr.bf16.mxu0 0
        %2588 = vmatpush1.bf16.msra.mxu0 %v2554
        %2589 = vmatprep.subr.bf16.mxu0 0
        %2590 = vmatpush1.bf16.msra.mxu0 %v2555
        %2591 = vmatprep.subr.bf16.mxu0 0
        %2592 = vmatpush1.bf16.msra.mxu0 %v2556
        %2593 = vmatprep.subr.bf16.mxu0 0
        %2594 = vmatpush1.bf16.msra.mxu0 %v2557
        %2595 = vmatprep.subr.bf16.mxu0 0
        %2596 = vmatpush1.bf16.msra.mxu0 %v2558
        %2597 = vmatprep.subr.bf16.mxu0 0
        %2598 = vmatpush1.bf16.msra.mxu0 %v2559
        %2599 = vmatprep.subr.bf16.mxu0 0
        %2600 = vmatpush1.bf16.msra.mxu0 %v2560
        %2601 = vmatprep.subr.bf16.mxu0 0
        %2602 = vmatpush1.bf16.msra.mxu0 %v2561
        %2603 = vmatprep.subr.bf16.mxu0 0
        %2604 = vmatpush1.bf16.msra.mxu0 %v2562
        %2605 = vmatprep.subr.bf16.mxu0 0
        %2606 = vmatpush1.bf16.msra.mxu0 %v2563
        %2607 = vmatprep.subr.bf16.mxu0 0
        %2608 = vmatpush1.bf16.msra.mxu0 %v2564
        %2609 = vmatprep.subr.bf16.mxu0 0
        %2610 = vmatpush1.bf16.msra.mxu0 %v2565
        %2611 = vmatprep.subr.bf16.mxu0 0
        %2612 = vmatpush1.bf16.msra.mxu0 %v2566
        %2613 = vmatprep.subr.bf16.mxu0 0
        %2614 = vmatpush1.bf16.msra.mxu0 %v2567
        %2615 = vmatprep.subr.bf16.mxu0 0
        %2616 = vmatpush1.bf16.msra.mxu0 %v2568
        %2617 = vmatprep.mubr.bf16.mxu0 %v2435
        %2618 = vmatmul.mubr.bf16.gmra.mrb[0].mxu0 %v2434
        %v2619 = vpop.f32.mrb[0].mxu0
        %v2620 = vadd.f32 %v2487, %v2619
        %v2621 = vpop.f32.mrb[0].mxu0
        %v2622 = vpop.f32.mrb[0].mxu0
        %v2623 = vadd.f32 %v2487, %v2622
        %v2624 = vpop.f32.mrb[0].mxu0
        %2625 = vmatprep.mubr.bf16.mxu0 %v2437
        %2626 = vmatmul.mubr.bf16.gmra.mrb[0].mxu0 %v2436
        %v2627 = vpop.f32.mrb[0].mxu0
        %v2628 = vadd.f32 %v2487, %v2627
        %v2629 = vpop.f32.mrb[0].mxu0
        %v2630 = vpop.f32.mrb[0].mxu0
        %v2631 = vadd.f32 %v2487, %v2630
        %v2632 = vpop.f32.mrb[0].mxu0
        %2633 = vmatprep.mubr.bf16.mxu0 %v2439
        %2634 = vmatmul.mubr.bf16.gmra.mrb[0].mxu0 %v2438
        %v2635 = vpop.f32.mrb[0].mxu0
        %v2636 = vadd.f32 %v2487, %v2635
        %v2637 = vpop.f32.mrb[0].mxu0
        %v2638 = vpop.f32.mrb[0].mxu0
        %v2639 = vadd.f32 %v2487, %v2638
        %v2640 = vpop.f32.mrb[0].mxu0
        %2641 = vmatprep.mubr.bf16.mxu0 %v2441
        %2642 = vmatmul.mubr.bf16.gmra.mrb[0].mxu0 %v2440
        %v2643 = vpop.f32.mrb[0].mxu0
        %v2644 = vadd.f32 %v2487, %v2643
        %v2645 = vpop.f32.mrb[0].mxu0
        %v2646 = vpop.f32.mrb[0].mxu0
        %v2647 = vadd.f32 %v2487, %v2646
        %v2648 = vpop.f32.mrb[0].mxu0
        %2649 = vmatprep.mubr.bf16.mxu0 %v2443
        %2650 = vmatmul.mubr.bf16.gmra.mrb[0].mxu0 %v2442
        %v2651 = vpop.f32.mrb[0].mxu0
        %v2652 = vadd.f32 %v2487, %v2651
        %v2653 = vpop.f32.mrb[0].mxu0
        %v2654 = vpop.f32.mrb[0].mxu0
        %v2655 = vadd.f32 %v2487, %v2654
        %v2656 = vpop.f32.mrb[0].mxu0
        %2657 = vmatprep.mubr.bf16.mxu0 %v2445
        %2658 = vmatmul.mubr.bf16.gmra.mrb[0].mxu0 %v2444
        %v2659 = vpop.f32.mrb[0].mxu0
        %v2660 = vadd.f32 %v2487, %v2659
        %v2661 = vpop.f32.mrb[0].mxu0
        %v2662 = vpop.f32.mrb[0].mxu0
        %v2663 = vadd.f32 %v2487, %v2662
        %v2664 = vpop.f32.mrb[0].mxu0
        %2665 = vmatprep.mubr.bf16.mxu0 %v2447
        %2666 = vmatmul.mubr.bf16.gmra.mrb[0].mxu0 %v2446
        %v2667 = vpop.f32.mrb[0].mxu0
        %v2668 = vadd.f32 %v2487, %v2667
        %v2669 = vpop.f32.mrb[0].mxu0
        %v2670 = vpop.f32.mrb[0].mxu0
        %v2671 = vadd.f32 %v2487, %v2670
        %v2672 = vpop.f32.mrb[0].mxu0
        %2673 = vmatprep.mubr.bf16.mxu0 %v2449
        %2674 = vmatmul.mubr.bf16.gmra.mrb[0].mxu0 %v2448
        %v2675 = vpop.f32.mrb[0].mxu0
        %v2676 = vadd.f32 %v2487, %v2675
        %v2677 = vpop.f32.mrb[0].mxu0
        %v2678 = vpop.f32.mrb[0].mxu0
        %v2679 = vadd.f32 %v2487, %v2678
        %v2680 = vpop.f32.mrb[0].mxu0
        %2681 = vdwg.mxu0
        %v2682 = vld [vmem:[#allocation13] sm:$0xff]
        %v2683 = vld [vmem:[#allocation13 + $0x8] sm:$0xff]
        %v2684 = vld [vmem:[#allocation13 + $0x10] sm:$0xff]
        %v2685 = vld [vmem:[#allocation13 + $0x18] sm:$0xff]
        %v2686 = vld [vmem:[#allocation13 + $0x20] sm:$0xff]
        %v2687 = vld [vmem:[#allocation13 + $0x28] sm:$0xff]
        %v2688 = vld [vmem:[#allocation13 + $0x30] sm:$0xff]
        %v2689 = vld [vmem:[#allocation13 + $0x38] sm:$0xff]
        %v2690 = vld [vmem:[#allocation13 + $0x40] sm:$0xff]
        %v2691 = vld [vmem:[#allocation13 + $0x48] sm:$0xff]
        %v2692 = vld [vmem:[#allocation13 + $0x50] sm:$0xff]
        %v2693 = vld [vmem:[#allocation13 + $0x58] sm:$0xff]
        %v2694 = vld [vmem:[#allocation13 + $0x60] sm:$0xff]
        %v2695 = vld [vmem:[#allocation13 + $0x68] sm:$0xff]
        %v2696 = vld [vmem:[#allocation13 + $0x70] sm:$0xff]
        %v2697 = vld [vmem:[#allocation13 + $0x78] sm:$0xff]
        %v2698 = vld [vmem:[#allocation13 + $0x80] sm:$0xff]
        %v2699 = vld [vmem:[#allocation13 + $0x88] sm:$0xff]
        %v2700 = vld [vmem:[#allocation13 + $0x90] sm:$0xff]
        %v2701 = vld [vmem:[#allocation13 + $0x98] sm:$0xff]
        %v2702 = vld [vmem:[#allocation13 + $0xa0] sm:$0xff]
        %v2703 = vld [vmem:[#allocation13 + $0xa8] sm:$0xff]
        %v2704 = vld [vmem:[#allocation13 + $0xb0] sm:$0xff]
        %v2705 = vld [vmem:[#allocation13 + $0xb8] sm:$0xff]
        %v2706 = vld [vmem:[#allocation13 + $0xc0] sm:$0xff]
        %v2707 = vld [vmem:[#allocation13 + $0xc8] sm:$0xff]
        %v2708 = vld [vmem:[#allocation13 + $0xd0] sm:$0xff]
        %v2709 = vld [vmem:[#allocation13 + $0xd8] sm:$0xff]
        %v2710 = vld [vmem:[#allocation13 + $0xe0] sm:$0xff]
        %v2711 = vld [vmem:[#allocation13 + $0xe8] sm:$0xff]
        %v2712 = vld [vmem:[#allocation13 + $0xf0] sm:$0xff]
        %v2713 = vld [vmem:[#allocation13 + $0xf8] sm:$0xff]
        %v2714 = vld [vmem:[%s13] sm:$0x3]
        %v2716 = vlaneseq
        %v2717 = vshrl.u32 %v2716, 7
        %v2718 = vsub.s32 0, %v2717
        %v2719 = vrot.slane %v2714, %v2718
        %v2720 = vlaneseq
        %v2721 = vshrl.u32 %v2720, 7
        %v2722 = vsub.s32 1, %v2721
        %v2723 = vrot.slane %v2714, %v2722
        %v2758 = vunpack.c.l.b16 %v2682
        %v2759 = vunpack.c.h.b16 %v2682
        %v2760 = vunpack.c.l.b16 %v2683
        %v2761 = vunpack.c.h.b16 %v2683
        %v2762 = vunpack.c.l.b16 %v2684
        %v2763 = vunpack.c.h.b16 %v2684
        %v2764 = vunpack.c.l.b16 %v2685
        %v2765 = vunpack.c.h.b16 %v2685
        %v2766 = vunpack.c.l.b16 %v2686
        %v2767 = vunpack.c.h.b16 %v2686
        %v2768 = vunpack.c.l.b16 %v2687
        %v2769 = vunpack.c.h.b16 %v2687
        %v2770 = vunpack.c.l.b16 %v2688
        %v2771 = vunpack.c.h.b16 %v2688
        %v2772 = vunpack.c.l.b16 %v2689
        %v2773 = vunpack.c.h.b16 %v2689
        %v2774 = vunpack.c.l.b16 %v2690
        %v2775 = vunpack.c.h.b16 %v2690
        %v2776 = vunpack.c.l.b16 %v2691
        %v2777 = vunpack.c.h.b16 %v2691
        %v2778 = vunpack.c.l.b16 %v2692
        %v2779 = vunpack.c.h.b16 %v2692
        %v2780 = vunpack.c.l.b16 %v2693
        %v2781 = vunpack.c.h.b16 %v2693
        %v2782 = vunpack.c.l.b16 %v2694
        %v2783 = vunpack.c.h.b16 %v2694
        %v2784 = vunpack.c.l.b16 %v2695
        %v2785 = vunpack.c.h.b16 %v2695
        %v2786 = vunpack.c.l.b16 %v2696
        %v2787 = vunpack.c.h.b16 %v2696
        %v2788 = vunpack.c.l.b16 %v2697
        %v2789 = vunpack.c.h.b16 %v2697
        %v2790 = vunpack.c.l.b16 %v2698
        %v2791 = vunpack.c.h.b16 %v2698
        %v2792 = vunpack.c.l.b16 %v2699
        %v2793 = vunpack.c.h.b16 %v2699
        %v2794 = vunpack.c.l.b16 %v2700
        %v2795 = vunpack.c.h.b16 %v2700
        %v2796 = vunpack.c.l.b16 %v2701
        %v2797 = vunpack.c.h.b16 %v2701
        %v2798 = vunpack.c.l.b16 %v2702
        %v2799 = vunpack.c.h.b16 %v2702
        %v2800 = vunpack.c.l.b16 %v2703
        %v2801 = vunpack.c.h.b16 %v2703
        %v2802 = vunpack.c.l.b16 %v2704
        %v2803 = vunpack.c.h.b16 %v2704
        %v2804 = vunpack.c.l.b16 %v2705
        %v2805 = vunpack.c.h.b16 %v2705
        %v2806 = vunpack.c.l.b16 %v2706
        %v2807 = vunpack.c.h.b16 %v2706
        %v2808 = vunpack.c.l.b16 %v2707
        %v2809 = vunpack.c.h.b16 %v2707
        %v2810 = vunpack.c.l.b16 %v2708
        %v2811 = vunpack.c.h.b16 %v2708
        %v2812 = vunpack.c.l.b16 %v2709
        %v2813 = vunpack.c.h.b16 %v2709
        %v2814 = vunpack.c.l.b16 %v2710
        %v2815 = vunpack.c.h.b16 %v2710
        %v2816 = vunpack.c.l.b16 %v2711
        %v2817 = vunpack.c.h.b16 %v2711
        %v2818 = vunpack.c.l.b16 %v2712
        %v2819 = vunpack.c.h.b16 %v2712
        %v2820 = vunpack.c.l.b16 %v2713
        %v2821 = vunpack.c.h.b16 %v2713
        %v2822 = vpack.c.b16 %v2760, %v2758
        %v2823 = vpack.c.b16 %v2761, %v2759
        %v2824 = vpack.c.b16 %v2764, %v2762
        %v2825 = vpack.c.b16 %v2765, %v2763
        %v2826 = vpack.c.b16 %v2768, %v2766
        %v2827 = vpack.c.b16 %v2769, %v2767
        %v2828 = vpack.c.b16 %v2772, %v2770
        %v2829 = vpack.c.b16 %v2773, %v2771
        %v2830 = vpack.c.b16 %v2776, %v2774
        %v2831 = vpack.c.b16 %v2777, %v2775
        %v2832 = vpack.c.b16 %v2780, %v2778
        %v2833 = vpack.c.b16 %v2781, %v2779
        %v2834 = vpack.c.b16 %v2784, %v2782
        %v2835 = vpack.c.b16 %v2785, %v2783
        %v2836 = vpack.c.b16 %v2788, %v2786
        %v2837 = vpack.c.b16 %v2789, %v2787
        %v2838 = vpack.c.b16 %v2792, %v2790
        %v2839 = vpack.c.b16 %v2793, %v2791
        %v2840 = vpack.c.b16 %v2796, %v2794
        %v2841 = vpack.c.b16 %v2797, %v2795
        %v2842 = vpack.c.b16 %v2800, %v2798
        %v2843 = vpack.c.b16 %v2801, %v2799
        %v2844 = vpack.c.b16 %v2804, %v2802
        %v2845 = vpack.c.b16 %v2805, %v2803
        %v2846 = vpack.c.b16 %v2808, %v2806
        %v2847 = vpack.c.b16 %v2809, %v2807
        %v2848 = vpack.c.b16 %v2812, %v2810
        %v2849 = vpack.c.b16 %v2813, %v2811
        %v2850 = vpack.c.b16 %v2816, %v2814
        %v2851 = vpack.c.b16 %v2817, %v2815
        %v2852 = vpack.c.b16 %v2820, %v2818
        %v2853 = vpack.c.b16 %v2821, %v2819
        %2886 = vmatprep.subr.bf16.mxu0 %v2823
        %2887 = vmatpush1.bf16.msra.mxu0 %v2822
        %2888 = vmatprep.subr.bf16.mxu0 %v2825
        %2889 = vmatpush1.bf16.msra.mxu0 %v2824
        %2890 = vmatprep.subr.bf16.mxu0 %v2827
        %2891 = vmatpush1.bf16.msra.mxu0 %v2826
        %2892 = vmatprep.subr.bf16.mxu0 %v2829
        %2893 = vmatpush1.bf16.msra.mxu0 %v2828
        %2894 = vmatprep.subr.bf16.mxu0 %v2831
        %2895 = vmatpush1.bf16.msra.mxu0 %v2830
        %2896 = vmatprep.subr.bf16.mxu0 %v2833
        %2897 = vmatpush1.bf16.msra.mxu0 %v2832
        %2898 = vmatprep.subr.bf16.mxu0 %v2835
        %2899 = vmatpush1.bf16.msra.mxu0 %v2834
        %2900 = vmatprep.subr.bf16.mxu0 %v2837
        %2901 = vmatpush1.bf16.msra.mxu0 %v2836
        %2902 = vmatprep.subr.bf16.mxu0 %v2839
        %2903 = vmatpush1.bf16.msra.mxu0 %v2838
        %2904 = vmatprep.subr.bf16.mxu0 %v2841
        %2905 = vmatpush1.bf16.msra.mxu0 %v2840
        %2906 = vmatprep.subr.bf16.mxu0 %v2843
        %2907 = vmatpush1.bf16.msra.mxu0 %v2842
        %2908 = vmatprep.subr.bf16.mxu0 %v2845
        %2909 = vmatpush1.bf16.msra.mxu0 %v2844
        %2910 = vmatprep.subr.bf16.mxu0 %v2847
        %2911 = vmatpush1.bf16.msra.mxu0 %v2846
        %2912 = vmatprep.subr.bf16.mxu0 %v2849
        %2913 = vmatpush1.bf16.msra.mxu0 %v2848
        %2914 = vmatprep.subr.bf16.mxu0 %v2851
        %2915 = vmatpush1.bf16.msra.mxu0 %v2850
        %2916 = vmatprep.subr.bf16.mxu0 %v2853
        %2917 = vmatpush1.bf16.msra.mxu0 %v2852
        %2918 = vmatprep.mubr.bf16.mxu0 %v1704
        %2919 = vmatmul.mubr.bf16.gmra.mrb[0].mxu0 %v1648
        %v2920 = vpop.f32.mrb[0].mxu0
        %v2921 = vadd.f32 %v2719, %v2920
        %v2922 = vpop.f32.mrb[0].mxu0
        %v2923 = vadd.f32 %v2723, %v2922
        %v2924 = vpop.f32.mrb[0].mxu0
        %v2925 = vadd.f32 %v2719, %v2924
        %v2926 = vpop.f32.mrb[0].mxu0
        %v2927 = vadd.f32 %v2723, %v2926
        %2928 = vmatprep.mubr.bf16.mxu0 %v1705
        %2929 = vmatmul.mubr.bf16.gmra.mrb[0].mxu0 %v1649
        %v2930 = vpop.f32.mrb[0].mxu0
        %v2931 = vadd.f32 %v2719, %v2930
        %v2932 = vpop.f32.mrb[0].mxu0
        %v2933 = vadd.f32 %v2723, %v2932
        %v2934 = vpop.f32.mrb[0].mxu0
        %v2935 = vadd.f32 %v2719, %v2934
        %v2936 = vpop.f32.mrb[0].mxu0
        %v2937 = vadd.f32 %v2723, %v2936
        %2938 = vmatprep.mubr.bf16.mxu0 %v1706
        %2939 = vmatmul.mubr.bf16.gmra.mrb[0].mxu0 %v1650
        %v2940 = vpop.f32.mrb[0].mxu0
        %v2941 = vadd.f32 %v2719, %v2940
        %v2942 = vpop.f32.mrb[0].mxu0
        %v2943 = vadd.f32 %v2723, %v2942
        %v2944 = vpop.f32.mrb[0].mxu0
        %v2945 = vadd.f32 %v2719, %v2944
        %v2946 = vpop.f32.mrb[0].mxu0
        %v2947 = vadd.f32 %v2723, %v2946
        %2948 = vmatprep.mubr.bf16.mxu0 %v1707
        %2949 = vmatmul.mubr.bf16.gmra.mrb[0].mxu0 %v1651
        %v2950 = vpop.f32.mrb[0].mxu0
        %v2951 = vadd.f32 %v2719, %v2950
        %v2952 = vpop.f32.mrb[0].mxu0
        %v2953 = vadd.f32 %v2723, %v2952
        %v2954 = vpop.f32.mrb[0].mxu0
        %v2955 = vadd.f32 %v2719, %v2954
        %v2956 = vpop.f32.mrb[0].mxu0
        %v2957 = vadd.f32 %v2723, %v2956
        %2958 = vmatprep.mubr.bf16.mxu0 %v1708
        %2959 = vmatmul.mubr.bf16.gmra.mrb[0].mxu0 %v1652
        %v2960 = vpop.f32.mrb[0].mxu0
        %v2961 = vadd.f32 %v2719, %v2960
        %v2962 = vpop.f32.mrb[0].mxu0
        %v2963 = vadd.f32 %v2723, %v2962
        %v2964 = vpop.f32.mrb[0].mxu0
        %v2965 = vadd.f32 %v2719, %v2964
        %v2966 = vpop.f32.mrb[0].mxu0
        %v2967 = vadd.f32 %v2723, %v2966
        %2968 = vmatprep.mubr.bf16.mxu0 %v1709
        %2969 = vmatmul.mubr.bf16.gmra.mrb[0].mxu0 %v1653
        %v2970 = vpop.f32.mrb[0].mxu0
        %v2971 = vadd.f32 %v2719, %v2970
        %v2972 = vpop.f32.mrb[0].mxu0
        %v2973 = vadd.f32 %v2723, %v2972
        %v2974 = vpop.f32.mrb[0].mxu0
        %v2975 = vadd.f32 %v2719, %v2974
        %v2976 = vpop.f32.mrb[0].mxu0
        %v2977 = vadd.f32 %v2723, %v2976
        %2978 = vmatprep.mubr.bf16.mxu0 %v1710
        %2979 = vmatmul.mubr.bf16.gmra.mrb[0].mxu0 %v1654
        %v2980 = vpop.f32.mrb[0].mxu0
        %v2981 = vadd.f32 %v2719, %v2980
        %v2982 = vpop.f32.mrb[0].mxu0
        %v2983 = vadd.f32 %v2723, %v2982
        %v2984 = vpop.f32.mrb[0].mxu0
        %v2985 = vadd.f32 %v2719, %v2984
        %v2986 = vpop.f32.mrb[0].mxu0
        %v2987 = vadd.f32 %v2723, %v2986
        %2988 = vmatprep.mubr.bf16.mxu0 %v1711
        %2989 = vmatmul.mubr.bf16.gmra.mrb[0].mxu0 %v1655
        %v2990 = vpop.f32.mrb[0].mxu0
        %v2991 = vadd.f32 %v2719, %v2990
        %v2992 = vpop.f32.mrb[0].mxu0
        %v2993 = vadd.f32 %v2723, %v2992
        %v2994 = vpop.f32.mrb[0].mxu0
        %v2995 = vadd.f32 %v2719, %v2994
        %v2996 = vpop.f32.mrb[0].mxu0
        %v2997 = vadd.f32 %v2723, %v2996
        %2998 = vdwg.mxu0
        %v2999 = vmax.f32 %v2921, 0.0
        %v3000 = vmax.f32 %v2923, 0.0
        %v3001 = vmax.f32 %v2925, 0.0
        %v3002 = vmax.f32 %v2927, 0.0
        %v3003 = vmax.f32 %v2931, 0.0
        %v3004 = vmax.f32 %v2933, 0.0
        %v3005 = vmax.f32 %v2935, 0.0
        %v3006 = vmax.f32 %v2937, 0.0
        %v3007 = vmax.f32 %v2941, 0.0
        %v3008 = vmax.f32 %v2943, 0.0
        %v3009 = vmax.f32 %v2945, 0.0
        %v3010 = vmax.f32 %v2947, 0.0
        %v3011 = vmax.f32 %v2951, 0.0
        %v3012 = vmax.f32 %v2953, 0.0
        %v3013 = vmax.f32 %v2955, 0.0
        %v3014 = vmax.f32 %v2957, 0.0
        %v3015 = vmax.f32 %v2961, 0.0
        %v3016 = vmax.f32 %v2963, 0.0
        %v3017 = vmax.f32 %v2965, 0.0
        %v3018 = vmax.f32 %v2967, 0.0
        %v3019 = vmax.f32 %v2971, 0.0
        %v3020 = vmax.f32 %v2973, 0.0
        %v3021 = vmax.f32 %v2975, 0.0
        %v3022 = vmax.f32 %v2977, 0.0
        %v3023 = vmax.f32 %v2981, 0.0
        %v3024 = vmax.f32 %v2983, 0.0
        %v3025 = vmax.f32 %v2985, 0.0
        %v3026 = vmax.f32 %v2987, 0.0
        %v3027 = vmax.f32 %v2991, 0.0
        %v3028 = vmax.f32 %v2993, 0.0
        %v3029 = vmax.f32 %v2995, 0.0
        %v3030 = vmax.f32 %v2997, 0.0
        %v3031 = vpack.c.bf16 %v3001, %v2999
        %v3032 = vpack.c.bf16 %v3002, %v3000
        %v3033 = vpack.c.bf16 %v3005, %v3003
        %v3034 = vpack.c.bf16 %v3006, %v3004
        %v3035 = vpack.c.bf16 %v3009, %v3007
        %v3036 = vpack.c.bf16 %v3010, %v3008
        %v3037 = vpack.c.bf16 %v3013, %v3011
        %v3038 = vpack.c.bf16 %v3014, %v3012
        %v3039 = vpack.c.bf16 %v3017, %v3015
        %v3040 = vpack.c.bf16 %v3018, %v3016
        %v3041 = vpack.c.bf16 %v3021, %v3019
        %v3042 = vpack.c.bf16 %v3022, %v3020
        %v3043 = vpack.c.bf16 %v3025, %v3023
        %v3044 = vpack.c.bf16 %v3026, %v3024
        %v3045 = vpack.c.bf16 %v3029, %v3027
        %v3046 = vpack.c.bf16 %v3030, %v3028
        %v3047 = vld [vmem:[#allocation14] sm:$0xff]
        %v3048 = vld [vmem:[#allocation14 + $0x8] sm:$0xff]
        %v3049 = vld [vmem:[#allocation14 + $0x10] sm:$0xff]
        %v3050 = vld [vmem:[#allocation14 + $0x18] sm:$0xff]
        %v3051 = vld [vmem:[#allocation14 + $0x20] sm:$0xff]
        %v3052 = vld [vmem:[#allocation14 + $0x28] sm:$0xff]
        %v3053 = vld [vmem:[#allocation14 + $0x30] sm:$0xff]
        %v3054 = vld [vmem:[#allocation14 + $0x38] sm:$0xff]
        %v3055 = vld [vmem:[#allocation14 + $0x40] sm:$0xff]
        %v3056 = vld [vmem:[#allocation14 + $0x48] sm:$0xff]
        %v3057 = vld [vmem:[#allocation14 + $0x50] sm:$0xff]
        %v3058 = vld [vmem:[#allocation14 + $0x58] sm:$0xff]
        %v3059 = vld [vmem:[#allocation14 + $0x60] sm:$0xff]
        %v3060 = vld [vmem:[#allocation14 + $0x68] sm:$0xff]
        %v3061 = vld [vmem:[#allocation14 + $0x70] sm:$0xff]
        %v3062 = vld [vmem:[#allocation14 + $0x78] sm:$0xff]
        %v3063 = vld [vmem:[#allocation14 + $0x80] sm:$0xff]
        %v3064 = vld [vmem:[#allocation14 + $0x88] sm:$0xff]
        %v3065 = vld [vmem:[#allocation14 + $0x90] sm:$0xff]
        %v3066 = vld [vmem:[#allocation14 + $0x98] sm:$0xff]
        %v3067 = vld [vmem:[#allocation14 + $0xa0] sm:$0xff]
        %v3068 = vld [vmem:[#allocation14 + $0xa8] sm:$0xff]
        %v3069 = vld [vmem:[#allocation14 + $0xb0] sm:$0xff]
        %v3070 = vld [vmem:[#allocation14 + $0xb8] sm:$0xff]
        %v3071 = vld [vmem:[#allocation14 + $0xc0] sm:$0xff]
        %v3072 = vld [vmem:[#allocation14 + $0xc8] sm:$0xff]
        %v3073 = vld [vmem:[#allocation14 + $0xd0] sm:$0xff]
        %v3074 = vld [vmem:[#allocation14 + $0xd8] sm:$0xff]
        %v3075 = vld [vmem:[#allocation14 + $0xe0] sm:$0xff]
        %v3076 = vld [vmem:[#allocation14 + $0xe8] sm:$0xff]
        %v3077 = vld [vmem:[#allocation14 + $0xf0] sm:$0xff]
        %v3078 = vld [vmem:[#allocation14 + $0xf8] sm:$0xff]
        %v3079 = vld [vmem:[%s15] sm:$0x3]
        %v3081 = vlaneseq
        %v3082 = vshrl.u32 %v3081, 7
        %v3083 = vsub.s32 0, %v3082
        %v3084 = vrot.slane %v3079, %v3083
        %v3085 = vlaneseq
        %v3086 = vshrl.u32 %v3085, 7
        %v3087 = vsub.s32 1, %v3086
        %v3088 = vrot.slane %v3079, %v3087
        %v3123 = vunpack.c.l.b16 %v3047
        %v3124 = vunpack.c.h.b16 %v3047
        %v3125 = vunpack.c.l.b16 %v3048
        %v3126 = vunpack.c.h.b16 %v3048
        %v3127 = vunpack.c.l.b16 %v3049
        %v3128 = vunpack.c.h.b16 %v3049
        %v3129 = vunpack.c.l.b16 %v3050
        %v3130 = vunpack.c.h.b16 %v3050
        %v3131 = vunpack.c.l.b16 %v3051
        %v3132 = vunpack.c.h.b16 %v3051
        %v3133 = vunpack.c.l.b16 %v3052
        %v3134 = vunpack.c.h.b16 %v3052
        %v3135 = vunpack.c.l.b16 %v3053
        %v3136 = vunpack.c.h.b16 %v3053
        %v3137 = vunpack.c.l.b16 %v3054
        %v3138 = vunpack.c.h.b16 %v3054
        %v3139 = vunpack.c.l.b16 %v3055
        %v3140 = vunpack.c.h.b16 %v3055
        %v3141 = vunpack.c.l.b16 %v3056
        %v3142 = vunpack.c.h.b16 %v3056
        %v3143 = vunpack.c.l.b16 %v3057
        %v3144 = vunpack.c.h.b16 %v3057
        %v3145 = vunpack.c.l.b16 %v3058
        %v3146 = vunpack.c.h.b16 %v3058
        %v3147 = vunpack.c.l.b16 %v3059
        %v3148 = vunpack.c.h.b16 %v3059
        %v3149 = vunpack.c.l.b16 %v3060
        %v3150 = vunpack.c.h.b16 %v3060
        %v3151 = vunpack.c.l.b16 %v3061
        %v3152 = vunpack.c.h.b16 %v3061
        %v3153 = vunpack.c.l.b16 %v3062
        %v3154 = vunpack.c.h.b16 %v3062
        %v3155 = vunpack.c.l.b16 %v3063
        %v3156 = vunpack.c.h.b16 %v3063
        %v3157 = vunpack.c.l.b16 %v3064
        %v3158 = vunpack.c.h.b16 %v3064
        %v3159 = vunpack.c.l.b16 %v3065
        %v3160 = vunpack.c.h.b16 %v3065
        %v3161 = vunpack.c.l.b16 %v3066
        %v3162 = vunpack.c.h.b16 %v3066
        %v3163 = vunpack.c.l.b16 %v3067
        %v3164 = vunpack.c.h.b16 %v3067
        %v3165 = vunpack.c.l.b16 %v3068
        %v3166 = vunpack.c.h.b16 %v3068
        %v3167 = vunpack.c.l.b16 %v3069
        %v3168 = vunpack.c.h.b16 %v3069
        %v3169 = vunpack.c.l.b16 %v3070
        %v3170 = vunpack.c.h.b16 %v3070
        %v3171 = vunpack.c.l.b16 %v3071
        %v3172 = vunpack.c.h.b16 %v3071
        %v3173 = vunpack.c.l.b16 %v3072
        %v3174 = vunpack.c.h.b16 %v3072
        %v3175 = vunpack.c.l.b16 %v3073
        %v3176 = vunpack.c.h.b16 %v3073
        %v3177 = vunpack.c.l.b16 %v3074
        %v3178 = vunpack.c.h.b16 %v3074
        %v3179 = vunpack.c.l.b16 %v3075
        %v3180 = vunpack.c.h.b16 %v3075
        %v3181 = vunpack.c.l.b16 %v3076
        %v3182 = vunpack.c.h.b16 %v3076
        %v3183 = vunpack.c.l.b16 %v3077
        %v3184 = vunpack.c.h.b16 %v3077
        %v3185 = vunpack.c.l.b16 %v3078
        %v3186 = vunpack.c.h.b16 %v3078
        %v3187 = vpack.c.b16 %v3125, %v3123
        %v3188 = vpack.c.b16 %v3126, %v3124
        %v3189 = vpack.c.b16 %v3129, %v3127
        %v3190 = vpack.c.b16 %v3130, %v3128
        %v3191 = vpack.c.b16 %v3133, %v3131
        %v3192 = vpack.c.b16 %v3134, %v3132
        %v3193 = vpack.c.b16 %v3137, %v3135
        %v3194 = vpack.c.b16 %v3138, %v3136
        %v3195 = vpack.c.b16 %v3141, %v3139
        %v3196 = vpack.c.b16 %v3142, %v3140
        %v3197 = vpack.c.b16 %v3145, %v3143
        %v3198 = vpack.c.b16 %v3146, %v3144
        %v3199 = vpack.c.b16 %v3149, %v3147
        %v3200 = vpack.c.b16 %v3150, %v3148
        %v3201 = vpack.c.b16 %v3153, %v3151
        %v3202 = vpack.c.b16 %v3154, %v3152
        %v3203 = vpack.c.b16 %v3157, %v3155
        %v3204 = vpack.c.b16 %v3158, %v3156
        %v3205 = vpack.c.b16 %v3161, %v3159
        %v3206 = vpack.c.b16 %v3162, %v3160
        %v3207 = vpack.c.b16 %v3165, %v3163
        %v3208 = vpack.c.b16 %v3166, %v3164
        %v3209 = vpack.c.b16 %v3169, %v3167
        %v3210 = vpack.c.b16 %v3170, %v3168
        %v3211 = vpack.c.b16 %v3173, %v3171
        %v3212 = vpack.c.b16 %v3174, %v3172
        %v3213 = vpack.c.b16 %v3177, %v3175
        %v3214 = vpack.c.b16 %v3178, %v3176
        %v3215 = vpack.c.b16 %v3181, %v3179
        %v3216 = vpack.c.b16 %v3182, %v3180
        %v3217 = vpack.c.b16 %v3185, %v3183
        %v3218 = vpack.c.b16 %v3186, %v3184
        %3251 = vmatprep.subr.bf16.mxu0 %v3188
        %3252 = vmatpush1.bf16.msra.mxu0 %v3187
        %3253 = vmatprep.subr.bf16.mxu0 %v3190
        %3254 = vmatpush1.bf16.msra.mxu0 %v3189
        %3255 = vmatprep.subr.bf16.mxu0 %v3192
        %3256 = vmatpush1.bf16.msra.mxu0 %v3191
        %3257 = vmatprep.subr.bf16.mxu0 %v3194
        %3258 = vmatpush1.bf16.msra.mxu0 %v3193
        %3259 = vmatprep.subr.bf16.mxu0 %v3196
        %3260 = vmatpush1.bf16.msra.mxu0 %v3195
        %3261 = vmatprep.subr.bf16.mxu0 %v3198
        %3262 = vmatpush1.bf16.msra.mxu0 %v3197
        %3263 = vmatprep.subr.bf16.mxu0 %v3200
        %3264 = vmatpush1.bf16.msra.mxu0 %v3199
        %3265 = vmatprep.subr.bf16.mxu0 %v3202
        %3266 = vmatpush1.bf16.msra.mxu0 %v3201
        %3267 = vmatprep.subr.bf16.mxu0 %v3204
        %3268 = vmatpush1.bf16.msra.mxu0 %v3203
        %3269 = vmatprep.subr.bf16.mxu0 %v3206
        %3270 = vmatpush1.bf16.msra.mxu0 %v3205
        %3271 = vmatprep.subr.bf16.mxu0 %v3208
        %3272 = vmatpush1.bf16.msra.mxu0 %v3207
        %3273 = vmatprep.subr.bf16.mxu0 %v3210
        %3274 = vmatpush1.bf16.msra.mxu0 %v3209
        %3275 = vmatprep.subr.bf16.mxu0 %v3212
        %3276 = vmatpush1.bf16.msra.mxu0 %v3211
        %3277 = vmatprep.subr.bf16.mxu0 %v3214
        %3278 = vmatpush1.bf16.msra.mxu0 %v3213
        %3279 = vmatprep.subr.bf16.mxu0 %v3216
        %3280 = vmatpush1.bf16.msra.mxu0 %v3215
        %3281 = vmatprep.subr.bf16.mxu0 %v3218
        %3282 = vmatpush1.bf16.msra.mxu0 %v3217
        %3283 = vmatprep.mubr.bf16.mxu0 %v3032
        %3284 = vmatmul.mubr.bf16.gmra.mrb[0].mxu0 %v3031
        %v3285 = vpop.f32.mrb[0].mxu0
        %v3286 = vadd.f32 %v3084, %v3285
        %v3287 = vpop.f32.mrb[0].mxu0
        %v3288 = vadd.f32 %v3088, %v3287
        %v3289 = vpop.f32.mrb[0].mxu0
        %v3290 = vadd.f32 %v3084, %v3289
        %v3291 = vpop.f32.mrb[0].mxu0
        %v3292 = vadd.f32 %v3088, %v3291
        %3293 = vmatprep.mubr.bf16.mxu0 %v3034
        %3294 = vmatmul.mubr.bf16.gmra.mrb[0].mxu0 %v3033
        %v3295 = vpop.f32.mrb[0].mxu0
        %v3296 = vadd.f32 %v3084, %v3295
        %v3297 = vpop.f32.mrb[0].mxu0
        %v3298 = vadd.f32 %v3088, %v3297
        %v3299 = vpop.f32.mrb[0].mxu0
        %v3300 = vadd.f32 %v3084, %v3299
        %v3301 = vpop.f32.mrb[0].mxu0
        %v3302 = vadd.f32 %v3088, %v3301
        %3303 = vmatprep.mubr.bf16.mxu0 %v3036
        %3304 = vmatmul.mubr.bf16.gmra.mrb[0].mxu0 %v3035
        %v3305 = vpop.f32.mrb[0].mxu0
        %v3306 = vadd.f32 %v3084, %v3305
        %v3307 = vpop.f32.mrb[0].mxu0
        %v3308 = vadd.f32 %v3088, %v3307
        %v3309 = vpop.f32.mrb[0].mxu0
        %v3310 = vadd.f32 %v3084, %v3309
        %v3311 = vpop.f32.mrb[0].mxu0
        %v3312 = vadd.f32 %v3088, %v3311
        %3313 = vmatprep.mubr.bf16.mxu0 %v3038
        %3314 = vmatmul.mubr.bf16.gmra.mrb[0].mxu0 %v3037
        %v3315 = vpop.f32.mrb[0].mxu0
        %v3316 = vadd.f32 %v3084, %v3315
        %v3317 = vpop.f32.mrb[0].mxu0
        %v3318 = vadd.f32 %v3088, %v3317
        %v3319 = vpop.f32.mrb[0].mxu0
        %v3320 = vadd.f32 %v3084, %v3319
        %v3321 = vpop.f32.mrb[0].mxu0
        %v3322 = vadd.f32 %v3088, %v3321
        %3323 = vmatprep.mubr.bf16.mxu0 %v3040
        %3324 = vmatmul.mubr.bf16.gmra.mrb[0].mxu0 %v3039
        %v3325 = vpop.f32.mrb[0].mxu0
        %v3326 = vadd.f32 %v3084, %v3325
        %v3327 = vpop.f32.mrb[0].mxu0
        %v3328 = vadd.f32 %v3088, %v3327
        %v3329 = vpop.f32.mrb[0].mxu0
        %v3330 = vadd.f32 %v3084, %v3329
        %v3331 = vpop.f32.mrb[0].mxu0
        %v3332 = vadd.f32 %v3088, %v3331
        %3333 = vmatprep.mubr.bf16.mxu0 %v3042
        %3334 = vmatmul.mubr.bf16.gmra.mrb[0].mxu0 %v3041
        %v3335 = vpop.f32.mrb[0].mxu0
        %v3336 = vadd.f32 %v3084, %v3335
        %v3337 = vpop.f32.mrb[0].mxu0
        %v3338 = vadd.f32 %v3088, %v3337
        %v3339 = vpop.f32.mrb[0].mxu0
        %v3340 = vadd.f32 %v3084, %v3339
        %v3341 = vpop.f32.mrb[0].mxu0
        %v3342 = vadd.f32 %v3088, %v3341
        %3343 = vmatprep.mubr.bf16.mxu0 %v3044
        %3344 = vmatmul.mubr.bf16.gmra.mrb[0].mxu0 %v3043
        %v3345 = vpop.f32.mrb[0].mxu0
        %v3346 = vadd.f32 %v3084, %v3345
        %v3347 = vpop.f32.mrb[0].mxu0
        %v3348 = vadd.f32 %v3088, %v3347
        %v3349 = vpop.f32.mrb[0].mxu0
        %v3350 = vadd.f32 %v3084, %v3349
        %v3351 = vpop.f32.mrb[0].mxu0
        %v3352 = vadd.f32 %v3088, %v3351
        %3353 = vmatprep.mubr.bf16.mxu0 %v3046
        %3354 = vmatmul.mubr.bf16.gmra.mrb[0].mxu0 %v3045
        %v3355 = vpop.f32.mrb[0].mxu0
        %v3356 = vadd.f32 %v3084, %v3355
        %v3357 = vpop.f32.mrb[0].mxu0
        %v3358 = vadd.f32 %v3088, %v3357
        %v3359 = vpop.f32.mrb[0].mxu0
        %v3360 = vadd.f32 %v3084, %v3359
        %v3361 = vpop.f32.mrb[0].mxu0
        %v3362 = vadd.f32 %v3088, %v3361
        %3363 = vdwg.mxu0
        %v3364 = vmax.f32 %v3286, 0.0
        %v3365 = vmax.f32 %v3288, 0.0
        %v3366 = vmax.f32 %v3290, 0.0
        %v3367 = vmax.f32 %v3292, 0.0
        %v3368 = vmax.f32 %v3296, 0.0
        %v3369 = vmax.f32 %v3298, 0.0
        %v3370 = vmax.f32 %v3300, 0.0
        %v3371 = vmax.f32 %v3302, 0.0
        %v3372 = vmax.f32 %v3306, 0.0
        %v3373 = vmax.f32 %v3308, 0.0
        %v3374 = vmax.f32 %v3310, 0.0
        %v3375 = vmax.f32 %v3312, 0.0
        %v3376 = vmax.f32 %v3316, 0.0
        %v3377 = vmax.f32 %v3318, 0.0
        %v3378 = vmax.f32 %v3320, 0.0
        %v3379 = vmax.f32 %v3322, 0.0
        %v3380 = vmax.f32 %v3326, 0.0
        %v3381 = vmax.f32 %v3328, 0.0
        %v3382 = vmax.f32 %v3330, 0.0
        %v3383 = vmax.f32 %v3332, 0.0
        %v3384 = vmax.f32 %v3336, 0.0
        %v3385 = vmax.f32 %v3338, 0.0
        %v3386 = vmax.f32 %v3340, 0.0
        %v3387 = vmax.f32 %v3342, 0.0
        %v3388 = vmax.f32 %v3346, 0.0
        %v3389 = vmax.f32 %v3348, 0.0
        %v3390 = vmax.f32 %v3350, 0.0
        %v3391 = vmax.f32 %v3352, 0.0
        %v3392 = vmax.f32 %v3356, 0.0
        %v3393 = vmax.f32 %v3358, 0.0
        %v3394 = vmax.f32 %v3360, 0.0
        %v3395 = vmax.f32 %v3362, 0.0
        %v3396 = vpack.c.bf16 %v3366, %v3364
        %v3397 = vpack.c.bf16 %v3367, %v3365
        %v3398 = vpack.c.bf16 %v3370, %v3368
        %v3399 = vpack.c.bf16 %v3371, %v3369
        %v3400 = vpack.c.bf16 %v3374, %v3372
        %v3401 = vpack.c.bf16 %v3375, %v3373
        %v3402 = vpack.c.bf16 %v3378, %v3376
        %v3403 = vpack.c.bf16 %v3379, %v3377
        %v3404 = vpack.c.bf16 %v3382, %v3380
        %v3405 = vpack.c.bf16 %v3383, %v3381
        %v3406 = vpack.c.bf16 %v3386, %v3384
        %v3407 = vpack.c.bf16 %v3387, %v3385
        %v3408 = vpack.c.bf16 %v3390, %v3388
        %v3409 = vpack.c.bf16 %v3391, %v3389
        %v3410 = vpack.c.bf16 %v3394, %v3392
        %v3411 = vpack.c.bf16 %v3395, %v3393
        %v3412 = vld [vmem:[#allocation16] sm:$0xf]
        %v3413 = vld [vmem:[#allocation16 + $0x4] sm:$0xf]
        %v3414 = vld [vmem:[#allocation16 + $0x8] sm:$0xf]
        %v3415 = vld [vmem:[#allocation16 + $0xc] sm:$0xf]
        %v3416 = vld [vmem:[#allocation16 + $0x10] sm:$0xf]
        %v3417 = vld [vmem:[#allocation16 + $0x14] sm:$0xf]
        %v3418 = vld [vmem:[#allocation16 + $0x18] sm:$0xf]
        %v3419 = vld [vmem:[#allocation16 + $0x1c] sm:$0xf]
        %v3420 = vld [vmem:[#allocation16 + $0x20] sm:$0xf]
        %v3421 = vld [vmem:[#allocation16 + $0x24] sm:$0xf]
        %v3422 = vld [vmem:[#allocation16 + $0x28] sm:$0xf]
        %v3423 = vld [vmem:[#allocation16 + $0x2c] sm:$0xf]
        %v3424 = vld [vmem:[#allocation16 + $0x30] sm:$0xf]
        %v3425 = vld [vmem:[#allocation16 + $0x34] sm:$0xf]
        %v3426 = vld [vmem:[#allocation16 + $0x38] sm:$0xf]
        %v3427 = vld [vmem:[#allocation16 + $0x3c] sm:$0xf]
        %v3428 = vld [vmem:[#allocation16 + $0x40] sm:$0xf]
        %v3429 = vld [vmem:[#allocation16 + $0x44] sm:$0xf]
        %v3430 = vld [vmem:[#allocation16 + $0x48] sm:$0xf]
        %v3431 = vld [vmem:[#allocation16 + $0x4c] sm:$0xf]
        %v3432 = vld [vmem:[#allocation16 + $0x50] sm:$0xf]
        %v3433 = vld [vmem:[#allocation16 + $0x54] sm:$0xf]
        %v3434 = vld [vmem:[#allocation16 + $0x58] sm:$0xf]
        %v3435 = vld [vmem:[#allocation16 + $0x5c] sm:$0xf]
        %v3436 = vld [vmem:[#allocation16 + $0x60] sm:$0xf]
        %v3437 = vld [vmem:[#allocation16 + $0x64] sm:$0xf]
        %v3438 = vld [vmem:[#allocation16 + $0x68] sm:$0xf]
        %v3439 = vld [vmem:[#allocation16 + $0x6c] sm:$0xf]
        %v3440 = vld [vmem:[#allocation16 + $0x70] sm:$0xf]
        %v3441 = vld [vmem:[#allocation16 + $0x74] sm:$0xf]
        %v3442 = vld [vmem:[#allocation16 + $0x78] sm:$0xf]
        %v3443 = vld [vmem:[#allocation16 + $0x7c] sm:$0xf]
        %v3444 = vld [vmem:[%s17] sm:$0x1]
        %v3446 = vlaneseq
        %v3447 = vshrl.u32 %v3446, 7
        %v3448 = vsub.s32 0, %v3447
        %v3449 = vrot.slane %v3444, %v3448
        %v3483 = vunpack.c.l.b16 %v3412
        %v3484 = vunpack.c.l.b16 %v3413
        %v3485 = vunpack.c.l.b16 %v3414
        %v3486 = vunpack.c.l.b16 %v3415
        %v3487 = vunpack.c.l.b16 %v3416
        %v3488 = vunpack.c.l.b16 %v3417
        %v3489 = vunpack.c.l.b16 %v3418
        %v3490 = vunpack.c.l.b16 %v3419
        %v3491 = vunpack.c.l.b16 %v3420
        %v3492 = vunpack.c.l.b16 %v3421
        %v3493 = vunpack.c.l.b16 %v3422
        %v3494 = vunpack.c.l.b16 %v3423
        %v3495 = vunpack.c.l.b16 %v3424
        %v3496 = vunpack.c.l.b16 %v3425
        %v3497 = vunpack.c.l.b16 %v3426
        %v3498 = vunpack.c.l.b16 %v3427
        %v3499 = vunpack.c.l.b16 %v3428
        %v3500 = vunpack.c.l.b16 %v3429
        %v3501 = vunpack.c.l.b16 %v3430
        %v3502 = vunpack.c.l.b16 %v3431
        %v3503 = vunpack.c.l.b16 %v3432
        %v3504 = vunpack.c.l.b16 %v3433
        %v3505 = vunpack.c.l.b16 %v3434
        %v3506 = vunpack.c.l.b16 %v3435
        %v3507 = vunpack.c.l.b16 %v3436
        %v3508 = vunpack.c.l.b16 %v3437
        %v3509 = vunpack.c.l.b16 %v3438
        %v3510 = vunpack.c.l.b16 %v3439
        %v3511 = vunpack.c.l.b16 %v3440
        %v3512 = vunpack.c.l.b16 %v3441
        %v3513 = vunpack.c.l.b16 %v3442
        %v3514 = vunpack.c.l.b16 %v3443
        %v3515 = vpack.c.b16 %v3484, %v3483
        %v3516 = vpack.c.b16 %v3486, %v3485
        %v3517 = vpack.c.b16 %v3488, %v3487
        %v3518 = vpack.c.b16 %v3490, %v3489
        %v3519 = vpack.c.b16 %v3492, %v3491
        %v3520 = vpack.c.b16 %v3494, %v3493
        %v3521 = vpack.c.b16 %v3496, %v3495
        %v3522 = vpack.c.b16 %v3498, %v3497
        %v3523 = vpack.c.b16 %v3500, %v3499
        %v3524 = vpack.c.b16 %v3502, %v3501
        %v3525 = vpack.c.b16 %v3504, %v3503
        %v3526 = vpack.c.b16 %v3506, %v3505
        %v3527 = vpack.c.b16 %v3508, %v3507
        %v3528 = vpack.c.b16 %v3510, %v3509
        %v3529 = vpack.c.b16 %v3512, %v3511
        %v3530 = vpack.c.b16 %v3514, %v3513
        %3547 = vmatprep.subr.bf16.mxu0 0
        %3548 = vmatpush1.bf16.msra.mxu0 %v3515
        %3549 = vmatprep.subr.bf16.mxu0 0
        %3550 = vmatpush1.bf16.msra.mxu0 %v3516
        %3551 = vmatprep.subr.bf16.mxu0 0
        %3552 = vmatpush1.bf16.msra.mxu0 %v3517
        %3553 = vmatprep.subr.bf16.mxu0 0
        %3554 = vmatpush1.bf16.msra.mxu0 %v3518
        %3555 = vmatprep.subr.bf16.mxu0 0
        %3556 = vmatpush1.bf16.msra.mxu0 %v3519
        %3557 = vmatprep.subr.bf16.mxu0 0
        %3558 = vmatpush1.bf16.msra.mxu0 %v3520
        %3559 = vmatprep.subr.bf16.mxu0 0
        %3560 = vmatpush1.bf16.msra.mxu0 %v3521
        %3561 = vmatprep.subr.bf16.mxu0 0
        %3562 = vmatpush1.bf16.msra.mxu0 %v3522
        %3563 = vmatprep.subr.bf16.mxu0 0
        %3564 = vmatpush1.bf16.msra.mxu0 %v3523
        %3565 = vmatprep.subr.bf16.mxu0 0
        %3566 = vmatpush1.bf16.msra.mxu0 %v3524
        %3567 = vmatprep.subr.bf16.mxu0 0
        %3568 = vmatpush1.bf16.msra.mxu0 %v3525
        %3569 = vmatprep.subr.bf16.mxu0 0
        %3570 = vmatpush1.bf16.msra.mxu0 %v3526
        %3571 = vmatprep.subr.bf16.mxu0 0
        %3572 = vmatpush1.bf16.msra.mxu0 %v3527
        %3573 = vmatprep.subr.bf16.mxu0 0
        %3574 = vmatpush1.bf16.msra.mxu0 %v3528
        %3575 = vmatprep.subr.bf16.mxu0 0
        %3576 = vmatpush1.bf16.msra.mxu0 %v3529
        %3577 = vmatprep.subr.bf16.mxu0 0
        %3578 = vmatpush1.bf16.msra.mxu0 %v3530
        %3579 = vmatprep.mubr.bf16.mxu0 %v3397
        %3580 = vmatmul.mubr.bf16.gmra.mrb[0].mxu0 %v3396
        %v3581 = vpop.f32.mrb[0].mxu0
        %v3582 = vadd.f32 %v3449, %v3581
        %v3583 = vpop.f32.mrb[0].mxu0
        %v3584 = vpop.f32.mrb[0].mxu0
        %v3585 = vadd.f32 %v3449, %v3584
        %v3586 = vpop.f32.mrb[0].mxu0
        %3587 = vmatprep.mubr.bf16.mxu0 %v3399
        %3588 = vmatmul.mubr.bf16.gmra.mrb[0].mxu0 %v3398
        %v3589 = vpop.f32.mrb[0].mxu0
        %v3590 = vadd.f32 %v3449, %v3589
        %v3591 = vpop.f32.mrb[0].mxu0
        %v3592 = vpop.f32.mrb[0].mxu0
        %v3593 = vadd.f32 %v3449, %v3592
        %v3594 = vpop.f32.mrb[0].mxu0
        %3595 = vmatprep.mubr.bf16.mxu0 %v3401
        %3596 = vmatmul.mubr.bf16.gmra.mrb[0].mxu0 %v3400
        %v3597 = vpop.f32.mrb[0].mxu0
        %v3598 = vadd.f32 %v3449, %v3597
        %v3599 = vpop.f32.mrb[0].mxu0
        %v3600 = vpop.f32.mrb[0].mxu0
        %v3601 = vadd.f32 %v3449, %v3600
        %v3602 = vpop.f32.mrb[0].mxu0
        %3603 = vmatprep.mubr.bf16.mxu0 %v3403
        %3604 = vmatmul.mubr.bf16.gmra.mrb[0].mxu0 %v3402
        %v3605 = vpop.f32.mrb[0].mxu0
        %v3606 = vadd.f32 %v3449, %v3605
        %v3607 = vpop.f32.mrb[0].mxu0
        %v3608 = vpop.f32.mrb[0].mxu0
        %v3609 = vadd.f32 %v3449, %v3608
        %v3610 = vpop.f32.mrb[0].mxu0
        %3611 = vmatprep.mubr.bf16.mxu0 %v3405
        %3612 = vmatmul.mubr.bf16.gmra.mrb[0].mxu0 %v3404
        %v3613 = vpop.f32.mrb[0].mxu0
        %v3614 = vadd.f32 %v3449, %v3613
        %v3615 = vpop.f32.mrb[0].mxu0
        %v3616 = vpop.f32.mrb[0].mxu0
        %v3617 = vadd.f32 %v3449, %v3616
        %v3618 = vpop.f32.mrb[0].mxu0
        %3619 = vmatprep.mubr.bf16.mxu0 %v3407
        %3620 = vmatmul.mubr.bf16.gmra.mrb[0].mxu0 %v3406
        %v3621 = vpop.f32.mrb[0].mxu0
        %v3622 = vadd.f32 %v3449, %v3621
        %v3623 = vpop.f32.mrb[0].mxu0
        %v3624 = vpop.f32.mrb[0].mxu0
        %v3625 = vadd.f32 %v3449, %v3624
        %v3626 = vpop.f32.mrb[0].mxu0
        %3627 = vmatprep.mubr.bf16.mxu0 %v3409
        %3628 = vmatmul.mubr.bf16.gmra.mrb[0].mxu0 %v3408
        %v3629 = vpop.f32.mrb[0].mxu0
        %v3630 = vadd.f32 %v3449, %v3629
        %v3631 = vpop.f32.mrb[0].mxu0
        %v3632 = vpop.f32.mrb[0].mxu0
        %v3633 = vadd.f32 %v3449, %v3632
        %v3634 = vpop.f32.mrb[0].mxu0
        %3635 = vmatprep.mubr.bf16.mxu0 %v3411
        %3636 = vmatmul.mubr.bf16.gmra.mrb[0].mxu0 %v3410
        %v3637 = vpop.f32.mrb[0].mxu0
        %v3638 = vadd.f32 %v3449, %v3637
        %v3639 = vpop.f32.mrb[0].mxu0
        %v3640 = vpop.f32.mrb[0].mxu0
        %v3641 = vadd.f32 %v3449, %v3640
        %v3642 = vpop.f32.mrb[0].mxu0
        %3643 = vdwg.mxu0
        %3644 = vst [vmem:[%s735] sm:$0xff] %v2620
        %3645 = vst [vmem:[%s735 + $0x10] sm:$0xff] %v2623
        %3646 = vst [vmem:[%s735 + $0x20] sm:$0xff] %v2628
        %3647 = vst [vmem:[%s735 + $0x30] sm:$0xff] %v2631
        %3648 = vst [vmem:[%s735 + $0x40] sm:$0xff] %v2636
        %3649 = vst [vmem:[%s735 + $0x50] sm:$0xff] %v2639
        %3650 = vst [vmem:[%s735 + $0x60] sm:$0xff] %v2644
        %3651 = vst [vmem:[%s735 + $0x70] sm:$0xff] %v2647
        %3652 = vst [vmem:[%s735 + $0x80] sm:$0xff] %v2652
        %3653 = vst [vmem:[%s735 + $0x90] sm:$0xff] %v2655
        %3654 = vst [vmem:[%s735 + $0xa0] sm:$0xff] %v2660
        %3655 = vst [vmem:[%s735 + $0xb0] sm:$0xff] %v2663
        %3656 = vst [vmem:[%s735 + $0xc0] sm:$0xff] %v2668
        %3657 = vst [vmem:[%s735 + $0xd0] sm:$0xff] %v2671
        %3658 = vst [vmem:[%s735 + $0xe0] sm:$0xff] %v2676
        %3659 = vst [vmem:[%s735 + $0xf0] sm:$0xff] %v2679
        %3660 = vst [vmem:[%s735 + $0x8] sm:$0xff] %v3582
        %3661 = vst [vmem:[%s735 + $0x18] sm:$0xff] %v3585
        %3662 = vst [vmem:[%s735 + $0x28] sm:$0xff] %v3590
        %3663 = vst [vmem:[%s735 + $0x38] sm:$0xff] %v3593
        %3664 = vst [vmem:[%s735 + $0x48] sm:$0xff] %v3598
        %3665 = vst [vmem:[%s735 + $0x58] sm:$0xff] %v3601
        %3666 = vst [vmem:[%s735 + $0x68] sm:$0xff] %v3606
        %3667 = vst [vmem:[%s735 + $0x78] sm:$0xff] %v3609
        %3668 = vst [vmem:[%s735 + $0x88] sm:$0xff] %v3614
        %3669 = vst [vmem:[%s735 + $0x98] sm:$0xff] %v3617
        %3670 = vst [vmem:[%s735 + $0xa8] sm:$0xff] %v3622
        %3671 = vst [vmem:[%s735 + $0xb8] sm:$0xff] %v3625
        %3672 = vst [vmem:[%s735 + $0xc8] sm:$0xff] %v3630
        %3673 = vst [vmem:[%s735 + $0xd8] sm:$0xff] %v3633
        %3674 = vst [vmem:[%s735 + $0xe8] sm:$0xff] %v3638
        %3675 = vst [vmem:[%s735 + $0xf8] sm:$0xff] %v3641
        %s3676 = sand.u32 %s437, 1
        %s3677 = scalar_lea.sflag [#allocation4], %s3676
        %s3678 = sand.u32 %s437, 1
        %s3679 = smul.addr %s3678, 256
        %s3680 = scalar_lea.vmem [#allocation17], %s3679
        // Predicated region
        $region129: #{tpu_custom_call.1} parent=91 // pred_check
          %p3681 = pneg %p447
        $region130: #{tpu_custom_call.1} parent=91 // pred_check_branch
          %3683 = sbr.rel (%p3681) target = $region132
        $region131: #{tpu_custom_call.1} parent=91 // pred_region
          %s3684 = smul.u32 16, %s41
          %s3686 = ssub.s32 4096, 4096
          %3687 = vsyncadd %s3677, %s3686
          %s3688 = smul.addr %s3684, 2
          %s3689 = smul.addr %s3688, 128
          %s3690 = scalar_lea.hbm %s18, %s3689
          %s3691 = sshll.u32 %s3680, 4
          %s3692 = int_to_ptr.vmem [resolvable:$true] %s3691
          %3697 = dma.vmem_to_hbm [thread:$0]  %s3692, 4096, %s3690, %s3677, 256, 256, 16
        $region132: #{tpu_custom_call.1} parent=91 // pred_fallthru
          _
      $region92: #{tpu_custom_call.1} parent=5 // pred_fallthru
        _
      %p3698 = scmp.le.s32.totalorder 2, %s36
      // Predicated region
      $region133: #{tpu_custom_call.1} parent=5 // pred_check
        %p3699 = pneg %p3698
      $region134: #{tpu_custom_call.1} parent=5 // pred_check_branch
        %3701 = sbr.rel (%p3699) target = $region136
      $region135: #{tpu_custom_call.1} parent=5 // pred_region
        %s3702 = ssub.s32 %s36, 2
        // Predicated region
        $region137: #{tpu_custom_call.1} parent=135 // pred_check
          %p3703 = pneg %p453
        $region138: #{tpu_custom_call.1} parent=135 // pred_check_branch
          %3705 = sbr.rel (%p3703) target = $region140
        $region139: #{tpu_custom_call.1} parent=135 // pred_region
          %s3706 = sand.u32 %s438, 1
          %s3707 = scalar_lea.sflag [#allocation4], %s3706
          %s3708 = sand.u32 %s438, 1
          %s3709 = smul.addr %s3708, 256
          %s3710 = scalar_lea.vmem [#allocation17], %s3709
          %3711 = dma.done %s3707, 4096
        $region140: #{tpu_custom_call.1} parent=135 // pred_fallthru
          _
      $region136: #{tpu_custom_call.1} parent=5 // pred_fallthru
        _
    $region6: #{tpu_custom_call.1} parent=1 // loop_footer
      %s40 = sadd.s32 1, %s36
    $region7: #{tpu_custom_call.1} parent=1 // loop_footer_branch
      %35 = sbr.rel target = $region3
    $region8: #{tpu_custom_call.1} parent=1 // loop_exit
      _
    %3712 = vsyncpa [#allocation3], 1
    %s3713 = scalar_lea.sflag [#allocation3], 1
    %3714 = vsyncpa %s3713, 1
    %3715 = vsyncpa [#allocation6], 1
    %s3716 = scalar_lea.sflag [#allocation6], 1
    %3717 = vsyncpa %s3716, 1
    %3718 = vsyncpa [#allocation9], 1
    %3719 = vsyncpa [#allocation12], 1
    %3720 = vsyncpa [#allocation15], 1
    %3721 = vsyncpa [#allocation4], 1
    %s3722 = scalar_lea.sflag [#allocation4], 1
    %3723 = vsyncpa %s3722, 1

</llo_original>
